<compile_context>
chip_gen: v5e
topology: v5e:2x2
jax: 0.10.0
libtpu: 0.0.40
codegen_flags: <defaults>
</compile_context>

<pallas_src>
import numpy as np

import jax
import jax.numpy as jnp
from jax import lax
from jax.experimental import pallas as pl
from jax.experimental.pallas import tpu as pltpu


# ----------------------------- Pallas kernel ------------------------------- #

def _lstm_classifier_kernel(x_ref, w_ih0_ref, w_ihr_ref, w_hh_ref, b_ref,
                            w_cls_ref, b_cls_ref, out_ref, seq_ref, xproj_ref):
    """Fused L-layer LSTM + linear head, fully VMEM resident.

    x_ref     : (T, B, F)      time-major input sequence
    w_ih0_ref : (F, 4H)        layer-0 input->gates weight (transposed, i/f/o
                               gate columns pre-scaled by 0.5)
    w_ihr_ref : (L-1, H, 4H)   layers 1..L-1 input->gates weights (same scaling)
    w_hh_ref  : (L, H, 4H)     hidden->gates weights (same scaling)
    b_ref     : (L, 1, 4H)     combined biases (b_ih + b_hh, same scaling)
    w_cls_ref : (C, H)         classifier weight (PyTorch layout)
    b_cls_ref : (1, C)         classifier bias
    out_ref   : (B, C)         logits
    seq_ref   : (T*B, H)       VMEM scratch: per-layer output sequence
    xproj_ref : (T*B, 4H)      VMEM scratch: hoisted input projection
    """
    T, B, _ = x_ref.shape
    L, H, _ = w_hh_ref.shape

    h = jnp.zeros((B, H), jnp.float32)
    for layer in range(L):                       # static unroll over layers
        w_ih = w_ih0_ref[...] if layer == 0 else w_ihr_ref[layer - 1]
        w_hh = w_hh_ref[layer]                   # (H, 4H)
        bias = b_ref[layer]                      # (1, 4H)

        # Hoisted input projection for the whole sequence (off the serial
        # critical path); bias folded in.  Rows are time-major: row = t*B + b.
        if layer == 0:
            seq = x_ref[...].reshape(T * B, x_ref.shape[-1])
        else:
            seq = seq_ref[...]                   # previous layer's outputs
        xproj_ref[...] = (
            jnp.dot(seq, w_ih, preferred_element_type=jnp.float32) + bias)

        def step(t, carry):
            h, c = carry
            row = pl.multiple_of(t * B, B)
            # Gates; weights/bias pre-scaled so one tanh yields sigmoid for
            # i/f/o (via 0.5*tanh(x/2)+0.5) and tanh for g.
            g = xproj_ref[pl.ds(row, B), :] + jnp.dot(
                h, w_hh, preferred_element_type=jnp.float32)      # (B, 4H)
            th = jnp.tanh(g)                     # single EUP push, all 4 gates
            # PyTorch gate order along the last dim: i, f, g, o.
            i_g = 0.5 * th[:, 0 * H:1 * H] + 0.5
            f_g = 0.5 * th[:, 1 * H:2 * H] + 0.5
            g_g = th[:, 2 * H:3 * H]
            o_g = 0.5 * th[:, 3 * H:4 * H] + 0.5
            c = f_g * c + i_g * g_g
            h = o_g * jnp.tanh(c)
            if layer + 1 < L:                    # static: skip on last layer
                seq_ref[pl.ds(row, B), :] = h    # next layer's input (VMEM)
            return h, c

        h, _ = lax.fori_loop(
            0, T, step,
            (jnp.zeros((B, H), jnp.float32), jnp.zeros((B, H), jnp.float32)),
            unroll=True)
        # TODO(synk): inter-layer dropout (p=0.75) is train-only; eval forward
        # is the identity, so it is intentionally omitted here.

    # hidden[-1] == last layer's h at t = T-1; classifier head.
    w_cls = w_cls_ref[...]                       # (C, H)
    if out_ref.shape[-1] == 1:
        # VPU multiply + lane reduction beats an almost-empty MXU push.
        out_ref[...] = (jnp.sum(h * w_cls, axis=-1, keepdims=True)
                        + b_cls_ref[...])
    else:
        out_ref[...] = (lax.dot_general(
            h, w_cls, (((1,), (1,)), ((), ())),
            preferred_element_type=jnp.float32) + b_cls_ref[...])


# ------------------------------ JAX wrapper --------------------------------- #

@jax.jit
def sequence_model_forward(x_btf, kparams):
    """x_btf: (B, T, F) batch-first input, like the PyTorch module."""
    x_tbf = jnp.transpose(x_btf, (1, 0, 2)).astype(jnp.float32)   # (T, B, F)
    T, B, _ = x_tbf.shape
    H = kparams["w_hh"].shape[1]
    C = kparams["cls_w"].shape[0]

    vmem = pl.BlockSpec(memory_space=pltpu.MemorySpace.VMEM)
    return pl.pallas_call(
        _lstm_classifier_kernel,
        out_shape=jax.ShapeDtypeStruct((B, C), jnp.float32),
        in_specs=[vmem] * 7,
        out_specs=vmem,
        scratch_shapes=[pltpu.VMEM((T * B, H), jnp.float32),       # seq_ref
                        pltpu.VMEM((T * B, 4 * H), jnp.float32)],  # xproj_ref
    )(x_tbf, kparams["w_ih0"], kparams["w_ih_rest"], kparams["w_hh"],
      kparams["bias"], kparams["cls_w"], kparams["cls_b"])


# ----------------------- parameter init & preparation ----------------------- #

def init_raw_params(key, n_features, n_hidden, n_layers, n_classes):
    """PyTorch-layout LSTM + Linear parameters (deterministic)."""
    H = n_hidden
    k = 1.0 / float(np.sqrt(H))
    layers = []
    for layer in range(n_layers):
        d_in = n_features if layer == 0 else H
        key, k1, k2, k3, k4 = jax.random.split(key, 5)
        layers.append(dict(
            w_ih=jax.random.uniform(k1, (4 * H, d_in), jnp.float32, -k, k),
            w_hh=jax.random.uniform(k2, (4 * H, H), jnp.float32, -k, k),
            b_ih=jax.random.uniform(k3, (4 * H,), jnp.float32, -k, k),
            b_hh=jax.random.uniform(k4, (4 * H,), jnp.float32, -k, k)))
    key, k1, k2 = jax.random.split(key, 3)
    cls_w = jax.random.uniform(k1, (n_classes, H), jnp.float32, -k, k)
    cls_b = jax.random.uniform(k2, (n_classes,), jnp.float32, -k, k)
    return {"layers": layers, "cls_w": cls_w, "cls_b": cls_b}


def prepare_kernel_params(raw):
    """Transpose, combine biases, and fold the sigmoid-via-tanh 0.5 pre-scale
    into the i/f/o gate columns (g columns stay at 1.0)."""
    layers = raw["layers"]
    L = len(layers)
    H = layers[0]["w_hh"].shape[1]
    scale = jnp.concatenate([jnp.full((H,), 0.5), jnp.full((H,), 0.5),
                             jnp.ones((H,)), jnp.full((H,), 0.5)]
                            ).astype(jnp.float32)                  # (4H,)
    w_ih0 = layers[0]["w_ih"].T * scale[None, :]                   # (F, 4H)
    w_ih_rest = jnp.stack([layers[l]["w_ih"].T * scale[None, :]
                           for l in range(1, L)], axis=0)          # (L-1, H, 4H)
    w_hh = jnp.stack([layers[l]["w_hh"].T * scale[None, :]
                      for l in range(L)], axis=0)                  # (L, H, 4H)
    bias = jnp.stack([((layers[l]["b_ih"] + layers[l]["b_hh"])
                       * scale)[None, :] for l in range(L)], axis=0)  # (L,1,4H)
    return {"w_ih0": w_ih0, "w_ih_rest": w_ih_rest, "w_hh": w_hh,
            "bias": bias, "cls_w": raw["cls_w"],
            "cls_b": raw["cls_b"][None, :]}


# ------------------------------ numpy reference ------------------------------ #

def _reference_forward(x_btf, raw):
    x = np.asarray(x_btf, np.float64)               # (B, T, F)
    layers = raw["layers"]
    L = len(layers)
    H = layers[0]["w_hh"].shape[1]
    B, T, _ = x.shape
    sig = lambda z: 1.0 / (1.0 + np.exp(-z))
    seq = np.transpose(x, (1, 0, 2))                # (T, B, F)
    h = None
    for l in range(L):
        w_ih = np.asarray(layers[l]["w_ih"], np.float64)
        w_hh = np.asarray(layers[l]["w_hh"], np.float64)
        b = (np.asarray(layers[l]["b_ih"], np.float64)
             + np.asarray(layers[l]["b_hh"], np.float64))
        h = np.zeros((B, H)); c = np.zeros((B, H))
        outs = []
        for t in range(T):
            g = seq[t] @ w_ih.T + h @ w_hh.T + b
            i_g = sig(g[:, :H]); f_g = sig(g[:, H:2 * H])
            g_g = np.tanh(g[:, 2 * H:3 * H]); o_g = sig(g[:, 3 * H:])
            c = f_g * c + i_g * g_g
            h = o_g * np.tanh(c)
            outs.append(h)
        seq = np.stack(outs, axis=0)
    w_cls = np.asarray(raw["cls_w"], np.float64)
    b_cls = np.asarray(raw["cls_b"], np.float64)
    return h @ w_cls.T + b_cls[None, :]


# ----------------------------------- main ----------------------------------- #

if __name__ == "__main__":
    B, T, F = 8, 8, 16          # batch (fills sublanes), seq len, n_features
    H, L, C = 32, 4, 1          # n_hidden, n_layers, n_classes

    key = jax.random.PRNGKey(0)
    key, kx = jax.random.split(key)
    x = jax.random.normal(kx, (B, T, F), jnp.float32)

    raw_params = init_raw_params(key, n_features=F, n_hidden=H,
                                 n_layers=L, n_classes=C)
    kparams = prepare_kernel_params(raw_params)

    out = sequence_model_forward(x, kparams)
    jax.block_until_ready(out)
    assert out.shape == (B, C), out.shape

    ref = _reference_forward(x, raw_params)
    max_err = float(np.max(np.abs(np.asarray(out) - ref)))
    assert max_err < 2e-3, f"mismatch vs numpy reference: {max_err}"
    print("KERNEL_OK")
</pallas_src>

<mosaic_0001>
module attributes {stable_mosaic.version = 11 : i64} {
  func.func @_lstm_classifier_kernel(%arg0: memref<8x8x16xf32, #tpu.memory_space<vmem>>, %arg1: memref<16x128xf32, #tpu.memory_space<vmem>>, %arg2: memref<3x32x128xf32, #tpu.memory_space<vmem>>, %arg3: memref<4x32x128xf32, #tpu.memory_space<vmem>>, %arg4: memref<4x1x128xf32, #tpu.memory_space<vmem>>, %arg5: memref<1x32xf32, #tpu.memory_space<vmem>>, %arg6: memref<1x1xf32, #tpu.memory_space<vmem>>, %arg7: memref<8x1xf32, #tpu.memory_space<vmem>>, %arg8: memref<64x32xf32, #tpu.memory_space<vmem>>, %arg9: memref<64x128xf32, #tpu.memory_space<vmem>>) attributes {dimension_semantics = [], scalar_prefetch = 0 : i64, scratch_operands = 2 : i64, tpu.core_type = #tpu.core_type<tc>} {
    %c0 = arith.constant 0 : index
    %c0_0 = arith.constant 0 : index
    %0 = vector.load %arg1[%c0, %c0_0] : memref<16x128xf32, #tpu.memory_space<vmem>>, vector<16x128xf32>
    %c0_1 = arith.constant 0 : index
    %c0_2 = arith.constant 0 : index
    %c0_3 = arith.constant 0 : index
    %1 = vector.load %arg3[%c0_1, %c0_2, %c0_3] : memref<4x32x128xf32, #tpu.memory_space<vmem>>, vector<1x32x128xf32>
    %2 = vector.shape_cast %1 : vector<1x32x128xf32> to vector<32x128xf32>
    %c0_4 = arith.constant 0 : index
    %c0_5 = arith.constant 0 : index
    %c0_6 = arith.constant 0 : index
    %3 = vector.load %arg4[%c0_4, %c0_5, %c0_6] : memref<4x1x128xf32, #tpu.memory_space<vmem>>, vector<1x1x128xf32>
    %4 = vector.shape_cast %3 : vector<1x1x128xf32> to vector<1x128xf32>
    %c0_7 = arith.constant 0 : index
    %c0_8 = arith.constant 0 : index
    %c0_9 = arith.constant 0 : index
    %5 = vector.load %arg0[%c0_7, %c0_8, %c0_9] : memref<8x8x16xf32, #tpu.memory_space<vmem>>, vector<8x8x16xf32>
    %6 = vector.shape_cast %5 : vector<8x8x16xf32> to vector<64x16xf32>
    %cst = arith.constant dense<0.000000e+00> : vector<64x128xf32>
    %7 = tpu.matmul %6, %0, %cst {dimension_numbers = #tpu.dot_dimension_numbers<[1], [0], [0], [1], [0, 0, 1, 1], [], []>} : vector<64x16xf32>, vector<16x128xf32>, vector<64x128xf32> -> vector<64x128xf32>
    %8 = vector.broadcast %4 : vector<1x128xf32> to vector<64x128xf32>
    %9 = arith.addf %7, %8 : vector<64x128xf32>
    %c0_10 = arith.constant 0 : index
    %c0_11 = arith.constant 0 : index
    %10 = vector.load %arg9[%c0_10, %c0_11] : memref<64x128xf32, #tpu.memory_space<vmem>>, vector<64x128xf32>
    tpu.vector_store %arg9[%c0_10, %c0_11], %9 {strides = array<i32>} : memref<64x128xf32, #tpu.memory_space<vmem>>, vector<64x128xf32>,
    %cst_12 = arith.constant 0.000000e+00 : f32
    %11 = vector.broadcast %cst_12 : f32 to vector<8x32xf32>
    %cst_13 = arith.constant 0.000000e+00 : f32
    %12 = vector.broadcast %cst_13 : f32 to vector<8x32xf32>
    %c0_i32 = arith.constant 0 : i32
    %c8_i32 = arith.constant 8 : i32
    %13 = arith.muli %c0_i32, %c8_i32 : i32
    %14 = tpu.assume_multiple %13, 8 : i32
    %15 = arith.index_cast %14 : i32 to index
    %c0_14 = arith.constant 0 : index
    %16 = vector.load %arg9[%15, %c0_14] : memref<64x128xf32, #tpu.memory_space<vmem>>, vector<8x128xf32>
    %cst_15 = arith.constant dense<0.000000e+00> : vector<8x128xf32>
    %17 = tpu.matmul %11, %2, %cst_15 {dimension_numbers = #tpu.dot_dimension_numbers<[1], [0], [0], [1], [0, 0, 1, 1], [], []>} : vector<8x32xf32>, vector<32x128xf32>, vector<8x128xf32> -> vector<8x128xf32>
    %18 = arith.addf %16, %17 : vector<8x128xf32>
    %19 = math.tanh %18 : vector<8x128xf32>
    %20 = vector.extract_strided_slice %19 {offsets = [0, 0], sizes = [8, 32], strides = [1, 1]} : vector<8x128xf32> to vector<8x32xf32>
    %cst_16 = arith.constant 5.000000e-01 : f32
    %21 = vector.broadcast %cst_16 : f32 to vector<8x32xf32>
    %22 = arith.mulf %21, %20 : vector<8x32xf32>
    %cst_17 = arith.constant 5.000000e-01 : f32
    %23 = vector.broadcast %cst_17 : f32 to vector<8x32xf32>
    %24 = arith.addf %22, %23 : vector<8x32xf32>
    %25 = vector.extract_strided_slice %19 {offsets = [0, 32], sizes = [8, 32], strides = [1, 1]} : vector<8x128xf32> to vector<8x32xf32>
    %cst_18 = arith.constant 5.000000e-01 : f32
    %26 = vector.broadcast %cst_18 : f32 to vector<8x32xf32>
    %27 = arith.mulf %26, %25 : vector<8x32xf32>
    %cst_19 = arith.constant 5.000000e-01 : f32
    %28 = vector.broadcast %cst_19 : f32 to vector<8x32xf32>
    %29 = arith.addf %27, %28 : vector<8x32xf32>
    %30 = vector.extract_strided_slice %19 {offsets = [0, 64], sizes = [8, 32], strides = [1, 1]} : vector<8x128xf32> to vector<8x32xf32>
    %31 = vector.extract_strided_slice %19 {offsets = [0, 96], sizes = [8, 32], strides = [1, 1]} : vector<8x128xf32> to vector<8x32xf32>
    %cst_20 = arith.constant 5.000000e-01 : f32
    %32 = vector.broadcast %cst_20 : f32 to vector<8x32xf32>
    %33 = arith.mulf %32, %31 : vector<8x32xf32>
    %cst_21 = arith.constant 5.000000e-01 : f32
    %34 = vector.broadcast %cst_21 : f32 to vector<8x32xf32>
    %35 = arith.addf %33, %34 : vector<8x32xf32>
    %36 = arith.mulf %29, %12 : vector<8x32xf32>
    %37 = arith.mulf %24, %30 : vector<8x32xf32>
    %38 = arith.addf %36, %37 : vector<8x32xf32>
    %39 = math.tanh %38 : vector<8x32xf32>
    %40 = arith.mulf %35, %39 : vector<8x32xf32>
    %41 = arith.index_cast %14 : i32 to index
    %c0_22 = arith.constant 0 : index
    %42 = vector.load %arg8[%41, %c0_22] : memref<64x32xf32, #tpu.memory_space<vmem>>, vector<8x32xf32>
    tpu.vector_store %arg8[%41, %c0_22], %40 {strides = array<i32>} : memref<64x32xf32, #tpu.memory_space<vmem>>, vector<8x32xf32>,
    %c1_i32 = arith.constant 1 : i32
    %c8_i32_23 = arith.constant 8 : i32
    %43 = arith.muli %c1_i32, %c8_i32_23 : i32
    %44 = tpu.assume_multiple %43, 8 : i32
    %45 = arith.index_cast %44 : i32 to index
    %c0_24 = arith.constant 0 : index
    %46 = vector.load %arg9[%45, %c0_24] : memref<64x128xf32, #tpu.memory_space<vmem>>, vector<8x128xf32>
    %cst_25 = arith.constant dense<0.000000e+00> : vector<8x128xf32>
    %47 = tpu.matmul %40, %2, %cst_25 {dimension_numbers = #tpu.dot_dimension_numbers<[1], [0], [0], [1], [0, 0, 1, 1], [], []>} : vector<8x32xf32>, vector<32x128xf32>, vector<8x128xf32> -> vector<8x128xf32>
    %48 = arith.addf %46, %47 : vector<8x128xf32>
    %49 = math.tanh %48 : vector<8x128xf32>
    %50 = vector.extract_strided_slice %49 {offsets = [0, 0], sizes = [8, 32], strides = [1, 1]} : vector<8x128xf32> to vector<8x32xf32>
    %cst_26 = arith.constant 5.000000e-01 : f32
    %51 = vector.broadcast %cst_26 : f32 to vector<8x32xf32>
    %52 = arith.mulf %51, %50 : vector<8x32xf32>
    %cst_27 = arith.constant 5.000000e-01 : f32
    %53 = vector.broadcast %cst_27 : f32 to vector<8x32xf32>
    %54 = arith.addf %52, %53 : vector<8x32xf32>
    %55 = vector.extract_strided_slice %49 {offsets = [0, 32], sizes = [8, 32], strides = [1, 1]} : vector<8x128xf32> to vector<8x32xf32>
    %cst_28 = arith.constant 5.000000e-01 : f32
    %56 = vector.broadcast %cst_28 : f32 to vector<8x32xf32>
    %57 = arith.mulf %56, %55 : vector<8x32xf32>
    %cst_29 = arith.constant 5.000000e-01 : f32
    %58 = vector.broadcast %cst_29 : f32 to vector<8x32xf32>
    %59 = arith.addf %57, %58 : vector<8x32xf32>
    %60 = vector.extract_strided_slice %49 {offsets = [0, 64], sizes = [8, 32], strides = [1, 1]} : vector<8x128xf32> to vector<8x32xf32>
    %61 = vector.extract_strided_slice %49 {offsets = [0, 96], sizes = [8, 32], strides = [1, 1]} : vector<8x128xf32> to vector<8x32xf32>
    %cst_30 = arith.constant 5.000000e-01 : f32
    %62 = vector.broadcast %cst_30 : f32 to vector<8x32xf32>
    %63 = arith.mulf %62, %61 : vector<8x32xf32>
    %cst_31 = arith.constant 5.000000e-01 : f32
    %64 = vector.broadcast %cst_31 : f32 to vector<8x32xf32>
    %65 = arith.addf %63, %64 : vector<8x32xf32>
    %66 = arith.mulf %59, %38 : vector<8x32xf32>
    %67 = arith.mulf %54, %60 : vector<8x32xf32>
    %68 = arith.addf %66, %67 : vector<8x32xf32>
    %69 = math.tanh %68 : vector<8x32xf32>
    %70 = arith.mulf %65, %69 : vector<8x32xf32>
    %71 = arith.index_cast %44 : i32 to index
    %c0_32 = arith.constant 0 : index
    %72 = vector.load %arg8[%71, %c0_32] : memref<64x32xf32, #tpu.memory_space<vmem>>, vector<8x32xf32>
    tpu.vector_store %arg8[%71, %c0_32], %70 {strides = array<i32>} : memref<64x32xf32, #tpu.memory_space<vmem>>, vector<8x32xf32>,
    %c2_i32 = arith.constant 2 : i32
    %c8_i32_33 = arith.constant 8 : i32
    %73 = arith.muli %c2_i32, %c8_i32_33 : i32
    %74 = tpu.assume_multiple %73, 8 : i32
    %75 = arith.index_cast %74 : i32 to index
    %c0_34 = arith.constant 0 : index
    %76 = vector.load %arg9[%75, %c0_34] : memref<64x128xf32, #tpu.memory_space<vmem>>, vector<8x128xf32>
    %cst_35 = arith.constant dense<0.000000e+00> : vector<8x128xf32>
    %77 = tpu.matmul %70, %2, %cst_35 {dimension_numbers = #tpu.dot_dimension_numbers<[1], [0], [0], [1], [0, 0, 1, 1], [], []>} : vector<8x32xf32>, vector<32x128xf32>, vector<8x128xf32> -> vector<8x128xf32>
    %78 = arith.addf %76, %77 : vector<8x128xf32>
    %79 = math.tanh %78 : vector<8x128xf32>
    %80 = vector.extract_strided_slice %79 {offsets = [0, 0], sizes = [8, 32], strides = [1, 1]} : vector<8x128xf32> to vector<8x32xf32>
    %cst_36 = arith.constant 5.000000e-01 : f32
    %81 = vector.broadcast %cst_36 : f32 to vector<8x32xf32>
    %82 = arith.mulf %81, %80 : vector<8x32xf32>
    %cst_37 = arith.constant 5.000000e-01 : f32
    %83 = vector.broadcast %cst_37 : f32 to vector<8x32xf32>
    %84 = arith.addf %82, %83 : vector<8x32xf32>
    %85 = vector.extract_strided_slice %79 {offsets = [0, 32], sizes = [8, 32], strides = [1, 1]} : vector<8x128xf32> to vector<8x32xf32>
    %cst_38 = arith.constant 5.000000e-01 : f32
    %86 = vector.broadcast %cst_38 : f32 to vector<8x32xf32>
    %87 = arith.mulf %86, %85 : vector<8x32xf32>
    %cst_39 = arith.constant 5.000000e-01 : f32
    %88 = vector.broadcast %cst_39 : f32 to vector<8x32xf32>
    %89 = arith.addf %87, %88 : vector<8x32xf32>
    %90 = vector.extract_strided_slice %79 {offsets = [0, 64], sizes = [8, 32], strides = [1, 1]} : vector<8x128xf32> to vector<8x32xf32>
    %91 = vector.extract_strided_slice %79 {offsets = [0, 96], sizes = [8, 32], strides = [1, 1]} : vector<8x128xf32> to vector<8x32xf32>
    %cst_40 = arith.constant 5.000000e-01 : f32
    %92 = vector.broadcast %cst_40 : f32 to vector<8x32xf32>
    %93 = arith.mulf %92, %91 : vector<8x32xf32>
    %cst_41 = arith.constant 5.000000e-01 : f32
    %94 = vector.broadcast %cst_41 : f32 to vector<8x32xf32>
    %95 = arith.addf %93, %94 : vector<8x32xf32>
    %96 = arith.mulf %89, %68 : vector<8x32xf32>
    %97 = arith.mulf %84, %90 : vector<8x32xf32>
    %98 = arith.addf %96, %97 : vector<8x32xf32>
    %99 = math.tanh %98 : vector<8x32xf32>
    %100 = arith.mulf %95, %99 : vector<8x32xf32>
    %101 = arith.index_cast %74 : i32 to index
    %c0_42 = arith.constant 0 : index
    %102 = vector.load %arg8[%101, %c0_42] : memref<64x32xf32, #tpu.memory_space<vmem>>, vector<8x32xf32>
    tpu.vector_store %arg8[%101, %c0_42], %100 {strides = array<i32>} : memref<64x32xf32, #tpu.memory_space<vmem>>, vector<8x32xf32>,
    %c3_i32 = arith.constant 3 : i32
    %c8_i32_43 = arith.constant 8 : i32
    %103 = arith.muli %c3_i32, %c8_i32_43 : i32
    %104 = tpu.assume_multiple %103, 8 : i32
    %105 = arith.index_cast %104 : i32 to index
    %c0_44 = arith.constant 0 : index
    %106 = vector.load %arg9[%105, %c0_44] : memref<64x128xf32, #tpu.memory_space<vmem>>, vector<8x128xf32>
    %cst_45 = arith.constant dense<0.000000e+00> : vector<8x128xf32>
    %107 = tpu.matmul %100, %2, %cst_45 {dimension_numbers = #tpu.dot_dimension_numbers<[1], [0], [0], [1], [0, 0, 1, 1], [], []>} : vector<8x32xf32>, vector<32x128xf32>, vector<8x128xf32> -> vector<8x128xf32>
    %108 = arith.addf %106, %107 : vector<8x128xf32>
    %109 = math.tanh %108 : vector<8x128xf32>
    %110 = vector.extract_strided_slice %109 {offsets = [0, 0], sizes = [8, 32], strides = [1, 1]} : vector<8x128xf32> to vector<8x32xf32>
    %cst_46 = arith.constant 5.000000e-01 : f32
    %111 = vector.broadcast %cst_46 : f32 to vector<8x32xf32>
    %112 = arith.mulf %111, %110 : vector<8x32xf32>
    %cst_47 = arith.constant 5.000000e-01 : f32
    %113 = vector.broadcast %cst_47 : f32 to vector<8x32xf32>
    %114 = arith.addf %112, %113 : vector<8x32xf32>
    %115 = vector.extract_strided_slice %109 {offsets = [0, 32], sizes = [8, 32], strides = [1, 1]} : vector<8x128xf32> to vector<8x32xf32>
    %cst_48 = arith.constant 5.000000e-01 : f32
    %116 = vector.broadcast %cst_48 : f32 to vector<8x32xf32>
    %117 = arith.mulf %116, %115 : vector<8x32xf32>
    %cst_49 = arith.constant 5.000000e-01 : f32
    %118 = vector.broadcast %cst_49 : f32 to vector<8x32xf32>
    %119 = arith.addf %117, %118 : vector<8x32xf32>
    %120 = vector.extract_strided_slice %109 {offsets = [0, 64], sizes = [8, 32], strides = [1, 1]} : vector<8x128xf32> to vector<8x32xf32>
    %121 = vector.extract_strided_slice %109 {offsets = [0, 96], sizes = [8, 32], strides = [1, 1]} : vector<8x128xf32> to vector<8x32xf32>
    %cst_50 = arith.constant 5.000000e-01 : f32
    %122 = vector.broadcast %cst_50 : f32 to vector<8x32xf32>
    %123 = arith.mulf %122, %121 : vector<8x32xf32>
    %cst_51 = arith.constant 5.000000e-01 : f32
    %124 = vector.broadcast %cst_51 : f32 to vector<8x32xf32>
    %125 = arith.addf %123, %124 : vector<8x32xf32>
    %126 = arith.mulf %119, %98 : vector<8x32xf32>
    %127 = arith.mulf %114, %120 : vector<8x32xf32>
    %128 = arith.addf %126, %127 : vector<8x32xf32>
    %129 = math.tanh %128 : vector<8x32xf32>
    %130 = arith.mulf %125, %129 : vector<8x32xf32>
    %131 = arith.index_cast %104 : i32 to index
    %c0_52 = arith.constant 0 : index
    %132 = vector.load %arg8[%131, %c0_52] : memref<64x32xf32, #tpu.memory_space<vmem>>, vector<8x32xf32>
    tpu.vector_store %arg8[%131, %c0_52], %130 {strides = array<i32>} : memref<64x32xf32, #tpu.memory_space<vmem>>, vector<8x32xf32>,
    %c4_i32 = arith.constant 4 : i32
    %c8_i32_53 = arith.constant 8 : i32
    %133 = arith.muli %c4_i32, %c8_i32_53 : i32
    %134 = tpu.assume_multiple %133, 8 : i32
    %135 = arith.index_cast %134 : i32 to index
    %c0_54 = arith.constant 0 : index
    %136 = vector.load %arg9[%135, %c0_54] : memref<64x128xf32, #tpu.memory_space<vmem>>, vector<8x128xf32>
    %cst_55 = arith.constant dense<0.000000e+00> : vector<8x128xf32>
    %137 = tpu.matmul %130, %2, %cst_55 {dimension_numbers = #tpu.dot_dimension_numbers<[1], [0], [0], [1], [0, 0, 1, 1], [], []>} : vector<8x32xf32>, vector<32x128xf32>, vector<8x128xf32> -> vector<8x128xf32>
    %138 = arith.addf %136, %137 : vector<8x128xf32>
    %139 = math.tanh %138 : vector<8x128xf32>
    %140 = vector.extract_strided_slice %139 {offsets = [0, 0], sizes = [8, 32], strides = [1, 1]} : vector<8x128xf32> to vector<8x32xf32>
    %cst_56 = arith.constant 5.000000e-01 : f32
    %141 = vector.broadcast %cst_56 : f32 to vector<8x32xf32>
    %142 = arith.mulf %141, %140 : vector<8x32xf32>
    %cst_57 = arith.constant 5.000000e-01 : f32
    %143 = vector.broadcast %cst_57 : f32 to vector<8x32xf32>
    %144 = arith.addf %142, %143 : vector<8x32xf32>
    %145 = vector.extract_strided_slice %139 {offsets = [0, 32], sizes = [8, 32], strides = [1, 1]} : vector<8x128xf32> to vector<8x32xf32>
    %cst_58 = arith.constant 5.000000e-01 : f32
    %146 = vector.broadcast %cst_58 : f32 to vector<8x32xf32>
    %147 = arith.mulf %146, %145 : vector<8x32xf32>
    %cst_59 = arith.constant 5.000000e-01 : f32
    %148 = vector.broadcast %cst_59 : f32 to vector<8x32xf32>
    %149 = arith.addf %147, %148 : vector<8x32xf32>
    %150 = vector.extract_strided_slice %139 {offsets = [0, 64], sizes = [8, 32], strides = [1, 1]} : vector<8x128xf32> to vector<8x32xf32>
    %151 = vector.extract_strided_slice %139 {offsets = [0, 96], sizes = [8, 32], strides = [1, 1]} : vector<8x128xf32> to vector<8x32xf32>
    %cst_60 = arith.constant 5.000000e-01 : f32
    %152 = vector.broadcast %cst_60 : f32 to vector<8x32xf32>
    %153 = arith.mulf %152, %151 : vector<8x32xf32>
    %cst_61 = arith.constant 5.000000e-01 : f32
    %154 = vector.broadcast %cst_61 : f32 to vector<8x32xf32>
    %155 = arith.addf %153, %154 : vector<8x32xf32>
    %156 = arith.mulf %149, %128 : vector<8x32xf32>
    %157 = arith.mulf %144, %150 : vector<8x32xf32>
    %158 = arith.addf %156, %157 : vector<8x32xf32>
    %159 = math.tanh %158 : vector<8x32xf32>
    %160 = arith.mulf %155, %159 : vector<8x32xf32>
    %161 = arith.index_cast %134 : i32 to index
    %c0_62 = arith.constant 0 : index
    %162 = vector.load %arg8[%161, %c0_62] : memref<64x32xf32, #tpu.memory_space<vmem>>, vector<8x32xf32>
    tpu.vector_store %arg8[%161, %c0_62], %160 {strides = array<i32>} : memref<64x32xf32, #tpu.memory_space<vmem>>, vector<8x32xf32>,
    %c5_i32 = arith.constant 5 : i32
    %c8_i32_63 = arith.constant 8 : i32
    %163 = arith.muli %c5_i32, %c8_i32_63 : i32
    %164 = tpu.assume_multiple %163, 8 : i32
    %165 = arith.index_cast %164 : i32 to index
    %c0_64 = arith.constant 0 : index
    %166 = vector.load %arg9[%165, %c0_64] : memref<64x128xf32, #tpu.memory_space<vmem>>, vector<8x128xf32>
    %cst_65 = arith.constant dense<0.000000e+00> : vector<8x128xf32>
    %167 = tpu.matmul %160, %2, %cst_65 {dimension_numbers = #tpu.dot_dimension_numbers<[1], [0], [0], [1], [0, 0, 1, 1], [], []>} : vector<8x32xf32>, vector<32x128xf32>, vector<8x128xf32> -> vector<8x128xf32>
    %168 = arith.addf %166, %167 : vector<8x128xf32>
    %169 = math.tanh %168 : vector<8x128xf32>
    %170 = vector.extract_strided_slice %169 {offsets = [0, 0], sizes = [8, 32], strides = [1, 1]} : vector<8x128xf32> to vector<8x32xf32>
    %cst_66 = arith.constant 5.000000e-01 : f32
    %171 = vector.broadcast %cst_66 : f32 to vector<8x32xf32>
    %172 = arith.mulf %171, %170 : vector<8x32xf32>
    %cst_67 = arith.constant 5.000000e-01 : f32
    %173 = vector.broadcast %cst_67 : f32 to vector<8x32xf32>
    %174 = arith.addf %172, %173 : vector<8x32xf32>
    %175 = vector.extract_strided_slice %169 {offsets = [0, 32], sizes = [8, 32], strides = [1, 1]} : vector<8x128xf32> to vector<8x32xf32>
    %cst_68 = arith.constant 5.000000e-01 : f32
    %176 = vector.broadcast %cst_68 : f32 to vector<8x32xf32>
    %177 = arith.mulf %176, %175 : vector<8x32xf32>
    %cst_69 = arith.constant 5.000000e-01 : f32
    %178 = vector.broadcast %cst_69 : f32 to vector<8x32xf32>
    %179 = arith.addf %177, %178 : vector<8x32xf32>
    %180 = vector.extract_strided_slice %169 {offsets = [0, 64], sizes = [8, 32], strides = [1, 1]} : vector<8x128xf32> to vector<8x32xf32>
    %181 = vector.extract_strided_slice %169 {offsets = [0, 96], sizes = [8, 32], strides = [1, 1]} : vector<8x128xf32> to vector<8x32xf32>
    %cst_70 = arith.constant 5.000000e-01 : f32
    %182 = vector.broadcast %cst_70 : f32 to vector<8x32xf32>
    %183 = arith.mulf %182, %181 : vector<8x32xf32>
    %cst_71 = arith.constant 5.000000e-01 : f32
    %184 = vector.broadcast %cst_71 : f32 to vector<8x32xf32>
    %185 = arith.addf %183, %184 : vector<8x32xf32>
    %186 = arith.mulf %179, %158 : vector<8x32xf32>
    %187 = arith.mulf %174, %180 : vector<8x32xf32>
    %188 = arith.addf %186, %187 : vector<8x32xf32>
    %189 = math.tanh %188 : vector<8x32xf32>
    %190 = arith.mulf %185, %189 : vector<8x32xf32>
    %191 = arith.index_cast %164 : i32 to index
    %c0_72 = arith.constant 0 : index
    %192 = vector.load %arg8[%191, %c0_72] : memref<64x32xf32, #tpu.memory_space<vmem>>, vector<8x32xf32>
    tpu.vector_store %arg8[%191, %c0_72], %190 {strides = array<i32>} : memref<64x32xf32, #tpu.memory_space<vmem>>, vector<8x32xf32>,
    %c6_i32 = arith.constant 6 : i32
    %c8_i32_73 = arith.constant 8 : i32
    %193 = arith.muli %c6_i32, %c8_i32_73 : i32
    %194 = tpu.assume_multiple %193, 8 : i32
    %195 = arith.index_cast %194 : i32 to index
    %c0_74 = arith.constant 0 : index
    %196 = vector.load %arg9[%195, %c0_74] : memref<64x128xf32, #tpu.memory_space<vmem>>, vector<8x128xf32>
    %cst_75 = arith.constant dense<0.000000e+00> : vector<8x128xf32>
    %197 = tpu.matmul %190, %2, %cst_75 {dimension_numbers = #tpu.dot_dimension_numbers<[1], [0], [0], [1], [0, 0, 1, 1], [], []>} : vector<8x32xf32>, vector<32x128xf32>, vector<8x128xf32> -> vector<8x128xf32>
    %198 = arith.addf %196, %197 : vector<8x128xf32>
    %199 = math.tanh %198 : vector<8x128xf32>
    %200 = vector.extract_strided_slice %199 {offsets = [0, 0], sizes = [8, 32], strides = [1, 1]} : vector<8x128xf32> to vector<8x32xf32>
    %cst_76 = arith.constant 5.000000e-01 : f32
    %201 = vector.broadcast %cst_76 : f32 to vector<8x32xf32>
    %202 = arith.mulf %201, %200 : vector<8x32xf32>
    %cst_77 = arith.constant 5.000000e-01 : f32
    %203 = vector.broadcast %cst_77 : f32 to vector<8x32xf32>
    %204 = arith.addf %202, %203 : vector<8x32xf32>
    %205 = vector.extract_strided_slice %199 {offsets = [0, 32], sizes = [8, 32], strides = [1, 1]} : vector<8x128xf32> to vector<8x32xf32>
    %cst_78 = arith.constant 5.000000e-01 : f32
    %206 = vector.broadcast %cst_78 : f32 to vector<8x32xf32>
    %207 = arith.mulf %206, %205 : vector<8x32xf32>
    %cst_79 = arith.constant 5.000000e-01 : f32
    %208 = vector.broadcast %cst_79 : f32 to vector<8x32xf32>
    %209 = arith.addf %207, %208 : vector<8x32xf32>
    %210 = vector.extract_strided_slice %199 {offsets = [0, 64], sizes = [8, 32], strides = [1, 1]} : vector<8x128xf32> to vector<8x32xf32>
    %211 = vector.extract_strided_slice %199 {offsets = [0, 96], sizes = [8, 32], strides = [1, 1]} : vector<8x128xf32> to vector<8x32xf32>
    %cst_80 = arith.constant 5.000000e-01 : f32
    %212 = vector.broadcast %cst_80 : f32 to vector<8x32xf32>
    %213 = arith.mulf %212, %211 : vector<8x32xf32>
    %cst_81 = arith.constant 5.000000e-01 : f32
    %214 = vector.broadcast %cst_81 : f32 to vector<8x32xf32>
    %215 = arith.addf %213, %214 : vector<8x32xf32>
    %216 = arith.mulf %209, %188 : vector<8x32xf32>
    %217 = arith.mulf %204, %210 : vector<8x32xf32>
    %218 = arith.addf %216, %217 : vector<8x32xf32>
    %219 = math.tanh %218 : vector<8x32xf32>
    %220 = arith.mulf %215, %219 : vector<8x32xf32>
    %221 = arith.index_cast %194 : i32 to index
    %c0_82 = arith.constant 0 : index
    %222 = vector.load %arg8[%221, %c0_82] : memref<64x32xf32, #tpu.memory_space<vmem>>, vector<8x32xf32>
    tpu.vector_store %arg8[%221, %c0_82], %220 {strides = array<i32>} : memref<64x32xf32, #tpu.memory_space<vmem>>, vector<8x32xf32>,
    %c7_i32 = arith.constant 7 : i32
    %c8_i32_83 = arith.constant 8 : i32
    %223 = arith.muli %c7_i32, %c8_i32_83 : i32
    %224 = tpu.assume_multiple %223, 8 : i32
    %225 = arith.index_cast %224 : i32 to index
    %c0_84 = arith.constant 0 : index
    %226 = vector.load %arg9[%225, %c0_84] : memref<64x128xf32, #tpu.memory_space<vmem>>, vector<8x128xf32>
    %cst_85 = arith.constant dense<0.000000e+00> : vector<8x128xf32>
    %227 = tpu.matmul %220, %2, %cst_85 {dimension_numbers = #tpu.dot_dimension_numbers<[1], [0], [0], [1], [0, 0, 1, 1], [], []>} : vector<8x32xf32>, vector<32x128xf32>, vector<8x128xf32> -> vector<8x128xf32>
    %228 = arith.addf %226, %227 : vector<8x128xf32>
    %229 = math.tanh %228 : vector<8x128xf32>
    %230 = vector.extract_strided_slice %229 {offsets = [0, 0], sizes = [8, 32], strides = [1, 1]} : vector<8x128xf32> to vector<8x32xf32>
    %cst_86 = arith.constant 5.000000e-01 : f32
    %231 = vector.broadcast %cst_86 : f32 to vector<8x32xf32>
    %232 = arith.mulf %231, %230 : vector<8x32xf32>
    %cst_87 = arith.constant 5.000000e-01 : f32
    %233 = vector.broadcast %cst_87 : f32 to vector<8x32xf32>
    %234 = arith.addf %232, %233 : vector<8x32xf32>
    %235 = vector.extract_strided_slice %229 {offsets = [0, 32], sizes = [8, 32], strides = [1, 1]} : vector<8x128xf32> to vector<8x32xf32>
    %cst_88 = arith.constant 5.000000e-01 : f32
    %236 = vector.broadcast %cst_88 : f32 to vector<8x32xf32>
    %237 = arith.mulf %236, %235 : vector<8x32xf32>
    %cst_89 = arith.constant 5.000000e-01 : f32
    %238 = vector.broadcast %cst_89 : f32 to vector<8x32xf32>
    %239 = arith.addf %237, %238 : vector<8x32xf32>
    %240 = vector.extract_strided_slice %229 {offsets = [0, 64], sizes = [8, 32], strides = [1, 1]} : vector<8x128xf32> to vector<8x32xf32>
    %241 = vector.extract_strided_slice %229 {offsets = [0, 96], sizes = [8, 32], strides = [1, 1]} : vector<8x128xf32> to vector<8x32xf32>
    %cst_90 = arith.constant 5.000000e-01 : f32
    %242 = vector.broadcast %cst_90 : f32 to vector<8x32xf32>
    %243 = arith.mulf %242, %241 : vector<8x32xf32>
    %cst_91 = arith.constant 5.000000e-01 : f32
    %244 = vector.broadcast %cst_91 : f32 to vector<8x32xf32>
    %245 = arith.addf %243, %244 : vector<8x32xf32>
    %246 = arith.mulf %239, %218 : vector<8x32xf32>
    %247 = arith.mulf %234, %240 : vector<8x32xf32>
    %248 = arith.addf %246, %247 : vector<8x32xf32>
    %249 = math.tanh %248 : vector<8x32xf32>
    %250 = arith.mulf %245, %249 : vector<8x32xf32>
    %251 = arith.index_cast %224 : i32 to index
    %c0_92 = arith.constant 0 : index
    %252 = vector.load %arg8[%251, %c0_92] : memref<64x32xf32, #tpu.memory_space<vmem>>, vector<8x32xf32>
    tpu.vector_store %arg8[%251, %c0_92], %250 {strides = array<i32>} : memref<64x32xf32, #tpu.memory_space<vmem>>, vector<8x32xf32>,
    %c8_i32_93 = arith.constant 8 : i32
    %c0_94 = arith.constant 0 : index
    %c0_95 = arith.constant 0 : index
    %c0_96 = arith.constant 0 : index
    %253 = vector.load %arg2[%c0_94, %c0_95, %c0_96] : memref<3x32x128xf32, #tpu.memory_space<vmem>>, vector<1x32x128xf32>
    %254 = vector.shape_cast %253 : vector<1x32x128xf32> to vector<32x128xf32>
    %c1 = arith.constant 1 : index
    %c0_97 = arith.constant 0 : index
    %c0_98 = arith.constant 0 : index
    %255 = vector.load %arg3[%c1, %c0_97, %c0_98] : memref<4x32x128xf32, #tpu.memory_space<vmem>>, vector<1x32x128xf32>
    %256 = vector.shape_cast %255 : vector<1x32x128xf32> to vector<32x128xf32>
    %c1_99 = arith.constant 1 : index
    %c0_100 = arith.constant 0 : index
    %c0_101 = arith.constant 0 : index
    %257 = vector.load %arg4[%c1_99, %c0_100, %c0_101] : memref<4x1x128xf32, #tpu.memory_space<vmem>>, vector<1x1x128xf32>
    %258 = vector.shape_cast %257 : vector<1x1x128xf32> to vector<1x128xf32>
    %c0_102 = arith.constant 0 : index
    %c0_103 = arith.constant 0 : index
    %259 = vector.load %arg8[%c0_102, %c0_103] : memref<64x32xf32, #tpu.memory_space<vmem>>, vector<64x32xf32>
    %cst_104 = arith.constant dense<0.000000e+00> : vector<64x128xf32>
    %260 = tpu.matmul %259, %254, %cst_104 {dimension_numbers = #tpu.dot_dimension_numbers<[1], [0], [0], [1], [0, 0, 1, 1], [], []>} : vector<64x32xf32>, vector<32x128xf32>, vector<64x128xf32> -> vector<64x128xf32>
    %261 = vector.broadcast %258 : vector<1x128xf32> to vector<64x128xf32>
    %262 = arith.addf %260, %261 : vector<64x128xf32>
    %c0_105 = arith.constant 0 : index
    %c0_106 = arith.constant 0 : index
    %263 = vector.load %arg9[%c0_105, %c0_106] : memref<64x128xf32, #tpu.memory_space<vmem>>, vector<64x128xf32>
    tpu.vector_store %arg9[%c0_105, %c0_106], %262 {strides = array<i32>} : memref<64x128xf32, #tpu.memory_space<vmem>>, vector<64x128xf32>,
    %cst_107 = arith.constant 0.000000e+00 : f32
    %264 = vector.broadcast %cst_107 : f32 to vector<8x32xf32>
    %cst_108 = arith.constant 0.000000e+00 : f32
    %265 = vector.broadcast %cst_108 : f32 to vector<8x32xf32>
    %c0_i32_109 = arith.constant 0 : i32
    %c8_i32_110 = arith.constant 8 : i32
    %266 = arith.muli %c0_i32_109, %c8_i32_110 : i32
    %267 = tpu.assume_multiple %266, 8 : i32
    %268 = arith.index_cast %267 : i32 to index
    %c0_111 = arith.constant 0 : index
    %269 = vector.load %arg9[%268, %c0_111] : memref<64x128xf32, #tpu.memory_space<vmem>>, vector<8x128xf32>
    %cst_112 = arith.constant dense<0.000000e+00> : vector<8x128xf32>
    %270 = tpu.matmul %264, %256, %cst_112 {dimension_numbers = #tpu.dot_dimension_numbers<[1], [0], [0], [1], [0, 0, 1, 1], [], []>} : vector<8x32xf32>, vector<32x128xf32>, vector<8x128xf32> -> vector<8x128xf32>
    %271 = arith.addf %269, %270 : vector<8x128xf32>
    %272 = math.tanh %271 : vector<8x128xf32>
    %273 = vector.extract_strided_slice %272 {offsets = [0, 0], sizes = [8, 32], strides = [1, 1]} : vector<8x128xf32> to vector<8x32xf32>
    %cst_113 = arith.constant 5.000000e-01 : f32
    %274 = vector.broadcast %cst_113 : f32 to vector<8x32xf32>
    %275 = arith.mulf %274, %273 : vector<8x32xf32>
    %cst_114 = arith.constant 5.000000e-01 : f32
    %276 = vector.broadcast %cst_114 : f32 to vector<8x32xf32>
    %277 = arith.addf %275, %276 : vector<8x32xf32>
    %278 = vector.extract_strided_slice %272 {offsets = [0, 32], sizes = [8, 32], strides = [1, 1]} : vector<8x128xf32> to vector<8x32xf32>
    %cst_115 = arith.constant 5.000000e-01 : f32
    %279 = vector.broadcast %cst_115 : f32 to vector<8x32xf32>
    %280 = arith.mulf %279, %278 : vector<8x32xf32>
    %cst_116 = arith.constant 5.000000e-01 : f32
    %281 = vector.broadcast %cst_116 : f32 to vector<8x32xf32>
    %282 = arith.addf %280, %281 : vector<8x32xf32>
    %283 = vector.extract_strided_slice %272 {offsets = [0, 64], sizes = [8, 32], strides = [1, 1]} : vector<8x128xf32> to vector<8x32xf32>
    %284 = vector.extract_strided_slice %272 {offsets = [0, 96], sizes = [8, 32], strides = [1, 1]} : vector<8x128xf32> to vector<8x32xf32>
    %cst_117 = arith.constant 5.000000e-01 : f32
    %285 = vector.broadcast %cst_117 : f32 to vector<8x32xf32>
    %286 = arith.mulf %285, %284 : vector<8x32xf32>
    %cst_118 = arith.constant 5.000000e-01 : f32
    %287 = vector.broadcast %cst_118 : f32 to vector<8x32xf32>
    %288 = arith.addf %286, %287 : vector<8x32xf32>
    %289 = arith.mulf %282, %265 : vector<8x32xf32>
    %290 = arith.mulf %277, %283 : vector<8x32xf32>
    %291 = arith.addf %289, %290 : vector<8x32xf32>
    %292 = math.tanh %291 : vector<8x32xf32>
    %293 = arith.mulf %288, %292 : vector<8x32xf32>
    %294 = arith.index_cast %267 : i32 to index
    %c0_119 = arith.constant 0 : index
    %295 = vector.load %arg8[%294, %c0_119] : memref<64x32xf32, #tpu.memory_space<vmem>>, vector<8x32xf32>
    tpu.vector_store %arg8[%294, %c0_119], %293 {strides = array<i32>} : memref<64x32xf32, #tpu.memory_space<vmem>>, vector<8x32xf32>,
    %c1_i32_120 = arith.constant 1 : i32
    %c8_i32_121 = arith.constant 8 : i32
    %296 = arith.muli %c1_i32_120, %c8_i32_121 : i32
    %297 = tpu.assume_multiple %296, 8 : i32
    %298 = arith.index_cast %297 : i32 to index
    %c0_122 = arith.constant 0 : index
    %299 = vector.load %arg9[%298, %c0_122] : memref<64x128xf32, #tpu.memory_space<vmem>>, vector<8x128xf32>
    %cst_123 = arith.constant dense<0.000000e+00> : vector<8x128xf32>
    %300 = tpu.matmul %293, %256, %cst_123 {dimension_numbers = #tpu.dot_dimension_numbers<[1], [0], [0], [1], [0, 0, 1, 1], [], []>} : vector<8x32xf32>, vector<32x128xf32>, vector<8x128xf32> -> vector<8x128xf32>
    %301 = arith.addf %299, %300 : vector<8x128xf32>
    %302 = math.tanh %301 : vector<8x128xf32>
    %303 = vector.extract_strided_slice %302 {offsets = [0, 0], sizes = [8, 32], strides = [1, 1]} : vector<8x128xf32> to vector<8x32xf32>
    %cst_124 = arith.constant 5.000000e-01 : f32
    %304 = vector.broadcast %cst_124 : f32 to vector<8x32xf32>
    %305 = arith.mulf %304, %303 : vector<8x32xf32>
    %cst_125 = arith.constant 5.000000e-01 : f32
    %306 = vector.broadcast %cst_125 : f32 to vector<8x32xf32>
    %307 = arith.addf %305, %306 : vector<8x32xf32>
    %308 = vector.extract_strided_slice %302 {offsets = [0, 32], sizes = [8, 32], strides = [1, 1]} : vector<8x128xf32> to vector<8x32xf32>
    %cst_126 = arith.constant 5.000000e-01 : f32
    %309 = vector.broadcast %cst_126 : f32 to vector<8x32xf32>
    %310 = arith.mulf %309, %308 : vector<8x32xf32>
    %cst_127 = arith.constant 5.000000e-01 : f32
    %311 = vector.broadcast %cst_127 : f32 to vector<8x32xf32>
    %312 = arith.addf %310, %311 : vector<8x32xf32>
    %313 = vector.extract_strided_slice %302 {offsets = [0, 64], sizes = [8, 32], strides = [1, 1]} : vector<8x128xf32> to vector<8x32xf32>
    %314 = vector.extract_strided_slice %302 {offsets = [0, 96], sizes = [8, 32], strides = [1, 1]} : vector<8x128xf32> to vector<8x32xf32>
    %cst_128 = arith.constant 5.000000e-01 : f32
    %315 = vector.broadcast %cst_128 : f32 to vector<8x32xf32>
    %316 = arith.mulf %315, %314 : vector<8x32xf32>
    %cst_129 = arith.constant 5.000000e-01 : f32
    %317 = vector.broadcast %cst_129 : f32 to vector<8x32xf32>
    %318 = arith.addf %316, %317 : vector<8x32xf32>
    %319 = arith.mulf %312, %291 : vector<8x32xf32>
    %320 = arith.mulf %307, %313 : vector<8x32xf32>
    %321 = arith.addf %319, %320 : vector<8x32xf32>
    %322 = math.tanh %321 : vector<8x32xf32>
    %323 = arith.mulf %318, %322 : vector<8x32xf32>
    %324 = arith.index_cast %297 : i32 to index
    %c0_130 = arith.constant 0 : index
    %325 = vector.load %arg8[%324, %c0_130] : memref<64x32xf32, #tpu.memory_space<vmem>>, vector<8x32xf32>
    tpu.vector_store %arg8[%324, %c0_130], %323 {strides = array<i32>} : memref<64x32xf32, #tpu.memory_space<vmem>>, vector<8x32xf32>,
    %c2_i32_131 = arith.constant 2 : i32
    %c8_i32_132 = arith.constant 8 : i32
    %326 = arith.muli %c2_i32_131, %c8_i32_132 : i32
    %327 = tpu.assume_multiple %326, 8 : i32
    %328 = arith.index_cast %327 : i32 to index
    %c0_133 = arith.constant 0 : index
    %329 = vector.load %arg9[%328, %c0_133] : memref<64x128xf32, #tpu.memory_space<vmem>>, vector<8x128xf32>
    %cst_134 = arith.constant dense<0.000000e+00> : vector<8x128xf32>
    %330 = tpu.matmul %323, %256, %cst_134 {dimension_numbers = #tpu.dot_dimension_numbers<[1], [0], [0], [1], [0, 0, 1, 1], [], []>} : vector<8x32xf32>, vector<32x128xf32>, vector<8x128xf32> -> vector<8x128xf32>
    %331 = arith.addf %329, %330 : vector<8x128xf32>
    %332 = math.tanh %331 : vector<8x128xf32>
    %333 = vector.extract_strided_slice %332 {offsets = [0, 0], sizes = [8, 32], strides = [1, 1]} : vector<8x128xf32> to vector<8x32xf32>
    %cst_135 = arith.constant 5.000000e-01 : f32
    %334 = vector.broadcast %cst_135 : f32 to vector<8x32xf32>
    %335 = arith.mulf %334, %333 : vector<8x32xf32>
    %cst_136 = arith.constant 5.000000e-01 : f32
    %336 = vector.broadcast %cst_136 : f32 to vector<8x32xf32>
    %337 = arith.addf %335, %336 : vector<8x32xf32>
    %338 = vector.extract_strided_slice %332 {offsets = [0, 32], sizes = [8, 32], strides = [1, 1]} : vector<8x128xf32> to vector<8x32xf32>
    %cst_137 = arith.constant 5.000000e-01 : f32
    %339 = vector.broadcast %cst_137 : f32 to vector<8x32xf32>
    %340 = arith.mulf %339, %338 : vector<8x32xf32>
    %cst_138 = arith.constant 5.000000e-01 : f32
    %341 = vector.broadcast %cst_138 : f32 to vector<8x32xf32>
    %342 = arith.addf %340, %341 : vector<8x32xf32>
    %343 = vector.extract_strided_slice %332 {offsets = [0, 64], sizes = [8, 32], strides = [1, 1]} : vector<8x128xf32> to vector<8x32xf32>
    %344 = vector.extract_strided_slice %332 {offsets = [0, 96], sizes = [8, 32], strides = [1, 1]} : vector<8x128xf32> to vector<8x32xf32>
    %cst_139 = arith.constant 5.000000e-01 : f32
    %345 = vector.broadcast %cst_139 : f32 to vector<8x32xf32>
    %346 = arith.mulf %345, %344 : vector<8x32xf32>
    %cst_140 = arith.constant 5.000000e-01 : f32
    %347 = vector.broadcast %cst_140 : f32 to vector<8x32xf32>
    %348 = arith.addf %346, %347 : vector<8x32xf32>
    %349 = arith.mulf %342, %321 : vector<8x32xf32>
    %350 = arith.mulf %337, %343 : vector<8x32xf32>
    %351 = arith.addf %349, %350 : vector<8x32xf32>
    %352 = math.tanh %351 : vector<8x32xf32>
    %353 = arith.mulf %348, %352 : vector<8x32xf32>
    %354 = arith.index_cast %327 : i32 to index
    %c0_141 = arith.constant 0 : index
    %355 = vector.load %arg8[%354, %c0_141] : memref<64x32xf32, #tpu.memory_space<vmem>>, vector<8x32xf32>
    tpu.vector_store %arg8[%354, %c0_141], %353 {strides = array<i32>} : memref<64x32xf32, #tpu.memory_space<vmem>>, vector<8x32xf32>,
    %c3_i32_142 = arith.constant 3 : i32
    %c8_i32_143 = arith.constant 8 : i32
    %356 = arith.muli %c3_i32_142, %c8_i32_143 : i32
    %357 = tpu.assume_multiple %356, 8 : i32
    %358 = arith.index_cast %357 : i32 to index
    %c0_144 = arith.constant 0 : index
    %359 = vector.load %arg9[%358, %c0_144] : memref<64x128xf32, #tpu.memory_space<vmem>>, vector<8x128xf32>
    %cst_145 = arith.constant dense<0.000000e+00> : vector<8x128xf32>
    %360 = tpu.matmul %353, %256, %cst_145 {dimension_numbers = #tpu.dot_dimension_numbers<[1], [0], [0], [1], [0, 0, 1, 1], [], []>} : vector<8x32xf32>, vector<32x128xf32>, vector<8x128xf32> -> vector<8x128xf32>
    %361 = arith.addf %359, %360 : vector<8x128xf32>
    %362 = math.tanh %361 : vector<8x128xf32>
    %363 = vector.extract_strided_slice %362 {offsets = [0, 0], sizes = [8, 32], strides = [1, 1]} : vector<8x128xf32> to vector<8x32xf32>
    %cst_146 = arith.constant 5.000000e-01 : f32
    %364 = vector.broadcast %cst_146 : f32 to vector<8x32xf32>
    %365 = arith.mulf %364, %363 : vector<8x32xf32>
    %cst_147 = arith.constant 5.000000e-01 : f32
    %366 = vector.broadcast %cst_147 : f32 to vector<8x32xf32>
    %367 = arith.addf %365, %366 : vector<8x32xf32>
    %368 = vector.extract_strided_slice %362 {offsets = [0, 32], sizes = [8, 32], strides = [1, 1]} : vector<8x128xf32> to vector<8x32xf32>
    %cst_148 = arith.constant 5.000000e-01 : f32
    %369 = vector.broadcast %cst_148 : f32 to vector<8x32xf32>
    %370 = arith.mulf %369, %368 : vector<8x32xf32>
    %cst_149 = arith.constant 5.000000e-01 : f32
    %371 = vector.broadcast %cst_149 : f32 to vector<8x32xf32>
    %372 = arith.addf %370, %371 : vector<8x32xf32>
    %373 = vector.extract_strided_slice %362 {offsets = [0, 64], sizes = [8, 32], strides = [1, 1]} : vector<8x128xf32> to vector<8x32xf32>
    %374 = vector.extract_strided_slice %362 {offsets = [0, 96], sizes = [8, 32], strides = [1, 1]} : vector<8x128xf32> to vector<8x32xf32>
    %cst_150 = arith.constant 5.000000e-01 : f32
    %375 = vector.broadcast %cst_150 : f32 to vector<8x32xf32>
    %376 = arith.mulf %375, %374 : vector<8x32xf32>
    %cst_151 = arith.constant 5.000000e-01 : f32
    %377 = vector.broadcast %cst_151 : f32 to vector<8x32xf32>
    %378 = arith.addf %376, %377 : vector<8x32xf32>
    %379 = arith.mulf %372, %351 : vector<8x32xf32>
    %380 = arith.mulf %367, %373 : vector<8x32xf32>
    %381 = arith.addf %379, %380 : vector<8x32xf32>
    %382 = math.tanh %381 : vector<8x32xf32>
    %383 = arith.mulf %378, %382 : vector<8x32xf32>
    %384 = arith.index_cast %357 : i32 to index
    %c0_152 = arith.constant 0 : index
    %385 = vector.load %arg8[%384, %c0_152] : memref<64x32xf32, #tpu.memory_space<vmem>>, vector<8x32xf32>
    tpu.vector_store %arg8[%384, %c0_152], %383 {strides = array<i32>} : memref<64x32xf32, #tpu.memory_space<vmem>>, vector<8x32xf32>,
    %c4_i32_153 = arith.constant 4 : i32
    %c8_i32_154 = arith.constant 8 : i32
    %386 = arith.muli %c4_i32_153, %c8_i32_154 : i32
    %387 = tpu.assume_multiple %386, 8 : i32
    %388 = arith.index_cast %387 : i32 to index
    %c0_155 = arith.constant 0 : index
    %389 = vector.load %arg9[%388, %c0_155] : memref<64x128xf32, #tpu.memory_space<vmem>>, vector<8x128xf32>
    %cst_156 = arith.constant dense<0.000000e+00> : vector<8x128xf32>
    %390 = tpu.matmul %383, %256, %cst_156 {dimension_numbers = #tpu.dot_dimension_numbers<[1], [0], [0], [1], [0, 0, 1, 1], [], []>} : vector<8x32xf32>, vector<32x128xf32>, vector<8x128xf32> -> vector<8x128xf32>
    %391 = arith.addf %389, %390 : vector<8x128xf32>
    %392 = math.tanh %391 : vector<8x128xf32>
    %393 = vector.extract_strided_slice %392 {offsets = [0, 0], sizes = [8, 32], strides = [1, 1]} : vector<8x128xf32> to vector<8x32xf32>
    %cst_157 = arith.constant 5.000000e-01 : f32
    %394 = vector.broadcast %cst_157 : f32 to vector<8x32xf32>
    %395 = arith.mulf %394, %393 : vector<8x32xf32>
    %cst_158 = arith.constant 5.000000e-01 : f32
    %396 = vector.broadcast %cst_158 : f32 to vector<8x32xf32>
    %397 = arith.addf %395, %396 : vector<8x32xf32>
    %398 = vector.extract_strided_slice %392 {offsets = [0, 32], sizes = [8, 32], strides = [1, 1]} : vector<8x128xf32> to vector<8x32xf32>
    %cst_159 = arith.constant 5.000000e-01 : f32
    %399 = vector.broadcast %cst_159 : f32 to vector<8x32xf32>
    %400 = arith.mulf %399, %398 : vector<8x32xf32>
    %cst_160 = arith.constant 5.000000e-01 : f32
    %401 = vector.broadcast %cst_160 : f32 to vector<8x32xf32>
    %402 = arith.addf %400, %401 : vector<8x32xf32>
    %403 = vector.extract_strided_slice %392 {offsets = [0, 64], sizes = [8, 32], strides = [1, 1]} : vector<8x128xf32> to vector<8x32xf32>
    %404 = vector.extract_strided_slice %392 {offsets = [0, 96], sizes = [8, 32], strides = [1, 1]} : vector<8x128xf32> to vector<8x32xf32>
    %cst_161 = arith.constant 5.000000e-01 : f32
    %405 = vector.broadcast %cst_161 : f32 to vector<8x32xf32>
    %406 = arith.mulf %405, %404 : vector<8x32xf32>
    %cst_162 = arith.constant 5.000000e-01 : f32
    %407 = vector.broadcast %cst_162 : f32 to vector<8x32xf32>
    %408 = arith.addf %406, %407 : vector<8x32xf32>
    %409 = arith.mulf %402, %381 : vector<8x32xf32>
    %410 = arith.mulf %397, %403 : vector<8x32xf32>
    %411 = arith.addf %409, %410 : vector<8x32xf32>
    %412 = math.tanh %411 : vector<8x32xf32>
    %413 = arith.mulf %408, %412 : vector<8x32xf32>
    %414 = arith.index_cast %387 : i32 to index
    %c0_163 = arith.constant 0 : index
    %415 = vector.load %arg8[%414, %c0_163] : memref<64x32xf32, #tpu.memory_space<vmem>>, vector<8x32xf32>
    tpu.vector_store %arg8[%414, %c0_163], %413 {strides = array<i32>} : memref<64x32xf32, #tpu.memory_space<vmem>>, vector<8x32xf32>,
    %c5_i32_164 = arith.constant 5 : i32
    %c8_i32_165 = arith.constant 8 : i32
    %416 = arith.muli %c5_i32_164, %c8_i32_165 : i32
    %417 = tpu.assume_multiple %416, 8 : i32
    %418 = arith.index_cast %417 : i32 to index
    %c0_166 = arith.constant 0 : index
    %419 = vector.load %arg9[%418, %c0_166] : memref<64x128xf32, #tpu.memory_space<vmem>>, vector<8x128xf32>
    %cst_167 = arith.constant dense<0.000000e+00> : vector<8x128xf32>
    %420 = tpu.matmul %413, %256, %cst_167 {dimension_numbers = #tpu.dot_dimension_numbers<[1], [0], [0], [1], [0, 0, 1, 1], [], []>} : vector<8x32xf32>, vector<32x128xf32>, vector<8x128xf32> -> vector<8x128xf32>
    %421 = arith.addf %419, %420 : vector<8x128xf32>
    %422 = math.tanh %421 : vector<8x128xf32>
    %423 = vector.extract_strided_slice %422 {offsets = [0, 0], sizes = [8, 32], strides = [1, 1]} : vector<8x128xf32> to vector<8x32xf32>
    %cst_168 = arith.constant 5.000000e-01 : f32
    %424 = vector.broadcast %cst_168 : f32 to vector<8x32xf32>
    %425 = arith.mulf %424, %423 : vector<8x32xf32>
    %cst_169 = arith.constant 5.000000e-01 : f32
    %426 = vector.broadcast %cst_169 : f32 to vector<8x32xf32>
    %427 = arith.addf %425, %426 : vector<8x32xf32>
    %428 = vector.extract_strided_slice %422 {offsets = [0, 32], sizes = [8, 32], strides = [1, 1]} : vector<8x128xf32> to vector<8x32xf32>
    %cst_170 = arith.constant 5.000000e-01 : f32
    %429 = vector.broadcast %cst_170 : f32 to vector<8x32xf32>
    %430 = arith.mulf %429, %428 : vector<8x32xf32>
    %cst_171 = arith.constant 5.000000e-01 : f32
    %431 = vector.broadcast %cst_171 : f32 to vector<8x32xf32>
    %432 = arith.addf %430, %431 : vector<8x32xf32>
    %433 = vector.extract_strided_slice %422 {offsets = [0, 64], sizes = [8, 32], strides = [1, 1]} : vector<8x128xf32> to vector<8x32xf32>
    %434 = vector.extract_strided_slice %422 {offsets = [0, 96], sizes = [8, 32], strides = [1, 1]} : vector<8x128xf32> to vector<8x32xf32>
    %cst_172 = arith.constant 5.000000e-01 : f32
    %435 = vector.broadcast %cst_172 : f32 to vector<8x32xf32>
    %436 = arith.mulf %435, %434 : vector<8x32xf32>
    %cst_173 = arith.constant 5.000000e-01 : f32
    %437 = vector.broadcast %cst_173 : f32 to vector<8x32xf32>
    %438 = arith.addf %436, %437 : vector<8x32xf32>
    %439 = arith.mulf %432, %411 : vector<8x32xf32>
    %440 = arith.mulf %427, %433 : vector<8x32xf32>
    %441 = arith.addf %439, %440 : vector<8x32xf32>
    %442 = math.tanh %441 : vector<8x32xf32>
    %443 = arith.mulf %438, %442 : vector<8x32xf32>
    %444 = arith.index_cast %417 : i32 to index
    %c0_174 = arith.constant 0 : index
    %445 = vector.load %arg8[%444, %c0_174] : memref<64x32xf32, #tpu.memory_space<vmem>>, vector<8x32xf32>
    tpu.vector_store %arg8[%444, %c0_174], %443 {strides = array<i32>} : memref<64x32xf32, #tpu.memory_space<vmem>>, vector<8x32xf32>,
    %c6_i32_175 = arith.constant 6 : i32
    %c8_i32_176 = arith.constant 8 : i32
    %446 = arith.muli %c6_i32_175, %c8_i32_176 : i32
    %447 = tpu.assume_multiple %446, 8 : i32
    %448 = arith.index_cast %447 : i32 to index
    %c0_177 = arith.constant 0 : index
    %449 = vector.load %arg9[%448, %c0_177] : memref<64x128xf32, #tpu.memory_space<vmem>>, vector<8x128xf32>
    %cst_178 = arith.constant dense<0.000000e+00> : vector<8x128xf32>
    %450 = tpu.matmul %443, %256, %cst_178 {dimension_numbers = #tpu.dot_dimension_numbers<[1], [0], [0], [1], [0, 0, 1, 1], [], []>} : vector<8x32xf32>, vector<32x128xf32>, vector<8x128xf32> -> vector<8x128xf32>
    %451 = arith.addf %449, %450 : vector<8x128xf32>
    %452 = math.tanh %451 : vector<8x128xf32>
    %453 = vector.extract_strided_slice %452 {offsets = [0, 0], sizes = [8, 32], strides = [1, 1]} : vector<8x128xf32> to vector<8x32xf32>
    %cst_179 = arith.constant 5.000000e-01 : f32
    %454 = vector.broadcast %cst_179 : f32 to vector<8x32xf32>
    %455 = arith.mulf %454, %453 : vector<8x32xf32>
    %cst_180 = arith.constant 5.000000e-01 : f32
    %456 = vector.broadcast %cst_180 : f32 to vector<8x32xf32>
    %457 = arith.addf %455, %456 : vector<8x32xf32>
    %458 = vector.extract_strided_slice %452 {offsets = [0, 32], sizes = [8, 32], strides = [1, 1]} : vector<8x128xf32> to vector<8x32xf32>
    %cst_181 = arith.constant 5.000000e-01 : f32
    %459 = vector.broadcast %cst_181 : f32 to vector<8x32xf32>
    %460 = arith.mulf %459, %458 : vector<8x32xf32>
    %cst_182 = arith.constant 5.000000e-01 : f32
    %461 = vector.broadcast %cst_182 : f32 to vector<8x32xf32>
    %462 = arith.addf %460, %461 : vector<8x32xf32>
    %463 = vector.extract_strided_slice %452 {offsets = [0, 64], sizes = [8, 32], strides = [1, 1]} : vector<8x128xf32> to vector<8x32xf32>
    %464 = vector.extract_strided_slice %452 {offsets = [0, 96], sizes = [8, 32], strides = [1, 1]} : vector<8x128xf32> to vector<8x32xf32>
    %cst_183 = arith.constant 5.000000e-01 : f32
    %465 = vector.broadcast %cst_183 : f32 to vector<8x32xf32>
    %466 = arith.mulf %465, %464 : vector<8x32xf32>
    %cst_184 = arith.constant 5.000000e-01 : f32
    %467 = vector.broadcast %cst_184 : f32 to vector<8x32xf32>
    %468 = arith.addf %466, %467 : vector<8x32xf32>
    %469 = arith.mulf %462, %441 : vector<8x32xf32>
    %470 = arith.mulf %457, %463 : vector<8x32xf32>
    %471 = arith.addf %469, %470 : vector<8x32xf32>
    %472 = math.tanh %471 : vector<8x32xf32>
    %473 = arith.mulf %468, %472 : vector<8x32xf32>
    %474 = arith.index_cast %447 : i32 to index
    %c0_185 = arith.constant 0 : index
    %475 = vector.load %arg8[%474, %c0_185] : memref<64x32xf32, #tpu.memory_space<vmem>>, vector<8x32xf32>
    tpu.vector_store %arg8[%474, %c0_185], %473 {strides = array<i32>} : memref<64x32xf32, #tpu.memory_space<vmem>>, vector<8x32xf32>,
    %c7_i32_186 = arith.constant 7 : i32
    %c8_i32_187 = arith.constant 8 : i32
    %476 = arith.muli %c7_i32_186, %c8_i32_187 : i32
    %477 = tpu.assume_multiple %476, 8 : i32
    %478 = arith.index_cast %477 : i32 to index
    %c0_188 = arith.constant 0 : index
    %479 = vector.load %arg9[%478, %c0_188] : memref<64x128xf32, #tpu.memory_space<vmem>>, vector<8x128xf32>
    %cst_189 = arith.constant dense<0.000000e+00> : vector<8x128xf32>
    %480 = tpu.matmul %473, %256, %cst_189 {dimension_numbers = #tpu.dot_dimension_numbers<[1], [0], [0], [1], [0, 0, 1, 1], [], []>} : vector<8x32xf32>, vector<32x128xf32>, vector<8x128xf32> -> vector<8x128xf32>
    %481 = arith.addf %479, %480 : vector<8x128xf32>
    %482 = math.tanh %481 : vector<8x128xf32>
    %483 = vector.extract_strided_slice %482 {offsets = [0, 0], sizes = [8, 32], strides = [1, 1]} : vector<8x128xf32> to vector<8x32xf32>
    %cst_190 = arith.constant 5.000000e-01 : f32
    %484 = vector.broadcast %cst_190 : f32 to vector<8x32xf32>
    %485 = arith.mulf %484, %483 : vector<8x32xf32>
    %cst_191 = arith.constant 5.000000e-01 : f32
    %486 = vector.broadcast %cst_191 : f32 to vector<8x32xf32>
    %487 = arith.addf %485, %486 : vector<8x32xf32>
    %488 = vector.extract_strided_slice %482 {offsets = [0, 32], sizes = [8, 32], strides = [1, 1]} : vector<8x128xf32> to vector<8x32xf32>
    %cst_192 = arith.constant 5.000000e-01 : f32
    %489 = vector.broadcast %cst_192 : f32 to vector<8x32xf32>
    %490 = arith.mulf %489, %488 : vector<8x32xf32>
    %cst_193 = arith.constant 5.000000e-01 : f32
    %491 = vector.broadcast %cst_193 : f32 to vector<8x32xf32>
    %492 = arith.addf %490, %491 : vector<8x32xf32>
    %493 = vector.extract_strided_slice %482 {offsets = [0, 64], sizes = [8, 32], strides = [1, 1]} : vector<8x128xf32> to vector<8x32xf32>
    %494 = vector.extract_strided_slice %482 {offsets = [0, 96], sizes = [8, 32], strides = [1, 1]} : vector<8x128xf32> to vector<8x32xf32>
    %cst_194 = arith.constant 5.000000e-01 : f32
    %495 = vector.broadcast %cst_194 : f32 to vector<8x32xf32>
    %496 = arith.mulf %495, %494 : vector<8x32xf32>
    %cst_195 = arith.constant 5.000000e-01 : f32
    %497 = vector.broadcast %cst_195 : f32 to vector<8x32xf32>
    %498 = arith.addf %496, %497 : vector<8x32xf32>
    %499 = arith.mulf %492, %471 : vector<8x32xf32>
    %500 = arith.mulf %487, %493 : vector<8x32xf32>
    %501 = arith.addf %499, %500 : vector<8x32xf32>
    %502 = math.tanh %501 : vector<8x32xf32>
    %503 = arith.mulf %498, %502 : vector<8x32xf32>
    %504 = arith.index_cast %477 : i32 to index
    %c0_196 = arith.constant 0 : index
    %505 = vector.load %arg8[%504, %c0_196] : memref<64x32xf32, #tpu.memory_space<vmem>>, vector<8x32xf32>
    tpu.vector_store %arg8[%504, %c0_196], %503 {strides = array<i32>} : memref<64x32xf32, #tpu.memory_space<vmem>>, vector<8x32xf32>,
    %c8_i32_197 = arith.constant 8 : i32
    %c1_198 = arith.constant 1 : index
    %c0_199 = arith.constant 0 : index
    %c0_200 = arith.constant 0 : index
    %506 = vector.load %arg2[%c1_198, %c0_199, %c0_200] : memref<3x32x128xf32, #tpu.memory_space<vmem>>, vector<1x32x128xf32>
    %507 = vector.shape_cast %506 : vector<1x32x128xf32> to vector<32x128xf32>
    %c2 = arith.constant 2 : index
    %c0_201 = arith.constant 0 : index
    %c0_202 = arith.constant 0 : index
    %508 = vector.load %arg3[%c2, %c0_201, %c0_202] : memref<4x32x128xf32, #tpu.memory_space<vmem>>, vector<1x32x128xf32>
    %509 = vector.shape_cast %508 : vector<1x32x128xf32> to vector<32x128xf32>
    %c2_203 = arith.constant 2 : index
    %c0_204 = arith.constant 0 : index
    %c0_205 = arith.constant 0 : index
    %510 = vector.load %arg4[%c2_203, %c0_204, %c0_205] : memref<4x1x128xf32, #tpu.memory_space<vmem>>, vector<1x1x128xf32>
    %511 = vector.shape_cast %510 : vector<1x1x128xf32> to vector<1x128xf32>
    %c0_206 = arith.constant 0 : index
    %c0_207 = arith.constant 0 : index
    %512 = vector.load %arg8[%c0_206, %c0_207] : memref<64x32xf32, #tpu.memory_space<vmem>>, vector<64x32xf32>
    %cst_208 = arith.constant dense<0.000000e+00> : vector<64x128xf32>
    %513 = tpu.matmul %512, %507, %cst_208 {dimension_numbers = #tpu.dot_dimension_numbers<[1], [0], [0], [1], [0, 0, 1, 1], [], []>} : vector<64x32xf32>, vector<32x128xf32>, vector<64x128xf32> -> vector<64x128xf32>
    %514 = vector.broadcast %511 : vector<1x128xf32> to vector<64x128xf32>
    %515 = arith.addf %513, %514 : vector<64x128xf32>
    %c0_209 = arith.constant 0 : index
    %c0_210 = arith.constant 0 : index
    %516 = vector.load %arg9[%c0_209, %c0_210] : memref<64x128xf32, #tpu.memory_space<vmem>>, vector<64x128xf32>
    tpu.vector_store %arg9[%c0_209, %c0_210], %515 {strides = array<i32>} : memref<64x128xf32, #tpu.memory_space<vmem>>, vector<64x128xf32>,
    %cst_211 = arith.constant 0.000000e+00 : f32
    %517 = vector.broadcast %cst_211 : f32 to vector<8x32xf32>
    %cst_212 = arith.constant 0.000000e+00 : f32
    %518 = vector.broadcast %cst_212 : f32 to vector<8x32xf32>
    %c0_i32_213 = arith.constant 0 : i32
    %c8_i32_214 = arith.constant 8 : i32
    %519 = arith.muli %c0_i32_213, %c8_i32_214 : i32
    %520 = tpu.assume_multiple %519, 8 : i32
    %521 = arith.index_cast %520 : i32 to index
    %c0_215 = arith.constant 0 : index
    %522 = vector.load %arg9[%521, %c0_215] : memref<64x128xf32, #tpu.memory_space<vmem>>, vector<8x128xf32>
    %cst_216 = arith.constant dense<0.000000e+00> : vector<8x128xf32>
    %523 = tpu.matmul %517, %509, %cst_216 {dimension_numbers = #tpu.dot_dimension_numbers<[1], [0], [0], [1], [0, 0, 1, 1], [], []>} : vector<8x32xf32>, vector<32x128xf32>, vector<8x128xf32> -> vector<8x128xf32>
    %524 = arith.addf %522, %523 : vector<8x128xf32>
    %525 = math.tanh %524 : vector<8x128xf32>
    %526 = vector.extract_strided_slice %525 {offsets = [0, 0], sizes = [8, 32], strides = [1, 1]} : vector<8x128xf32> to vector<8x32xf32>
    %cst_217 = arith.constant 5.000000e-01 : f32
    %527 = vector.broadcast %cst_217 : f32 to vector<8x32xf32>
    %528 = arith.mulf %527, %526 : vector<8x32xf32>
    %cst_218 = arith.constant 5.000000e-01 : f32
    %529 = vector.broadcast %cst_218 : f32 to vector<8x32xf32>
    %530 = arith.addf %528, %529 : vector<8x32xf32>
    %531 = vector.extract_strided_slice %525 {offsets = [0, 32], sizes = [8, 32], strides = [1, 1]} : vector<8x128xf32> to vector<8x32xf32>
    %cst_219 = arith.constant 5.000000e-01 : f32
    %532 = vector.broadcast %cst_219 : f32 to vector<8x32xf32>
    %533 = arith.mulf %532, %531 : vector<8x32xf32>
    %cst_220 = arith.constant 5.000000e-01 : f32
    %534 = vector.broadcast %cst_220 : f32 to vector<8x32xf32>
    %535 = arith.addf %533, %534 : vector<8x32xf32>
    %536 = vector.extract_strided_slice %525 {offsets = [0, 64], sizes = [8, 32], strides = [1, 1]} : vector<8x128xf32> to vector<8x32xf32>
    %537 = vector.extract_strided_slice %525 {offsets = [0, 96], sizes = [8, 32], strides = [1, 1]} : vector<8x128xf32> to vector<8x32xf32>
    %cst_221 = arith.constant 5.000000e-01 : f32
    %538 = vector.broadcast %cst_221 : f32 to vector<8x32xf32>
    %539 = arith.mulf %538, %537 : vector<8x32xf32>
    %cst_222 = arith.constant 5.000000e-01 : f32
    %540 = vector.broadcast %cst_222 : f32 to vector<8x32xf32>
    %541 = arith.addf %539, %540 : vector<8x32xf32>
    %542 = arith.mulf %535, %518 : vector<8x32xf32>
    %543 = arith.mulf %530, %536 : vector<8x32xf32>
    %544 = arith.addf %542, %543 : vector<8x32xf32>
    %545 = math.tanh %544 : vector<8x32xf32>
    %546 = arith.mulf %541, %545 : vector<8x32xf32>
    %547 = arith.index_cast %520 : i32 to index
    %c0_223 = arith.constant 0 : index
    %548 = vector.load %arg8[%547, %c0_223] : memref<64x32xf32, #tpu.memory_space<vmem>>, vector<8x32xf32>
    tpu.vector_store %arg8[%547, %c0_223], %546 {strides = array<i32>} : memref<64x32xf32, #tpu.memory_space<vmem>>, vector<8x32xf32>,
    %c1_i32_224 = arith.constant 1 : i32
    %c8_i32_225 = arith.constant 8 : i32
    %549 = arith.muli %c1_i32_224, %c8_i32_225 : i32
    %550 = tpu.assume_multiple %549, 8 : i32
    %551 = arith.index_cast %550 : i32 to index
    %c0_226 = arith.constant 0 : index
    %552 = vector.load %arg9[%551, %c0_226] : memref<64x128xf32, #tpu.memory_space<vmem>>, vector<8x128xf32>
    %cst_227 = arith.constant dense<0.000000e+00> : vector<8x128xf32>
    %553 = tpu.matmul %546, %509, %cst_227 {dimension_numbers = #tpu.dot_dimension_numbers<[1], [0], [0], [1], [0, 0, 1, 1], [], []>} : vector<8x32xf32>, vector<32x128xf32>, vector<8x128xf32> -> vector<8x128xf32>
    %554 = arith.addf %552, %553 : vector<8x128xf32>
    %555 = math.tanh %554 : vector<8x128xf32>
    %556 = vector.extract_strided_slice %555 {offsets = [0, 0], sizes = [8, 32], strides = [1, 1]} : vector<8x128xf32> to vector<8x32xf32>
    %cst_228 = arith.constant 5.000000e-01 : f32
    %557 = vector.broadcast %cst_228 : f32 to vector<8x32xf32>
    %558 = arith.mulf %557, %556 : vector<8x32xf32>
    %cst_229 = arith.constant 5.000000e-01 : f32
    %559 = vector.broadcast %cst_229 : f32 to vector<8x32xf32>
    %560 = arith.addf %558, %559 : vector<8x32xf32>
    %561 = vector.extract_strided_slice %555 {offsets = [0, 32], sizes = [8, 32], strides = [1, 1]} : vector<8x128xf32> to vector<8x32xf32>
    %cst_230 = arith.constant 5.000000e-01 : f32
    %562 = vector.broadcast %cst_230 : f32 to vector<8x32xf32>
    %563 = arith.mulf %562, %561 : vector<8x32xf32>
    %cst_231 = arith.constant 5.000000e-01 : f32
    %564 = vector.broadcast %cst_231 : f32 to vector<8x32xf32>
    %565 = arith.addf %563, %564 : vector<8x32xf32>
    %566 = vector.extract_strided_slice %555 {offsets = [0, 64], sizes = [8, 32], strides = [1, 1]} : vector<8x128xf32> to vector<8x32xf32>
    %567 = vector.extract_strided_slice %555 {offsets = [0, 96], sizes = [8, 32], strides = [1, 1]} : vector<8x128xf32> to vector<8x32xf32>
    %cst_232 = arith.constant 5.000000e-01 : f32
    %568 = vector.broadcast %cst_232 : f32 to vector<8x32xf32>
    %569 = arith.mulf %568, %567 : vector<8x32xf32>
    %cst_233 = arith.constant 5.000000e-01 : f32
    %570 = vector.broadcast %cst_233 : f32 to vector<8x32xf32>
    %571 = arith.addf %569, %570 : vector<8x32xf32>
    %572 = arith.mulf %565, %544 : vector<8x32xf32>
    %573 = arith.mulf %560, %566 : vector<8x32xf32>
    %574 = arith.addf %572, %573 : vector<8x32xf32>
    %575 = math.tanh %574 : vector<8x32xf32>
    %576 = arith.mulf %571, %575 : vector<8x32xf32>
    %577 = arith.index_cast %550 : i32 to index
    %c0_234 = arith.constant 0 : index
    %578 = vector.load %arg8[%577, %c0_234] : memref<64x32xf32, #tpu.memory_space<vmem>>, vector<8x32xf32>
    tpu.vector_store %arg8[%577, %c0_234], %576 {strides = array<i32>} : memref<64x32xf32, #tpu.memory_space<vmem>>, vector<8x32xf32>,
    %c2_i32_235 = arith.constant 2 : i32
    %c8_i32_236 = arith.constant 8 : i32
    %579 = arith.muli %c2_i32_235, %c8_i32_236 : i32
    %580 = tpu.assume_multiple %579, 8 : i32
    %581 = arith.index_cast %580 : i32 to index
    %c0_237 = arith.constant 0 : index
    %582 = vector.load %arg9[%581, %c0_237] : memref<64x128xf32, #tpu.memory_space<vmem>>, vector<8x128xf32>
    %cst_238 = arith.constant dense<0.000000e+00> : vector<8x128xf32>
    %583 = tpu.matmul %576, %509, %cst_238 {dimension_numbers = #tpu.dot_dimension_numbers<[1], [0], [0], [1], [0, 0, 1, 1], [], []>} : vector<8x32xf32>, vector<32x128xf32>, vector<8x128xf32> -> vector<8x128xf32>
    %584 = arith.addf %582, %583 : vector<8x128xf32>
    %585 = math.tanh %584 : vector<8x128xf32>
    %586 = vector.extract_strided_slice %585 {offsets = [0, 0], sizes = [8, 32], strides = [1, 1]} : vector<8x128xf32> to vector<8x32xf32>
    %cst_239 = arith.constant 5.000000e-01 : f32
    %587 = vector.broadcast %cst_239 : f32 to vector<8x32xf32>
    %588 = arith.mulf %587, %586 : vector<8x32xf32>
    %cst_240 = arith.constant 5.000000e-01 : f32
    %589 = vector.broadcast %cst_240 : f32 to vector<8x32xf32>
    %590 = arith.addf %588, %589 : vector<8x32xf32>
    %591 = vector.extract_strided_slice %585 {offsets = [0, 32], sizes = [8, 32], strides = [1, 1]} : vector<8x128xf32> to vector<8x32xf32>
    %cst_241 = arith.constant 5.000000e-01 : f32
    %592 = vector.broadcast %cst_241 : f32 to vector<8x32xf32>
    %593 = arith.mulf %592, %591 : vector<8x32xf32>
    %cst_242 = arith.constant 5.000000e-01 : f32
    %594 = vector.broadcast %cst_242 : f32 to vector<8x32xf32>
    %595 = arith.addf %593, %594 : vector<8x32xf32>
    %596 = vector.extract_strided_slice %585 {offsets = [0, 64], sizes = [8, 32], strides = [1, 1]} : vector<8x128xf32> to vector<8x32xf32>
    %597 = vector.extract_strided_slice %585 {offsets = [0, 96], sizes = [8, 32], strides = [1, 1]} : vector<8x128xf32> to vector<8x32xf32>
    %cst_243 = arith.constant 5.000000e-01 : f32
    %598 = vector.broadcast %cst_243 : f32 to vector<8x32xf32>
    %599 = arith.mulf %598, %597 : vector<8x32xf32>
    %cst_244 = arith.constant 5.000000e-01 : f32
    %600 = vector.broadcast %cst_244 : f32 to vector<8x32xf32>
    %601 = arith.addf %599, %600 : vector<8x32xf32>
    %602 = arith.mulf %595, %574 : vector<8x32xf32>
    %603 = arith.mulf %590, %596 : vector<8x32xf32>
    %604 = arith.addf %602, %603 : vector<8x32xf32>
    %605 = math.tanh %604 : vector<8x32xf32>
    %606 = arith.mulf %601, %605 : vector<8x32xf32>
    %607 = arith.index_cast %580 : i32 to index
    %c0_245 = arith.constant 0 : index
    %608 = vector.load %arg8[%607, %c0_245] : memref<64x32xf32, #tpu.memory_space<vmem>>, vector<8x32xf32>
    tpu.vector_store %arg8[%607, %c0_245], %606 {strides = array<i32>} : memref<64x32xf32, #tpu.memory_space<vmem>>, vector<8x32xf32>,
    %c3_i32_246 = arith.constant 3 : i32
    %c8_i32_247 = arith.constant 8 : i32
    %609 = arith.muli %c3_i32_246, %c8_i32_247 : i32
    %610 = tpu.assume_multiple %609, 8 : i32
    %611 = arith.index_cast %610 : i32 to index
    %c0_248 = arith.constant 0 : index
    %612 = vector.load %arg9[%611, %c0_248] : memref<64x128xf32, #tpu.memory_space<vmem>>, vector<8x128xf32>
    %cst_249 = arith.constant dense<0.000000e+00> : vector<8x128xf32>
    %613 = tpu.matmul %606, %509, %cst_249 {dimension_numbers = #tpu.dot_dimension_numbers<[1], [0], [0], [1], [0, 0, 1, 1], [], []>} : vector<8x32xf32>, vector<32x128xf32>, vector<8x128xf32> -> vector<8x128xf32>
    %614 = arith.addf %612, %613 : vector<8x128xf32>
    %615 = math.tanh %614 : vector<8x128xf32>
    %616 = vector.extract_strided_slice %615 {offsets = [0, 0], sizes = [8, 32], strides = [1, 1]} : vector<8x128xf32> to vector<8x32xf32>
    %cst_250 = arith.constant 5.000000e-01 : f32
    %617 = vector.broadcast %cst_250 : f32 to vector<8x32xf32>
    %618 = arith.mulf %617, %616 : vector<8x32xf32>
    %cst_251 = arith.constant 5.000000e-01 : f32
    %619 = vector.broadcast %cst_251 : f32 to vector<8x32xf32>
    %620 = arith.addf %618, %619 : vector<8x32xf32>
    %621 = vector.extract_strided_slice %615 {offsets = [0, 32], sizes = [8, 32], strides = [1, 1]} : vector<8x128xf32> to vector<8x32xf32>
    %cst_252 = arith.constant 5.000000e-01 : f32
    %622 = vector.broadcast %cst_252 : f32 to vector<8x32xf32>
    %623 = arith.mulf %622, %621 : vector<8x32xf32>
    %cst_253 = arith.constant 5.000000e-01 : f32
    %624 = vector.broadcast %cst_253 : f32 to vector<8x32xf32>
    %625 = arith.addf %623, %624 : vector<8x32xf32>
    %626 = vector.extract_strided_slice %615 {offsets = [0, 64], sizes = [8, 32], strides = [1, 1]} : vector<8x128xf32> to vector<8x32xf32>
    %627 = vector.extract_strided_slice %615 {offsets = [0, 96], sizes = [8, 32], strides = [1, 1]} : vector<8x128xf32> to vector<8x32xf32>
    %cst_254 = arith.constant 5.000000e-01 : f32
    %628 = vector.broadcast %cst_254 : f32 to vector<8x32xf32>
    %629 = arith.mulf %628, %627 : vector<8x32xf32>
    %cst_255 = arith.constant 5.000000e-01 : f32
    %630 = vector.broadcast %cst_255 : f32 to vector<8x32xf32>
    %631 = arith.addf %629, %630 : vector<8x32xf32>
    %632 = arith.mulf %625, %604 : vector<8x32xf32>
    %633 = arith.mulf %620, %626 : vector<8x32xf32>
    %634 = arith.addf %632, %633 : vector<8x32xf32>
    %635 = math.tanh %634 : vector<8x32xf32>
    %636 = arith.mulf %631, %635 : vector<8x32xf32>
    %637 = arith.index_cast %610 : i32 to index
    %c0_256 = arith.constant 0 : index
    %638 = vector.load %arg8[%637, %c0_256] : memref<64x32xf32, #tpu.memory_space<vmem>>, vector<8x32xf32>
    tpu.vector_store %arg8[%637, %c0_256], %636 {strides = array<i32>} : memref<64x32xf32, #tpu.memory_space<vmem>>, vector<8x32xf32>,
    %c4_i32_257 = arith.constant 4 : i32
    %c8_i32_258 = arith.constant 8 : i32
    %639 = arith.muli %c4_i32_257, %c8_i32_258 : i32
    %640 = tpu.assume_multiple %639, 8 : i32
    %641 = arith.index_cast %640 : i32 to index
    %c0_259 = arith.constant 0 : index
    %642 = vector.load %arg9[%641, %c0_259] : memref<64x128xf32, #tpu.memory_space<vmem>>, vector<8x128xf32>
    %cst_260 = arith.constant dense<0.000000e+00> : vector<8x128xf32>
    %643 = tpu.matmul %636, %509, %cst_260 {dimension_numbers = #tpu.dot_dimension_numbers<[1], [0], [0], [1], [0, 0, 1, 1], [], []>} : vector<8x32xf32>, vector<32x128xf32>, vector<8x128xf32> -> vector<8x128xf32>
    %644 = arith.addf %642, %643 : vector<8x128xf32>
    %645 = math.tanh %644 : vector<8x128xf32>
    %646 = vector.extract_strided_slice %645 {offsets = [0, 0], sizes = [8, 32], strides = [1, 1]} : vector<8x128xf32> to vector<8x32xf32>
    %cst_261 = arith.constant 5.000000e-01 : f32
    %647 = vector.broadcast %cst_261 : f32 to vector<8x32xf32>
    %648 = arith.mulf %647, %646 : vector<8x32xf32>
    %cst_262 = arith.constant 5.000000e-01 : f32
    %649 = vector.broadcast %cst_262 : f32 to vector<8x32xf32>
    %650 = arith.addf %648, %649 : vector<8x32xf32>
    %651 = vector.extract_strided_slice %645 {offsets = [0, 32], sizes = [8, 32], strides = [1, 1]} : vector<8x128xf32> to vector<8x32xf32>
    %cst_263 = arith.constant 5.000000e-01 : f32
    %652 = vector.broadcast %cst_263 : f32 to vector<8x32xf32>
    %653 = arith.mulf %652, %651 : vector<8x32xf32>
    %cst_264 = arith.constant 5.000000e-01 : f32
    %654 = vector.broadcast %cst_264 : f32 to vector<8x32xf32>
    %655 = arith.addf %653, %654 : vector<8x32xf32>
    %656 = vector.extract_strided_slice %645 {offsets = [0, 64], sizes = [8, 32], strides = [1, 1]} : vector<8x128xf32> to vector<8x32xf32>
    %657 = vector.extract_strided_slice %645 {offsets = [0, 96], sizes = [8, 32], strides = [1, 1]} : vector<8x128xf32> to vector<8x32xf32>
    %cst_265 = arith.constant 5.000000e-01 : f32
    %658 = vector.broadcast %cst_265 : f32 to vector<8x32xf32>
    %659 = arith.mulf %658, %657 : vector<8x32xf32>
    %cst_266 = arith.constant 5.000000e-01 : f32
    %660 = vector.broadcast %cst_266 : f32 to vector<8x32xf32>
    %661 = arith.addf %659, %660 : vector<8x32xf32>
    %662 = arith.mulf %655, %634 : vector<8x32xf32>
    %663 = arith.mulf %650, %656 : vector<8x32xf32>
    %664 = arith.addf %662, %663 : vector<8x32xf32>
    %665 = math.tanh %664 : vector<8x32xf32>
    %666 = arith.mulf %661, %665 : vector<8x32xf32>
    %667 = arith.index_cast %640 : i32 to index
    %c0_267 = arith.constant 0 : index
    %668 = vector.load %arg8[%667, %c0_267] : memref<64x32xf32, #tpu.memory_space<vmem>>, vector<8x32xf32>
    tpu.vector_store %arg8[%667, %c0_267], %666 {strides = array<i32>} : memref<64x32xf32, #tpu.memory_space<vmem>>, vector<8x32xf32>,
    %c5_i32_268 = arith.constant 5 : i32
    %c8_i32_269 = arith.constant 8 : i32
    %669 = arith.muli %c5_i32_268, %c8_i32_269 : i32
    %670 = tpu.assume_multiple %669, 8 : i32
    %671 = arith.index_cast %670 : i32 to index
    %c0_270 = arith.constant 0 : index
    %672 = vector.load %arg9[%671, %c0_270] : memref<64x128xf32, #tpu.memory_space<vmem>>, vector<8x128xf32>
    %cst_271 = arith.constant dense<0.000000e+00> : vector<8x128xf32>
    %673 = tpu.matmul %666, %509, %cst_271 {dimension_numbers = #tpu.dot_dimension_numbers<[1], [0], [0], [1], [0, 0, 1, 1], [], []>} : vector<8x32xf32>, vector<32x128xf32>, vector<8x128xf32> -> vector<8x128xf32>
    %674 = arith.addf %672, %673 : vector<8x128xf32>
    %675 = math.tanh %674 : vector<8x128xf32>
    %676 = vector.extract_strided_slice %675 {offsets = [0, 0], sizes = [8, 32], strides = [1, 1]} : vector<8x128xf32> to vector<8x32xf32>
    %cst_272 = arith.constant 5.000000e-01 : f32
    %677 = vector.broadcast %cst_272 : f32 to vector<8x32xf32>
    %678 = arith.mulf %677, %676 : vector<8x32xf32>
    %cst_273 = arith.constant 5.000000e-01 : f32
    %679 = vector.broadcast %cst_273 : f32 to vector<8x32xf32>
    %680 = arith.addf %678, %679 : vector<8x32xf32>
    %681 = vector.extract_strided_slice %675 {offsets = [0, 32], sizes = [8, 32], strides = [1, 1]} : vector<8x128xf32> to vector<8x32xf32>
    %cst_274 = arith.constant 5.000000e-01 : f32
    %682 = vector.broadcast %cst_274 : f32 to vector<8x32xf32>
    %683 = arith.mulf %682, %681 : vector<8x32xf32>
    %cst_275 = arith.constant 5.000000e-01 : f32
    %684 = vector.broadcast %cst_275 : f32 to vector<8x32xf32>
    %685 = arith.addf %683, %684 : vector<8x32xf32>
    %686 = vector.extract_strided_slice %675 {offsets = [0, 64], sizes = [8, 32], strides = [1, 1]} : vector<8x128xf32> to vector<8x32xf32>
    %687 = vector.extract_strided_slice %675 {offsets = [0, 96], sizes = [8, 32], strides = [1, 1]} : vector<8x128xf32> to vector<8x32xf32>
    %cst_276 = arith.constant 5.000000e-01 : f32
    %688 = vector.broadcast %cst_276 : f32 to vector<8x32xf32>
    %689 = arith.mulf %688, %687 : vector<8x32xf32>
    %cst_277 = arith.constant 5.000000e-01 : f32
    %690 = vector.broadcast %cst_277 : f32 to vector<8x32xf32>
    %691 = arith.addf %689, %690 : vector<8x32xf32>
    %692 = arith.mulf %685, %664 : vector<8x32xf32>
    %693 = arith.mulf %680, %686 : vector<8x32xf32>
    %694 = arith.addf %692, %693 : vector<8x32xf32>
    %695 = math.tanh %694 : vector<8x32xf32>
    %696 = arith.mulf %691, %695 : vector<8x32xf32>
    %697 = arith.index_cast %670 : i32 to index
    %c0_278 = arith.constant 0 : index
    %698 = vector.load %arg8[%697, %c0_278] : memref<64x32xf32, #tpu.memory_space<vmem>>, vector<8x32xf32>
    tpu.vector_store %arg8[%697, %c0_278], %696 {strides = array<i32>} : memref<64x32xf32, #tpu.memory_space<vmem>>, vector<8x32xf32>,
    %c6_i32_279 = arith.constant 6 : i32
    %c8_i32_280 = arith.constant 8 : i32
    %699 = arith.muli %c6_i32_279, %c8_i32_280 : i32
    %700 = tpu.assume_multiple %699, 8 : i32
    %701 = arith.index_cast %700 : i32 to index
    %c0_281 = arith.constant 0 : index
    %702 = vector.load %arg9[%701, %c0_281] : memref<64x128xf32, #tpu.memory_space<vmem>>, vector<8x128xf32>
    %cst_282 = arith.constant dense<0.000000e+00> : vector<8x128xf32>
    %703 = tpu.matmul %696, %509, %cst_282 {dimension_numbers = #tpu.dot_dimension_numbers<[1], [0], [0], [1], [0, 0, 1, 1], [], []>} : vector<8x32xf32>, vector<32x128xf32>, vector<8x128xf32> -> vector<8x128xf32>
    %704 = arith.addf %702, %703 : vector<8x128xf32>
    %705 = math.tanh %704 : vector<8x128xf32>
    %706 = vector.extract_strided_slice %705 {offsets = [0, 0], sizes = [8, 32], strides = [1, 1]} : vector<8x128xf32> to vector<8x32xf32>
    %cst_283 = arith.constant 5.000000e-01 : f32
    %707 = vector.broadcast %cst_283 : f32 to vector<8x32xf32>
    %708 = arith.mulf %707, %706 : vector<8x32xf32>
    %cst_284 = arith.constant 5.000000e-01 : f32
    %709 = vector.broadcast %cst_284 : f32 to vector<8x32xf32>
    %710 = arith.addf %708, %709 : vector<8x32xf32>
    %711 = vector.extract_strided_slice %705 {offsets = [0, 32], sizes = [8, 32], strides = [1, 1]} : vector<8x128xf32> to vector<8x32xf32>
    %cst_285 = arith.constant 5.000000e-01 : f32
    %712 = vector.broadcast %cst_285 : f32 to vector<8x32xf32>
    %713 = arith.mulf %712, %711 : vector<8x32xf32>
    %cst_286 = arith.constant 5.000000e-01 : f32
    %714 = vector.broadcast %cst_286 : f32 to vector<8x32xf32>
    %715 = arith.addf %713, %714 : vector<8x32xf32>
    %716 = vector.extract_strided_slice %705 {offsets = [0, 64], sizes = [8, 32], strides = [1, 1]} : vector<8x128xf32> to vector<8x32xf32>
    %717 = vector.extract_strided_slice %705 {offsets = [0, 96], sizes = [8, 32], strides = [1, 1]} : vector<8x128xf32> to vector<8x32xf32>
    %cst_287 = arith.constant 5.000000e-01 : f32
    %718 = vector.broadcast %cst_287 : f32 to vector<8x32xf32>
    %719 = arith.mulf %718, %717 : vector<8x32xf32>
    %cst_288 = arith.constant 5.000000e-01 : f32
    %720 = vector.broadcast %cst_288 : f32 to vector<8x32xf32>
    %721 = arith.addf %719, %720 : vector<8x32xf32>
    %722 = arith.mulf %715, %694 : vector<8x32xf32>
    %723 = arith.mulf %710, %716 : vector<8x32xf32>
    %724 = arith.addf %722, %723 : vector<8x32xf32>
    %725 = math.tanh %724 : vector<8x32xf32>
    %726 = arith.mulf %721, %725 : vector<8x32xf32>
    %727 = arith.index_cast %700 : i32 to index
    %c0_289 = arith.constant 0 : index
    %728 = vector.load %arg8[%727, %c0_289] : memref<64x32xf32, #tpu.memory_space<vmem>>, vector<8x32xf32>
    tpu.vector_store %arg8[%727, %c0_289], %726 {strides = array<i32>} : memref<64x32xf32, #tpu.memory_space<vmem>>, vector<8x32xf32>,
    %c7_i32_290 = arith.constant 7 : i32
    %c8_i32_291 = arith.constant 8 : i32
    %729 = arith.muli %c7_i32_290, %c8_i32_291 : i32
    %730 = tpu.assume_multiple %729, 8 : i32
    %731 = arith.index_cast %730 : i32 to index
    %c0_292 = arith.constant 0 : index
    %732 = vector.load %arg9[%731, %c0_292] : memref<64x128xf32, #tpu.memory_space<vmem>>, vector<8x128xf32>
    %cst_293 = arith.constant dense<0.000000e+00> : vector<8x128xf32>
    %733 = tpu.matmul %726, %509, %cst_293 {dimension_numbers = #tpu.dot_dimension_numbers<[1], [0], [0], [1], [0, 0, 1, 1], [], []>} : vector<8x32xf32>, vector<32x128xf32>, vector<8x128xf32> -> vector<8x128xf32>
    %734 = arith.addf %732, %733 : vector<8x128xf32>
    %735 = math.tanh %734 : vector<8x128xf32>
    %736 = vector.extract_strided_slice %735 {offsets = [0, 0], sizes = [8, 32], strides = [1, 1]} : vector<8x128xf32> to vector<8x32xf32>
    %cst_294 = arith.constant 5.000000e-01 : f32
    %737 = vector.broadcast %cst_294 : f32 to vector<8x32xf32>
    %738 = arith.mulf %737, %736 : vector<8x32xf32>
    %cst_295 = arith.constant 5.000000e-01 : f32
    %739 = vector.broadcast %cst_295 : f32 to vector<8x32xf32>
    %740 = arith.addf %738, %739 : vector<8x32xf32>
    %741 = vector.extract_strided_slice %735 {offsets = [0, 32], sizes = [8, 32], strides = [1, 1]} : vector<8x128xf32> to vector<8x32xf32>
    %cst_296 = arith.constant 5.000000e-01 : f32
    %742 = vector.broadcast %cst_296 : f32 to vector<8x32xf32>
    %743 = arith.mulf %742, %741 : vector<8x32xf32>
    %cst_297 = arith.constant 5.000000e-01 : f32
    %744 = vector.broadcast %cst_297 : f32 to vector<8x32xf32>
    %745 = arith.addf %743, %744 : vector<8x32xf32>
    %746 = vector.extract_strided_slice %735 {offsets = [0, 64], sizes = [8, 32], strides = [1, 1]} : vector<8x128xf32> to vector<8x32xf32>
    %747 = vector.extract_strided_slice %735 {offsets = [0, 96], sizes = [8, 32], strides = [1, 1]} : vector<8x128xf32> to vector<8x32xf32>
    %cst_298 = arith.constant 5.000000e-01 : f32
    %748 = vector.broadcast %cst_298 : f32 to vector<8x32xf32>
    %749 = arith.mulf %748, %747 : vector<8x32xf32>
    %cst_299 = arith.constant 5.000000e-01 : f32
    %750 = vector.broadcast %cst_299 : f32 to vector<8x32xf32>
    %751 = arith.addf %749, %750 : vector<8x32xf32>
    %752 = arith.mulf %745, %724 : vector<8x32xf32>
    %753 = arith.mulf %740, %746 : vector<8x32xf32>
    %754 = arith.addf %752, %753 : vector<8x32xf32>
    %755 = math.tanh %754 : vector<8x32xf32>
    %756 = arith.mulf %751, %755 : vector<8x32xf32>
    %757 = arith.index_cast %730 : i32 to index
    %c0_300 = arith.constant 0 : index
    %758 = vector.load %arg8[%757, %c0_300] : memref<64x32xf32, #tpu.memory_space<vmem>>, vector<8x32xf32>
    tpu.vector_store %arg8[%757, %c0_300], %756 {strides = array<i32>} : memref<64x32xf32, #tpu.memory_space<vmem>>, vector<8x32xf32>,
    %c8_i32_301 = arith.constant 8 : i32
    %c2_302 = arith.constant 2 : index
    %c0_303 = arith.constant 0 : index
    %c0_304 = arith.constant 0 : index
    %759 = vector.load %arg2[%c2_302, %c0_303, %c0_304] : memref<3x32x128xf32, #tpu.memory_space<vmem>>, vector<1x32x128xf32>
    %760 = vector.shape_cast %759 : vector<1x32x128xf32> to vector<32x128xf32>
    %c3 = arith.constant 3 : index
    %c0_305 = arith.constant 0 : index
    %c0_306 = arith.constant 0 : index
    %761 = vector.load %arg3[%c3, %c0_305, %c0_306] : memref<4x32x128xf32, #tpu.memory_space<vmem>>, vector<1x32x128xf32>
    %762 = vector.shape_cast %761 : vector<1x32x128xf32> to vector<32x128xf32>
    %c3_307 = arith.constant 3 : index
    %c0_308 = arith.constant 0 : index
    %c0_309 = arith.constant 0 : index
    %763 = vector.load %arg4[%c3_307, %c0_308, %c0_309] : memref<4x1x128xf32, #tpu.memory_space<vmem>>, vector<1x1x128xf32>
    %764 = vector.shape_cast %763 : vector<1x1x128xf32> to vector<1x128xf32>
    %c0_310 = arith.constant 0 : index
    %c0_311 = arith.constant 0 : index
    %765 = vector.load %arg8[%c0_310, %c0_311] : memref<64x32xf32, #tpu.memory_space<vmem>>, vector<64x32xf32>
    %cst_312 = arith.constant dense<0.000000e+00> : vector<64x128xf32>
    %766 = tpu.matmul %765, %760, %cst_312 {dimension_numbers = #tpu.dot_dimension_numbers<[1], [0], [0], [1], [0, 0, 1, 1], [], []>} : vector<64x32xf32>, vector<32x128xf32>, vector<64x128xf32> -> vector<64x128xf32>
    %767 = vector.broadcast %764 : vector<1x128xf32> to vector<64x128xf32>
    %768 = arith.addf %766, %767 : vector<64x128xf32>
    %c0_313 = arith.constant 0 : index
    %c0_314 = arith.constant 0 : index
    %769 = vector.load %arg9[%c0_313, %c0_314] : memref<64x128xf32, #tpu.memory_space<vmem>>, vector<64x128xf32>
    tpu.vector_store %arg9[%c0_313, %c0_314], %768 {strides = array<i32>} : memref<64x128xf32, #tpu.memory_space<vmem>>, vector<64x128xf32>,
    %cst_315 = arith.constant 0.000000e+00 : f32
    %770 = vector.broadcast %cst_315 : f32 to vector<8x32xf32>
    %cst_316 = arith.constant 0.000000e+00 : f32
    %771 = vector.broadcast %cst_316 : f32 to vector<8x32xf32>
    %c0_i32_317 = arith.constant 0 : i32
    %c8_i32_318 = arith.constant 8 : i32
    %772 = arith.muli %c0_i32_317, %c8_i32_318 : i32
    %773 = tpu.assume_multiple %772, 8 : i32
    %774 = arith.index_cast %773 : i32 to index
    %c0_319 = arith.constant 0 : index
    %775 = vector.load %arg9[%774, %c0_319] : memref<64x128xf32, #tpu.memory_space<vmem>>, vector<8x128xf32>
    %cst_320 = arith.constant dense<0.000000e+00> : vector<8x128xf32>
    %776 = tpu.matmul %770, %762, %cst_320 {dimension_numbers = #tpu.dot_dimension_numbers<[1], [0], [0], [1], [0, 0, 1, 1], [], []>} : vector<8x32xf32>, vector<32x128xf32>, vector<8x128xf32> -> vector<8x128xf32>
    %777 = arith.addf %775, %776 : vector<8x128xf32>
    %778 = math.tanh %777 : vector<8x128xf32>
    %779 = vector.extract_strided_slice %778 {offsets = [0, 0], sizes = [8, 32], strides = [1, 1]} : vector<8x128xf32> to vector<8x32xf32>
    %cst_321 = arith.constant 5.000000e-01 : f32
    %780 = vector.broadcast %cst_321 : f32 to vector<8x32xf32>
    %781 = arith.mulf %780, %779 : vector<8x32xf32>
    %cst_322 = arith.constant 5.000000e-01 : f32
    %782 = vector.broadcast %cst_322 : f32 to vector<8x32xf32>
    %783 = arith.addf %781, %782 : vector<8x32xf32>
    %784 = vector.extract_strided_slice %778 {offsets = [0, 32], sizes = [8, 32], strides = [1, 1]} : vector<8x128xf32> to vector<8x32xf32>
    %cst_323 = arith.constant 5.000000e-01 : f32
    %785 = vector.broadcast %cst_323 : f32 to vector<8x32xf32>
    %786 = arith.mulf %785, %784 : vector<8x32xf32>
    %cst_324 = arith.constant 5.000000e-01 : f32
    %787 = vector.broadcast %cst_324 : f32 to vector<8x32xf32>
    %788 = arith.addf %786, %787 : vector<8x32xf32>
    %789 = vector.extract_strided_slice %778 {offsets = [0, 64], sizes = [8, 32], strides = [1, 1]} : vector<8x128xf32> to vector<8x32xf32>
    %790 = vector.extract_strided_slice %778 {offsets = [0, 96], sizes = [8, 32], strides = [1, 1]} : vector<8x128xf32> to vector<8x32xf32>
    %cst_325 = arith.constant 5.000000e-01 : f32
    %791 = vector.broadcast %cst_325 : f32 to vector<8x32xf32>
    %792 = arith.mulf %791, %790 : vector<8x32xf32>
    %cst_326 = arith.constant 5.000000e-01 : f32
    %793 = vector.broadcast %cst_326 : f32 to vector<8x32xf32>
    %794 = arith.addf %792, %793 : vector<8x32xf32>
    %795 = arith.mulf %788, %771 : vector<8x32xf32>
    %796 = arith.mulf %783, %789 : vector<8x32xf32>
    %797 = arith.addf %795, %796 : vector<8x32xf32>
    %798 = math.tanh %797 : vector<8x32xf32>
    %799 = arith.mulf %794, %798 : vector<8x32xf32>
    %c1_i32_327 = arith.constant 1 : i32
    %c8_i32_328 = arith.constant 8 : i32
    %800 = arith.muli %c1_i32_327, %c8_i32_328 : i32
    %801 = tpu.assume_multiple %800, 8 : i32
    %802 = arith.index_cast %801 : i32 to index
    %c0_329 = arith.constant 0 : index
    %803 = vector.load %arg9[%802, %c0_329] : memref<64x128xf32, #tpu.memory_space<vmem>>, vector<8x128xf32>
    %cst_330 = arith.constant dense<0.000000e+00> : vector<8x128xf32>
    %804 = tpu.matmul %799, %762, %cst_330 {dimension_numbers = #tpu.dot_dimension_numbers<[1], [0], [0], [1], [0, 0, 1, 1], [], []>} : vector<8x32xf32>, vector<32x128xf32>, vector<8x128xf32> -> vector<8x128xf32>
    %805 = arith.addf %803, %804 : vector<8x128xf32>
    %806 = math.tanh %805 : vector<8x128xf32>
    %807 = vector.extract_strided_slice %806 {offsets = [0, 0], sizes = [8, 32], strides = [1, 1]} : vector<8x128xf32> to vector<8x32xf32>
    %cst_331 = arith.constant 5.000000e-01 : f32
    %808 = vector.broadcast %cst_331 : f32 to vector<8x32xf32>
    %809 = arith.mulf %808, %807 : vector<8x32xf32>
    %cst_332 = arith.constant 5.000000e-01 : f32
    %810 = vector.broadcast %cst_332 : f32 to vector<8x32xf32>
    %811 = arith.addf %809, %810 : vector<8x32xf32>
    %812 = vector.extract_strided_slice %806 {offsets = [0, 32], sizes = [8, 32], strides = [1, 1]} : vector<8x128xf32> to vector<8x32xf32>
    %cst_333 = arith.constant 5.000000e-01 : f32
    %813 = vector.broadcast %cst_333 : f32 to vector<8x32xf32>
    %814 = arith.mulf %813, %812 : vector<8x32xf32>
    %cst_334 = arith.constant 5.000000e-01 : f32
    %815 = vector.broadcast %cst_334 : f32 to vector<8x32xf32>
    %816 = arith.addf %814, %815 : vector<8x32xf32>
    %817 = vector.extract_strided_slice %806 {offsets = [0, 64], sizes = [8, 32], strides = [1, 1]} : vector<8x128xf32> to vector<8x32xf32>
    %818 = vector.extract_strided_slice %806 {offsets = [0, 96], sizes = [8, 32], strides = [1, 1]} : vector<8x128xf32> to vector<8x32xf32>
    %cst_335 = arith.constant 5.000000e-01 : f32
    %819 = vector.broadcast %cst_335 : f32 to vector<8x32xf32>
    %820 = arith.mulf %819, %818 : vector<8x32xf32>
    %cst_336 = arith.constant 5.000000e-01 : f32
    %821 = vector.broadcast %cst_336 : f32 to vector<8x32xf32>
    %822 = arith.addf %820, %821 : vector<8x32xf32>
    %823 = arith.mulf %816, %797 : vector<8x32xf32>
    %824 = arith.mulf %811, %817 : vector<8x32xf32>
    %825 = arith.addf %823, %824 : vector<8x32xf32>
    %826 = math.tanh %825 : vector<8x32xf32>
    %827 = arith.mulf %822, %826 : vector<8x32xf32>
    %c2_i32_337 = arith.constant 2 : i32
    %c8_i32_338 = arith.constant 8 : i32
    %828 = arith.muli %c2_i32_337, %c8_i32_338 : i32
    %829 = tpu.assume_multiple %828, 8 : i32
    %830 = arith.index_cast %829 : i32 to index
    %c0_339 = arith.constant 0 : index
    %831 = vector.load %arg9[%830, %c0_339] : memref<64x128xf32, #tpu.memory_space<vmem>>, vector<8x128xf32>
    %cst_340 = arith.constant dense<0.000000e+00> : vector<8x128xf32>
    %832 = tpu.matmul %827, %762, %cst_340 {dimension_numbers = #tpu.dot_dimension_numbers<[1], [0], [0], [1], [0, 0, 1, 1], [], []>} : vector<8x32xf32>, vector<32x128xf32>, vector<8x128xf32> -> vector<8x128xf32>
    %833 = arith.addf %831, %832 : vector<8x128xf32>
    %834 = math.tanh %833 : vector<8x128xf32>
    %835 = vector.extract_strided_slice %834 {offsets = [0, 0], sizes = [8, 32], strides = [1, 1]} : vector<8x128xf32> to vector<8x32xf32>
    %cst_341 = arith.constant 5.000000e-01 : f32
    %836 = vector.broadcast %cst_341 : f32 to vector<8x32xf32>
    %837 = arith.mulf %836, %835 : vector<8x32xf32>
    %cst_342 = arith.constant 5.000000e-01 : f32
    %838 = vector.broadcast %cst_342 : f32 to vector<8x32xf32>
    %839 = arith.addf %837, %838 : vector<8x32xf32>
    %840 = vector.extract_strided_slice %834 {offsets = [0, 32], sizes = [8, 32], strides = [1, 1]} : vector<8x128xf32> to vector<8x32xf32>
    %cst_343 = arith.constant 5.000000e-01 : f32
    %841 = vector.broadcast %cst_343 : f32 to vector<8x32xf32>
    %842 = arith.mulf %841, %840 : vector<8x32xf32>
    %cst_344 = arith.constant 5.000000e-01 : f32
    %843 = vector.broadcast %cst_344 : f32 to vector<8x32xf32>
    %844 = arith.addf %842, %843 : vector<8x32xf32>
    %845 = vector.extract_strided_slice %834 {offsets = [0, 64], sizes = [8, 32], strides = [1, 1]} : vector<8x128xf32> to vector<8x32xf32>
    %846 = vector.extract_strided_slice %834 {offsets = [0, 96], sizes = [8, 32], strides = [1, 1]} : vector<8x128xf32> to vector<8x32xf32>
    %cst_345 = arith.constant 5.000000e-01 : f32
    %847 = vector.broadcast %cst_345 : f32 to vector<8x32xf32>
    %848 = arith.mulf %847, %846 : vector<8x32xf32>
    %cst_346 = arith.constant 5.000000e-01 : f32
    %849 = vector.broadcast %cst_346 : f32 to vector<8x32xf32>
    %850 = arith.addf %848, %849 : vector<8x32xf32>
    %851 = arith.mulf %844, %825 : vector<8x32xf32>
    %852 = arith.mulf %839, %845 : vector<8x32xf32>
    %853 = arith.addf %851, %852 : vector<8x32xf32>
    %854 = math.tanh %853 : vector<8x32xf32>
    %855 = arith.mulf %850, %854 : vector<8x32xf32>
    %c3_i32_347 = arith.constant 3 : i32
    %c8_i32_348 = arith.constant 8 : i32
    %856 = arith.muli %c3_i32_347, %c8_i32_348 : i32
    %857 = tpu.assume_multiple %856, 8 : i32
    %858 = arith.index_cast %857 : i32 to index
    %c0_349 = arith.constant 0 : index
    %859 = vector.load %arg9[%858, %c0_349] : memref<64x128xf32, #tpu.memory_space<vmem>>, vector<8x128xf32>
    %cst_350 = arith.constant dense<0.000000e+00> : vector<8x128xf32>
    %860 = tpu.matmul %855, %762, %cst_350 {dimension_numbers = #tpu.dot_dimension_numbers<[1], [0], [0], [1], [0, 0, 1, 1], [], []>} : vector<8x32xf32>, vector<32x128xf32>, vector<8x128xf32> -> vector<8x128xf32>
    %861 = arith.addf %859, %860 : vector<8x128xf32>
    %862 = math.tanh %861 : vector<8x128xf32>
    %863 = vector.extract_strided_slice %862 {offsets = [0, 0], sizes = [8, 32], strides = [1, 1]} : vector<8x128xf32> to vector<8x32xf32>
    %cst_351 = arith.constant 5.000000e-01 : f32
    %864 = vector.broadcast %cst_351 : f32 to vector<8x32xf32>
    %865 = arith.mulf %864, %863 : vector<8x32xf32>
    %cst_352 = arith.constant 5.000000e-01 : f32
    %866 = vector.broadcast %cst_352 : f32 to vector<8x32xf32>
    %867 = arith.addf %865, %866 : vector<8x32xf32>
    %868 = vector.extract_strided_slice %862 {offsets = [0, 32], sizes = [8, 32], strides = [1, 1]} : vector<8x128xf32> to vector<8x32xf32>
    %cst_353 = arith.constant 5.000000e-01 : f32
    %869 = vector.broadcast %cst_353 : f32 to vector<8x32xf32>
    %870 = arith.mulf %869, %868 : vector<8x32xf32>
    %cst_354 = arith.constant 5.000000e-01 : f32
    %871 = vector.broadcast %cst_354 : f32 to vector<8x32xf32>
    %872 = arith.addf %870, %871 : vector<8x32xf32>
    %873 = vector.extract_strided_slice %862 {offsets = [0, 64], sizes = [8, 32], strides = [1, 1]} : vector<8x128xf32> to vector<8x32xf32>
    %874 = vector.extract_strided_slice %862 {offsets = [0, 96], sizes = [8, 32], strides = [1, 1]} : vector<8x128xf32> to vector<8x32xf32>
    %cst_355 = arith.constant 5.000000e-01 : f32
    %875 = vector.broadcast %cst_355 : f32 to vector<8x32xf32>
    %876 = arith.mulf %875, %874 : vector<8x32xf32>
    %cst_356 = arith.constant 5.000000e-01 : f32
    %877 = vector.broadcast %cst_356 : f32 to vector<8x32xf32>
    %878 = arith.addf %876, %877 : vector<8x32xf32>
    %879 = arith.mulf %872, %853 : vector<8x32xf32>
    %880 = arith.mulf %867, %873 : vector<8x32xf32>
    %881 = arith.addf %879, %880 : vector<8x32xf32>
    %882 = math.tanh %881 : vector<8x32xf32>
    %883 = arith.mulf %878, %882 : vector<8x32xf32>
    %c4_i32_357 = arith.constant 4 : i32
    %c8_i32_358 = arith.constant 8 : i32
    %884 = arith.muli %c4_i32_357, %c8_i32_358 : i32
    %885 = tpu.assume_multiple %884, 8 : i32
    %886 = arith.index_cast %885 : i32 to index
    %c0_359 = arith.constant 0 : index
    %887 = vector.load %arg9[%886, %c0_359] : memref<64x128xf32, #tpu.memory_space<vmem>>, vector<8x128xf32>
    %cst_360 = arith.constant dense<0.000000e+00> : vector<8x128xf32>
    %888 = tpu.matmul %883, %762, %cst_360 {dimension_numbers = #tpu.dot_dimension_numbers<[1], [0], [0], [1], [0, 0, 1, 1], [], []>} : vector<8x32xf32>, vector<32x128xf32>, vector<8x128xf32> -> vector<8x128xf32>
    %889 = arith.addf %887, %888 : vector<8x128xf32>
    %890 = math.tanh %889 : vector<8x128xf32>
    %891 = vector.extract_strided_slice %890 {offsets = [0, 0], sizes = [8, 32], strides = [1, 1]} : vector<8x128xf32> to vector<8x32xf32>
    %cst_361 = arith.constant 5.000000e-01 : f32
    %892 = vector.broadcast %cst_361 : f32 to vector<8x32xf32>
    %893 = arith.mulf %892, %891 : vector<8x32xf32>
    %cst_362 = arith.constant 5.000000e-01 : f32
    %894 = vector.broadcast %cst_362 : f32 to vector<8x32xf32>
    %895 = arith.addf %893, %894 : vector<8x32xf32>
    %896 = vector.extract_strided_slice %890 {offsets = [0, 32], sizes = [8, 32], strides = [1, 1]} : vector<8x128xf32> to vector<8x32xf32>
    %cst_363 = arith.constant 5.000000e-01 : f32
    %897 = vector.broadcast %cst_363 : f32 to vector<8x32xf32>
    %898 = arith.mulf %897, %896 : vector<8x32xf32>
    %cst_364 = arith.constant 5.000000e-01 : f32
    %899 = vector.broadcast %cst_364 : f32 to vector<8x32xf32>
    %900 = arith.addf %898, %899 : vector<8x32xf32>
    %901 = vector.extract_strided_slice %890 {offsets = [0, 64], sizes = [8, 32], strides = [1, 1]} : vector<8x128xf32> to vector<8x32xf32>
    %902 = vector.extract_strided_slice %890 {offsets = [0, 96], sizes = [8, 32], strides = [1, 1]} : vector<8x128xf32> to vector<8x32xf32>
    %cst_365 = arith.constant 5.000000e-01 : f32
    %903 = vector.broadcast %cst_365 : f32 to vector<8x32xf32>
    %904 = arith.mulf %903, %902 : vector<8x32xf32>
    %cst_366 = arith.constant 5.000000e-01 : f32
    %905 = vector.broadcast %cst_366 : f32 to vector<8x32xf32>
    %906 = arith.addf %904, %905 : vector<8x32xf32>
    %907 = arith.mulf %900, %881 : vector<8x32xf32>
    %908 = arith.mulf %895, %901 : vector<8x32xf32>
    %909 = arith.addf %907, %908 : vector<8x32xf32>
    %910 = math.tanh %909 : vector<8x32xf32>
    %911 = arith.mulf %906, %910 : vector<8x32xf32>
    %c5_i32_367 = arith.constant 5 : i32
    %c8_i32_368 = arith.constant 8 : i32
    %912 = arith.muli %c5_i32_367, %c8_i32_368 : i32
    %913 = tpu.assume_multiple %912, 8 : i32
    %914 = arith.index_cast %913 : i32 to index
    %c0_369 = arith.constant 0 : index
    %915 = vector.load %arg9[%914, %c0_369] : memref<64x128xf32, #tpu.memory_space<vmem>>, vector<8x128xf32>
    %cst_370 = arith.constant dense<0.000000e+00> : vector<8x128xf32>
    %916 = tpu.matmul %911, %762, %cst_370 {dimension_numbers = #tpu.dot_dimension_numbers<[1], [0], [0], [1], [0, 0, 1, 1], [], []>} : vector<8x32xf32>, vector<32x128xf32>, vector<8x128xf32> -> vector<8x128xf32>
    %917 = arith.addf %915, %916 : vector<8x128xf32>
    %918 = math.tanh %917 : vector<8x128xf32>
    %919 = vector.extract_strided_slice %918 {offsets = [0, 0], sizes = [8, 32], strides = [1, 1]} : vector<8x128xf32> to vector<8x32xf32>
    %cst_371 = arith.constant 5.000000e-01 : f32
    %920 = vector.broadcast %cst_371 : f32 to vector<8x32xf32>
    %921 = arith.mulf %920, %919 : vector<8x32xf32>
    %cst_372 = arith.constant 5.000000e-01 : f32
    %922 = vector.broadcast %cst_372 : f32 to vector<8x32xf32>
    %923 = arith.addf %921, %922 : vector<8x32xf32>
    %924 = vector.extract_strided_slice %918 {offsets = [0, 32], sizes = [8, 32], strides = [1, 1]} : vector<8x128xf32> to vector<8x32xf32>
    %cst_373 = arith.constant 5.000000e-01 : f32
    %925 = vector.broadcast %cst_373 : f32 to vector<8x32xf32>
    %926 = arith.mulf %925, %924 : vector<8x32xf32>
    %cst_374 = arith.constant 5.000000e-01 : f32
    %927 = vector.broadcast %cst_374 : f32 to vector<8x32xf32>
    %928 = arith.addf %926, %927 : vector<8x32xf32>
    %929 = vector.extract_strided_slice %918 {offsets = [0, 64], sizes = [8, 32], strides = [1, 1]} : vector<8x128xf32> to vector<8x32xf32>
    %930 = vector.extract_strided_slice %918 {offsets = [0, 96], sizes = [8, 32], strides = [1, 1]} : vector<8x128xf32> to vector<8x32xf32>
    %cst_375 = arith.constant 5.000000e-01 : f32
    %931 = vector.broadcast %cst_375 : f32 to vector<8x32xf32>
    %932 = arith.mulf %931, %930 : vector<8x32xf32>
    %cst_376 = arith.constant 5.000000e-01 : f32
    %933 = vector.broadcast %cst_376 : f32 to vector<8x32xf32>
    %934 = arith.addf %932, %933 : vector<8x32xf32>
    %935 = arith.mulf %928, %909 : vector<8x32xf32>
    %936 = arith.mulf %923, %929 : vector<8x32xf32>
    %937 = arith.addf %935, %936 : vector<8x32xf32>
    %938 = math.tanh %937 : vector<8x32xf32>
    %939 = arith.mulf %934, %938 : vector<8x32xf32>
    %c6_i32_377 = arith.constant 6 : i32
    %c8_i32_378 = arith.constant 8 : i32
    %940 = arith.muli %c6_i32_377, %c8_i32_378 : i32
    %941 = tpu.assume_multiple %940, 8 : i32
    %942 = arith.index_cast %941 : i32 to index
    %c0_379 = arith.constant 0 : index
    %943 = vector.load %arg9[%942, %c0_379] : memref<64x128xf32, #tpu.memory_space<vmem>>, vector<8x128xf32>
    %cst_380 = arith.constant dense<0.000000e+00> : vector<8x128xf32>
    %944 = tpu.matmul %939, %762, %cst_380 {dimension_numbers = #tpu.dot_dimension_numbers<[1], [0], [0], [1], [0, 0, 1, 1], [], []>} : vector<8x32xf32>, vector<32x128xf32>, vector<8x128xf32> -> vector<8x128xf32>
    %945 = arith.addf %943, %944 : vector<8x128xf32>
    %946 = math.tanh %945 : vector<8x128xf32>
    %947 = vector.extract_strided_slice %946 {offsets = [0, 0], sizes = [8, 32], strides = [1, 1]} : vector<8x128xf32> to vector<8x32xf32>
    %cst_381 = arith.constant 5.000000e-01 : f32
    %948 = vector.broadcast %cst_381 : f32 to vector<8x32xf32>
    %949 = arith.mulf %948, %947 : vector<8x32xf32>
    %cst_382 = arith.constant 5.000000e-01 : f32
    %950 = vector.broadcast %cst_382 : f32 to vector<8x32xf32>
    %951 = arith.addf %949, %950 : vector<8x32xf32>
    %952 = vector.extract_strided_slice %946 {offsets = [0, 32], sizes = [8, 32], strides = [1, 1]} : vector<8x128xf32> to vector<8x32xf32>
    %cst_383 = arith.constant 5.000000e-01 : f32
    %953 = vector.broadcast %cst_383 : f32 to vector<8x32xf32>
    %954 = arith.mulf %953, %952 : vector<8x32xf32>
    %cst_384 = arith.constant 5.000000e-01 : f32
    %955 = vector.broadcast %cst_384 : f32 to vector<8x32xf32>
    %956 = arith.addf %954, %955 : vector<8x32xf32>
    %957 = vector.extract_strided_slice %946 {offsets = [0, 64], sizes = [8, 32], strides = [1, 1]} : vector<8x128xf32> to vector<8x32xf32>
    %958 = vector.extract_strided_slice %946 {offsets = [0, 96], sizes = [8, 32], strides = [1, 1]} : vector<8x128xf32> to vector<8x32xf32>
    %cst_385 = arith.constant 5.000000e-01 : f32
    %959 = vector.broadcast %cst_385 : f32 to vector<8x32xf32>
    %960 = arith.mulf %959, %958 : vector<8x32xf32>
    %cst_386 = arith.constant 5.000000e-01 : f32
    %961 = vector.broadcast %cst_386 : f32 to vector<8x32xf32>
    %962 = arith.addf %960, %961 : vector<8x32xf32>
    %963 = arith.mulf %956, %937 : vector<8x32xf32>
    %964 = arith.mulf %951, %957 : vector<8x32xf32>
    %965 = arith.addf %963, %964 : vector<8x32xf32>
    %966 = math.tanh %965 : vector<8x32xf32>
    %967 = arith.mulf %962, %966 : vector<8x32xf32>
    %c7_i32_387 = arith.constant 7 : i32
    %c8_i32_388 = arith.constant 8 : i32
    %968 = arith.muli %c7_i32_387, %c8_i32_388 : i32
    %969 = tpu.assume_multiple %968, 8 : i32
    %970 = arith.index_cast %969 : i32 to index
    %c0_389 = arith.constant 0 : index
    %971 = vector.load %arg9[%970, %c0_389] : memref<64x128xf32, #tpu.memory_space<vmem>>, vector<8x128xf32>
    %cst_390 = arith.constant dense<0.000000e+00> : vector<8x128xf32>
    %972 = tpu.matmul %967, %762, %cst_390 {dimension_numbers = #tpu.dot_dimension_numbers<[1], [0], [0], [1], [0, 0, 1, 1], [], []>} : vector<8x32xf32>, vector<32x128xf32>, vector<8x128xf32> -> vector<8x128xf32>
    %973 = arith.addf %971, %972 : vector<8x128xf32>
    %974 = math.tanh %973 : vector<8x128xf32>
    %975 = vector.extract_strided_slice %974 {offsets = [0, 0], sizes = [8, 32], strides = [1, 1]} : vector<8x128xf32> to vector<8x32xf32>
    %cst_391 = arith.constant 5.000000e-01 : f32
    %976 = vector.broadcast %cst_391 : f32 to vector<8x32xf32>
    %977 = arith.mulf %976, %975 : vector<8x32xf32>
    %cst_392 = arith.constant 5.000000e-01 : f32
    %978 = vector.broadcast %cst_392 : f32 to vector<8x32xf32>
    %979 = arith.addf %977, %978 : vector<8x32xf32>
    %980 = vector.extract_strided_slice %974 {offsets = [0, 32], sizes = [8, 32], strides = [1, 1]} : vector<8x128xf32> to vector<8x32xf32>
    %cst_393 = arith.constant 5.000000e-01 : f32
    %981 = vector.broadcast %cst_393 : f32 to vector<8x32xf32>
    %982 = arith.mulf %981, %980 : vector<8x32xf32>
    %cst_394 = arith.constant 5.000000e-01 : f32
    %983 = vector.broadcast %cst_394 : f32 to vector<8x32xf32>
    %984 = arith.addf %982, %983 : vector<8x32xf32>
    %985 = vector.extract_strided_slice %974 {offsets = [0, 64], sizes = [8, 32], strides = [1, 1]} : vector<8x128xf32> to vector<8x32xf32>
    %986 = vector.extract_strided_slice %974 {offsets = [0, 96], sizes = [8, 32], strides = [1, 1]} : vector<8x128xf32> to vector<8x32xf32>
    %cst_395 = arith.constant 5.000000e-01 : f32
    %987 = vector.broadcast %cst_395 : f32 to vector<8x32xf32>
    %988 = arith.mulf %987, %986 : vector<8x32xf32>
    %cst_396 = arith.constant 5.000000e-01 : f32
    %989 = vector.broadcast %cst_396 : f32 to vector<8x32xf32>
    %990 = arith.addf %988, %989 : vector<8x32xf32>
    %991 = arith.mulf %984, %965 : vector<8x32xf32>
    %992 = arith.mulf %979, %985 : vector<8x32xf32>
    %993 = arith.addf %991, %992 : vector<8x32xf32>
    %994 = math.tanh %993 : vector<8x32xf32>
    %995 = arith.mulf %990, %994 : vector<8x32xf32>
    %c8_i32_397 = arith.constant 8 : i32
    %c0_398 = arith.constant 0 : index
    %c0_399 = arith.constant 0 : index
    %996 = vector.load %arg5[%c0_398, %c0_399] : memref<1x32xf32, #tpu.memory_space<vmem>>, vector<1x32xf32>
    %997 = vector.broadcast %996 : vector<1x32xf32> to vector<8x32xf32>
    %998 = arith.mulf %995, %997 : vector<8x32xf32>
    %cst_400 = arith.constant dense<0.000000e+00> : vector<8xf32>
    %999 = vector.multi_reduction <add>, %998, %cst_400 [1] : vector<8x32xf32> to vector<8xf32>
    %1000 = vector.shape_cast %999 : vector<8xf32> to vector<8x1xf32>
    %c0_401 = arith.constant 0 : index
    %c0_402 = arith.constant 0 : index
    %1001 = vector.load %arg6[%c0_401, %c0_402] : memref<1x1xf32, #tpu.memory_space<vmem>>, vector<1x1xf32>
    %1002 = vector.broadcast %1001 : vector<1x1xf32> to vector<8x1xf32>
    %1003 = arith.addf %1000, %1002 : vector<8x1xf32>
    %c0_403 = arith.constant 0 : index
    %c0_404 = arith.constant 0 : index
    %1004 = vector.load %arg7[%c0_403, %c0_404] : memref<8x1xf32, #tpu.memory_space<vmem>>, vector<8x1xf32>
    tpu.vector_store %arg7[%c0_403, %c0_404], %1003 {strides = array<i32>} : memref<8x1xf32, #tpu.memory_space<vmem>>, vector<8x1xf32>,
    return
  }
}

</mosaic_0001>

<llo_original>
// kernel: sequence_model_forward.1
$region0: #{sequence_model_forward.1}
  #allocation0 [shape = 'u32[]', space=smem, size = 0x4, offset = 0x4, fixed_abs, tag = 'smem constant byte address 0x4 - core index']
  #allocation1 [shape = 'u32[72,128]{1,0:T(1,128)}', space=vmem, size = 0x9000, scoped, tag = 'internal scratch']
  #allocation2 [shape = 'f32[64,32]{1,0:T(8,128)}', space=vmem, size = 0x8000, scoped, tag = 'scratch operand']
  #allocation3 [shape = 'f32[64,128]{1,0:T(8,128)}', space=vmem, size = 0x8000, scoped, tag = 'scratch operand']
  #allocation4 [shape = 'f32[1,1]{1,0:T(1,128)S(1)}', space=vmem, size = 0x200, scoped, tag = 'scoped memory for sequence_model_forward.1']
  %s0 = inlined_call_operand.vmem [shape: f32[8,8,16], index: 0, kind: input, shape index: {}]
  %s1 = inlined_call_operand.hbm [shape: f32[16,128], index: 1, kind: input, shape index: {}]
  %s2 = inlined_call_operand.hbm [shape: f32[3,32,128], index: 2, kind: input, shape index: {}]
  %s3 = inlined_call_operand.vmem [shape: f32[4,32,128], index: 3, kind: input, shape index: {}]
  %s4 = inlined_call_operand.vmem [shape: f32[4,1,128], index: 4, kind: input, shape index: {}]
  %s5 = inlined_call_operand.hbm [shape: f32[1,32], index: 5, kind: input, shape index: {}]
  %s6 = inlined_call_operand.<no memory space> [shape: f32[1,1], index: 6, kind: input, shape index: {}]
  %s7 = inlined_call_operand.vmem [shape: f32[8,1], index: 7, kind: output, shape index: {}]
  %s8 = sld [smem:[#allocation0]]
  $region50: #{sequence_model_forward.1} parent=0
    _
  %s10 = ssub.s32 1, %s8
  %s11 = scalar_select 0, %s10, %s8
  %v12 = vstv %s6
  %13 = vst [vmem:[#allocation4] sm:$0x1] %v12
  $region1: #{sequence_model_forward.1} parent=0
    #allocation5 [shape = 'u8[8192]{0}', space=vmem, size = 0x2000, scoped, tag = 'input window, operand 1, single buffered']
    #allocation6 [shape = 's32[1]{0}', space=sflag, size = 0x4, scoped, tag = 'scoped memory for sequence_model_forward.1']
    #allocation7 [shape = 'u8[49152]{0}', space=vmem, size = 0xc000, scoped, tag = 'input window, operand 2, single buffered']
    #allocation8 [shape = 's32[1]{0}', space=sflag, size = 0x4, scoped, tag = 'scoped memory for sequence_model_forward.1']
    #allocation9 [shape = 'u8[512]{0}', space=vmem, size = 0x400, scoped, tag = 'input window, operand 5, single buffered']
    %14 = vsyncpa [#allocation6], 0
    %15 = vsyncpa [#allocation8], 0
    // Predicated region
    $region2: #{sequence_model_forward.1} parent=1 // pred_check
      _
    $region3: #{sequence_model_forward.1} parent=1 // pred_check_branch
      %17 = sbr.rel (0) target = $region5
    $region4: #{sequence_model_forward.1} parent=1 // pred_region
      _
    $region5: #{sequence_model_forward.1} parent=1 // pred_fallthru
      _
    // Predicated region
    $region6: #{sequence_model_forward.1} parent=1 // pred_check
      _
    $region7: #{sequence_model_forward.1} parent=1 // pred_check_branch
      %19 = sbr.rel (0) target = $region9
    $region8: #{sequence_model_forward.1} parent=1 // pred_region
      %21 = vsyncadd [#allocation6], 0
      %s22 = sshll.u32 %s1, 4
      %s23 = int_to_ptr.hbm [resolvable:$true] %s22
      %s24 = sshll.u32 [#allocation5], 4
      %s25 = int_to_ptr.vmem [resolvable:$true] %s24
      %30 = dma.hbm_to_vmem [thread:$0]  %s23, 256, %s25, [#allocation6], 128, 128, 8
    $region9: #{sequence_model_forward.1} parent=1 // pred_fallthru
      _
    // Predicated region
    $region10: #{sequence_model_forward.1} parent=1 // pred_check
      _
    $region11: #{sequence_model_forward.1} parent=1 // pred_check_branch
      %32 = sbr.rel (0) target = $region13
    $region12: #{sequence_model_forward.1} parent=1 // pred_region
      %34 = vsyncadd [#allocation8], 0
      %s35 = sshll.u32 %s2, 4
      %s36 = int_to_ptr.hbm [resolvable:$true] %s35
      %s37 = sshll.u32 [#allocation7], 4
      %s38 = int_to_ptr.vmem [resolvable:$true] %s37
      %43 = dma.hbm_to_vmem [thread:$0]  %s36, 1536, %s38, [#allocation8], 128, 128, 8
    $region13: #{sequence_model_forward.1} parent=1 // pred_fallthru
      _
    // Predicated region
    $region14: #{sequence_model_forward.1} parent=1 // pred_check
      _
    $region15: #{sequence_model_forward.1} parent=1 // pred_check_branch
      %45 = sbr.rel (0) target = $region17
    $region16: #{sequence_model_forward.1} parent=1 // pred_region
      _
    $region17: #{sequence_model_forward.1} parent=1 // pred_fallthru
      _
    // Predicated region
    $region18: #{sequence_model_forward.1} parent=1 // pred_check
      _
    $region19: #{sequence_model_forward.1} parent=1 // pred_check_branch
      %47 = sbr.rel (0) target = $region21
    $region20: #{sequence_model_forward.1} parent=1 // pred_region
      _
    $region21: #{sequence_model_forward.1} parent=1 // pred_fallthru
      _
    // Predicated region
    $region22: #{sequence_model_forward.1} parent=1 // pred_check
      _
    $region23: #{sequence_model_forward.1} parent=1 // pred_check_branch
      %49 = sbr.rel (0) target = $region25
    $region24: #{sequence_model_forward.1} parent=1 // pred_region
      %51 = vsyncadd [#allocation8], 0
      %s53 = sshll.u32 %s5, 4
      %s54 = int_to_ptr.hbm [resolvable:$true] %s53
      %s55 = sshll.u32 [#allocation9], 4
      %s56 = int_to_ptr.vmem [resolvable:$true] %s55
      %58 = dma.hbm_to_vmem [thread:$0]  %s54, 16, %s56, [#allocation8]
    $region25: #{sequence_model_forward.1} parent=1 // pred_fallthru
      _
    // Predicated region
    $region26: #{sequence_model_forward.1} parent=1 // pred_check
      _
    $region27: #{sequence_model_forward.1} parent=1 // pred_check_branch
      %60 = sbr.rel (0) target = $region29
    $region28: #{sequence_model_forward.1} parent=1 // pred_region
      _
    $region29: #{sequence_model_forward.1} parent=1 // pred_fallthru
      _
    // Predicated region
    $region30: #{sequence_model_forward.1} parent=1 // pred_check
      _
    $region31: #{sequence_model_forward.1} parent=1 // pred_check_branch
      %62 = sbr.rel (0) target = $region33
    $region32: #{sequence_model_forward.1} parent=1 // pred_region
      %64 = dma.done [#allocation6], 256
    $region33: #{sequence_model_forward.1} parent=1 // pred_fallthru
      _
    // Predicated region
    $region34: #{sequence_model_forward.1} parent=1 // pred_check
      _
    $region35: #{sequence_model_forward.1} parent=1 // pred_check_branch
      %66 = sbr.rel (0) target = $region37
    $region36: #{sequence_model_forward.1} parent=1 // pred_region
      %68 = dma.done [#allocation8], 1536
    $region37: #{sequence_model_forward.1} parent=1 // pred_fallthru
      _
    // Predicated region
    $region38: #{sequence_model_forward.1} parent=1 // pred_check
      _
    $region39: #{sequence_model_forward.1} parent=1 // pred_check_branch
      %70 = sbr.rel (0) target = $region41
    $region40: #{sequence_model_forward.1} parent=1 // pred_region
      %72 = dma.done [#allocation8], 16
    $region41: #{sequence_model_forward.1} parent=1 // pred_fallthru
      _
    %v73 = vld [vmem:[#allocation5] sm:$0xff]
    %v74 = vld [vmem:[#allocation5 + $0x8] sm:$0xff]
    %v75 = vld [vmem:[%s3] sm:$0xff]
    %v76 = vld [vmem:[%s3 + $0x8] sm:$0xff]
    %v77 = vld [vmem:[%s3 + $0x10] sm:$0xff]
    %v78 = vld [vmem:[%s3 + $0x18] sm:$0xff]
    %v79 = vld [vmem:[%s4] sm:$0x1]
    %v80 = vld [vmem:[%s0] sm:$0xff]
    %v81 = vld [vmem:[%s0 + $0x8] sm:$0xff]
    %v82 = vld [vmem:[%s0 + $0x10] sm:$0xff]
    %v83 = vld [vmem:[%s0 + $0x18] sm:$0xff]
    %v84 = vld [vmem:[%s0 + $0x20] sm:$0xff]
    %v85 = vld [vmem:[%s0 + $0x28] sm:$0xff]
    %v86 = vld [vmem:[%s0 + $0x30] sm:$0xff]
    %v87 = vld [vmem:[%s0 + $0x38] sm:$0xff]
    %v89 = vperm.slane %v79, 0
    %vm91 = vcmask 130048
    %v93 = vsel %vm91, %v80, 0
    %v96 = vsel %vm91, %v81, 0
    %v99 = vsel %vm91, %v82, 0
    %v102 = vsel %vm91, %v83, 0
    %v105 = vsel %vm91, %v84, 0
    %v108 = vsel %vm91, %v85, 0
    %v111 = vsel %vm91, %v86, 0
    %v114 = vsel %vm91, %v87, 0
    %116 = vmatpush.msra.mxu0 0.0
    %117 = vmatpush.msra.mxu0 0.0
    %118 = vmatpush.msra.mxu0 0.0
    %119 = vmatpush.msra.mxu0 0.0
    %120 = vmatpush.msra.mxu0 0.0
    %121 = vmatpush.msra.mxu0 0.0
    %122 = vmatpush.msra.mxu0 0.0
    %123 = vmatpush.msra.mxu0 0.0
    %124 = vmatpush.msra.mxu0 0.0
    %125 = vmatpush.msra.mxu0 0.0
    %126 = vmatpush.msra.mxu0 0.0
    %127 = vmatpush.msra.mxu0 0.0
    %128 = vmatpush.msra.mxu0 0.0
    %129 = vmatpush.msra.mxu0 0.0
    %130 = vmatpush.msra.mxu0 %v74
    %131 = vmatpush.msra.mxu0 %v73
    %132 = vmatmul.f32.gmra.mxu0 %v93
    %v133 = vpop.f32.mrf.mxu0
    %v134 = vadd.f32 %v89, %v133
    %135 = vmatmul.f32.gmra.mxu0 %v96
    %v136 = vpop.f32.mrf.mxu0
    %v137 = vadd.f32 %v89, %v136
    %138 = vmatmul.f32.gmra.mxu0 %v99
    %v139 = vpop.f32.mrf.mxu0
    %v140 = vadd.f32 %v89, %v139
    %141 = vmatmul.f32.gmra.mxu0 %v102
    %v142 = vpop.f32.mrf.mxu0
    %v143 = vadd.f32 %v89, %v142
    %144 = vmatmul.f32.gmra.mxu0 %v105
    %v145 = vpop.f32.mrf.mxu0
    %v146 = vadd.f32 %v89, %v145
    %147 = vmatmul.f32.gmra.mxu0 %v108
    %v148 = vpop.f32.mrf.mxu0
    %v149 = vadd.f32 %v89, %v148
    %150 = vmatmul.f32.gmra.mxu0 %v111
    %v151 = vpop.f32.mrf.mxu0
    %v152 = vadd.f32 %v89, %v151
    %153 = vmatmul.f32.gmra.mxu0 %v114
    %v154 = vpop.f32.mrf.mxu0
    %v155 = vadd.f32 %v89, %v154
    %156 = vdwg.mxu0
    %157 = vst [vmem:[#allocation3] sm:$0xff] %v134
    %158 = vst [vmem:[#allocation3 + $0x8] sm:$0xff] %v137
    %159 = vst [vmem:[#allocation3 + $0x10] sm:$0xff] %v140
    %160 = vst [vmem:[#allocation3 + $0x18] sm:$0xff] %v143
    %161 = vst [vmem:[#allocation3 + $0x20] sm:$0xff] %v146
    %162 = vst [vmem:[#allocation3 + $0x28] sm:$0xff] %v149
    %163 = vst [vmem:[#allocation3 + $0x30] sm:$0xff] %v152
    %164 = vst [vmem:[#allocation3 + $0x38] sm:$0xff] %v155
    %v165 = vld [vmem:[#allocation3] sm:$0xff]
    %vm166 = vcmask 261120
    %v168 = vsel %vm166, 0.0, 0
    %170 = vmatpush.msra.mxu0 0.0
    %171 = vmatpush.msra.mxu0 0.0
    %172 = vmatpush.msra.mxu0 0.0
    %173 = vmatpush.msra.mxu0 0.0
    %174 = vmatpush.msra.mxu0 0.0
    %175 = vmatpush.msra.mxu0 0.0
    %176 = vmatpush.msra.mxu0 0.0
    %177 = vmatpush.msra.mxu0 0.0
    %178 = vmatpush.msra.mxu0 0.0
    %179 = vmatpush.msra.mxu0 0.0
    %180 = vmatpush.msra.mxu0 0.0
    %181 = vmatpush.msra.mxu0 0.0
    %182 = vmatpush.msra.mxu0 %v78
    %183 = vmatpush.msra.mxu0 %v77
    %184 = vmatpush.msra.mxu0 %v76
    %185 = vmatpush.msra.mxu0 %v75
    %186 = vmatmul.f32.gmra.mxu0 %v168
    %v187 = vpop.f32.mrf.mxu0
    %v188 = vadd.f32 0.0, %v187
    %189 = vdwg.mxu0
    %v190 = vadd.f32 %v165, %v188
    %v191 = vtanh.pop %v190
    %v192 = vmul.f32 %v191, 0.5
    %v193 = vadd.f32 %v192, 0.5
    %v194 = vmul.f32 %v193, 0.0
    %196 = vrot.lane.b32.xlu0 %v191, 64
    %v197 = vpop.permute.xlu0 %196
    %v199 = vmul.f32 %v193, %v197
    %201 = vrot.lane.b32.xlu0 %v199, 32
    %v202 = vpop.permute.xlu0 %201
    %v204 = vadd.f32 %v194, %v202
    %v205 = vtanh.pop %v204
    %207 = vrot.lane.b32.xlu0 %v205, 64
    %v208 = vpop.permute.xlu0 %207
    %v210 = vmul.f32 %v193, %v208
    %212 = vrot.lane.b32.xlu0 %v210, 32
    %v213 = vpop.permute.xlu0 %212
    %215 = vst.msk [vmem:[#allocation2] sm:$0xff] %vm166, %v213
    %s216 = scalar_lea.vmem [#allocation3], 8
    %v217 = vld [vmem:[%s216] sm:$0xff]
    %v218 = vsel %vm166, %v213, 0
    %220 = vmatpush.msra.mxu0 0.0
    %221 = vmatpush.msra.mxu0 0.0
    %222 = vmatpush.msra.mxu0 0.0
    %223 = vmatpush.msra.mxu0 0.0
    %224 = vmatpush.msra.mxu0 0.0
    %225 = vmatpush.msra.mxu0 0.0
    %226 = vmatpush.msra.mxu0 0.0
    %227 = vmatpush.msra.mxu0 0.0
    %228 = vmatpush.msra.mxu0 0.0
    %229 = vmatpush.msra.mxu0 0.0
    %230 = vmatpush.msra.mxu0 0.0
    %231 = vmatpush.msra.mxu0 0.0
    %232 = vmatpush.msra.mxu0 %v78
    %233 = vmatpush.msra.mxu0 %v77
    %234 = vmatpush.msra.mxu0 %v76
    %235 = vmatpush.msra.mxu0 %v75
    %236 = vmatmul.f32.gmra.mxu0 %v218
    %v237 = vpop.f32.mrf.mxu0
    %v238 = vadd.f32 0.0, %v237
    %239 = vdwg.mxu0
    %v240 = vadd.f32 %v217, %v238
    %v241 = vtanh.pop %v240
    %v242 = vmul.f32 %v241, 0.5
    %v243 = vadd.f32 %v242, 0.5
    %v244 = vmul.f32 %v243, %v204
    %246 = vrot.lane.b32.xlu0 %v241, 64
    %v247 = vpop.permute.xlu0 %246
    %v249 = vmul.f32 %v243, %v247
    %251 = vrot.lane.b32.xlu0 %v249, 32
    %v252 = vpop.permute.xlu0 %251
    %v254 = vadd.f32 %v244, %v252
    %v255 = vtanh.pop %v254
    %257 = vrot.lane.b32.xlu0 %v255, 64
    %v258 = vpop.permute.xlu0 %257
    %v260 = vmul.f32 %v243, %v258
    %262 = vrot.lane.b32.xlu0 %v260, 32
    %v263 = vpop.permute.xlu0 %262
    %s265 = scalar_lea.vmem [#allocation2], 8
    %266 = vst.msk [vmem:[%s265] sm:$0xff] %vm166, %v263
    %s267 = scalar_lea.vmem [#allocation3], 16
    %v268 = vld [vmem:[%s267] sm:$0xff]
    %v269 = vsel %vm166, %v263, 0
    %271 = vmatpush.msra.mxu0 0.0
    %272 = vmatpush.msra.mxu0 0.0
    %273 = vmatpush.msra.mxu0 0.0
    %274 = vmatpush.msra.mxu0 0.0
    %275 = vmatpush.msra.mxu0 0.0
    %276 = vmatpush.msra.mxu0 0.0
    %277 = vmatpush.msra.mxu0 0.0
    %278 = vmatpush.msra.mxu0 0.0
    %279 = vmatpush.msra.mxu0 0.0
    %280 = vmatpush.msra.mxu0 0.0
    %281 = vmatpush.msra.mxu0 0.0
    %282 = vmatpush.msra.mxu0 0.0
    %283 = vmatpush.msra.mxu0 %v78
    %284 = vmatpush.msra.mxu0 %v77
    %285 = vmatpush.msra.mxu0 %v76
    %286 = vmatpush.msra.mxu0 %v75
    %287 = vmatmul.f32.gmra.mxu0 %v269
    %v288 = vpop.f32.mrf.mxu0
    %v289 = vadd.f32 0.0, %v288
    %290 = vdwg.mxu0
    %v291 = vadd.f32 %v268, %v289
    %v292 = vtanh.pop %v291
    %v293 = vmul.f32 %v292, 0.5
    %v294 = vadd.f32 %v293, 0.5
    %v295 = vmul.f32 %v294, %v254
    %297 = vrot.lane.b32.xlu0 %v292, 64
    %v298 = vpop.permute.xlu0 %297
    %v300 = vmul.f32 %v294, %v298
    %302 = vrot.lane.b32.xlu0 %v300, 32
    %v303 = vpop.permute.xlu0 %302
    %v305 = vadd.f32 %v295, %v303
    %v306 = vtanh.pop %v305
    %308 = vrot.lane.b32.xlu0 %v306, 64
    %v309 = vpop.permute.xlu0 %308
    %v311 = vmul.f32 %v294, %v309
    %313 = vrot.lane.b32.xlu0 %v311, 32
    %v314 = vpop.permute.xlu0 %313
    %s316 = scalar_lea.vmem [#allocation2], 16
    %317 = vst.msk [vmem:[%s316] sm:$0xff] %vm166, %v314
    %s318 = scalar_lea.vmem [#allocation3], 24
    %v319 = vld [vmem:[%s318] sm:$0xff]
    %v320 = vsel %vm166, %v314, 0
    %322 = vmatpush.msra.mxu0 0.0
    %323 = vmatpush.msra.mxu0 0.0
    %324 = vmatpush.msra.mxu0 0.0
    %325 = vmatpush.msra.mxu0 0.0
    %326 = vmatpush.msra.mxu0 0.0
    %327 = vmatpush.msra.mxu0 0.0
    %328 = vmatpush.msra.mxu0 0.0
    %329 = vmatpush.msra.mxu0 0.0
    %330 = vmatpush.msra.mxu0 0.0
    %331 = vmatpush.msra.mxu0 0.0
    %332 = vmatpush.msra.mxu0 0.0
    %333 = vmatpush.msra.mxu0 0.0
    %334 = vmatpush.msra.mxu0 %v78
    %335 = vmatpush.msra.mxu0 %v77
    %336 = vmatpush.msra.mxu0 %v76
    %337 = vmatpush.msra.mxu0 %v75
    %338 = vmatmul.f32.gmra.mxu0 %v320
    %v339 = vpop.f32.mrf.mxu0
    %v340 = vadd.f32 0.0, %v339
    %341 = vdwg.mxu0
    %v342 = vadd.f32 %v319, %v340
    %v343 = vtanh.pop %v342
    %v344 = vmul.f32 %v343, 0.5
    %v345 = vadd.f32 %v344, 0.5
    %v346 = vmul.f32 %v345, %v305
    %348 = vrot.lane.b32.xlu0 %v343, 64
    %v349 = vpop.permute.xlu0 %348
    %v351 = vmul.f32 %v345, %v349
    %353 = vrot.lane.b32.xlu0 %v351, 32
    %v354 = vpop.permute.xlu0 %353
    %v356 = vadd.f32 %v346, %v354
    %v357 = vtanh.pop %v356
    %359 = vrot.lane.b32.xlu0 %v357, 64
    %v360 = vpop.permute.xlu0 %359
    %v362 = vmul.f32 %v345, %v360
    %364 = vrot.lane.b32.xlu0 %v362, 32
    %v365 = vpop.permute.xlu0 %364
    %s367 = scalar_lea.vmem [#allocation2], 24
    %368 = vst.msk [vmem:[%s367] sm:$0xff] %vm166, %v365
    %s369 = scalar_lea.vmem [#allocation3], 32
    %v370 = vld [vmem:[%s369] sm:$0xff]
    %v371 = vsel %vm166, %v365, 0
    %373 = vmatpush.msra.mxu0 0.0
    %374 = vmatpush.msra.mxu0 0.0
    %375 = vmatpush.msra.mxu0 0.0
    %376 = vmatpush.msra.mxu0 0.0
    %377 = vmatpush.msra.mxu0 0.0
    %378 = vmatpush.msra.mxu0 0.0
    %379 = vmatpush.msra.mxu0 0.0
    %380 = vmatpush.msra.mxu0 0.0
    %381 = vmatpush.msra.mxu0 0.0
    %382 = vmatpush.msra.mxu0 0.0
    %383 = vmatpush.msra.mxu0 0.0
    %384 = vmatpush.msra.mxu0 0.0
    %385 = vmatpush.msra.mxu0 %v78
    %386 = vmatpush.msra.mxu0 %v77
    %387 = vmatpush.msra.mxu0 %v76
    %388 = vmatpush.msra.mxu0 %v75
    %389 = vmatmul.f32.gmra.mxu0 %v371
    %v390 = vpop.f32.mrf.mxu0
    %v391 = vadd.f32 0.0, %v390
    %392 = vdwg.mxu0
    %v393 = vadd.f32 %v370, %v391
    %v394 = vtanh.pop %v393
    %v395 = vmul.f32 %v394, 0.5
    %v396 = vadd.f32 %v395, 0.5
    %v397 = vmul.f32 %v396, %v356
    %399 = vrot.lane.b32.xlu0 %v394, 64
    %v400 = vpop.permute.xlu0 %399
    %v402 = vmul.f32 %v396, %v400
    %404 = vrot.lane.b32.xlu0 %v402, 32
    %v405 = vpop.permute.xlu0 %404
    %v407 = vadd.f32 %v397, %v405
    %v408 = vtanh.pop %v407
    %410 = vrot.lane.b32.xlu0 %v408, 64
    %v411 = vpop.permute.xlu0 %410
    %v413 = vmul.f32 %v396, %v411
    %415 = vrot.lane.b32.xlu0 %v413, 32
    %v416 = vpop.permute.xlu0 %415
    %s418 = scalar_lea.vmem [#allocation2], 32
    %419 = vst.msk [vmem:[%s418] sm:$0xff] %vm166, %v416
    %s420 = scalar_lea.vmem [#allocation3], 40
    %v421 = vld [vmem:[%s420] sm:$0xff]
    %v422 = vsel %vm166, %v416, 0
    %424 = vmatpush.msra.mxu0 0.0
    %425 = vmatpush.msra.mxu0 0.0
    %426 = vmatpush.msra.mxu0 0.0
    %427 = vmatpush.msra.mxu0 0.0
    %428 = vmatpush.msra.mxu0 0.0
    %429 = vmatpush.msra.mxu0 0.0
    %430 = vmatpush.msra.mxu0 0.0
    %431 = vmatpush.msra.mxu0 0.0
    %432 = vmatpush.msra.mxu0 0.0
    %433 = vmatpush.msra.mxu0 0.0
    %434 = vmatpush.msra.mxu0 0.0
    %435 = vmatpush.msra.mxu0 0.0
    %436 = vmatpush.msra.mxu0 %v78
    %437 = vmatpush.msra.mxu0 %v77
    %438 = vmatpush.msra.mxu0 %v76
    %439 = vmatpush.msra.mxu0 %v75
    %440 = vmatmul.f32.gmra.mxu0 %v422
    %v441 = vpop.f32.mrf.mxu0
    %v442 = vadd.f32 0.0, %v441
    %443 = vdwg.mxu0
    %v444 = vadd.f32 %v421, %v442
    %v445 = vtanh.pop %v444
    %v446 = vmul.f32 %v445, 0.5
    %v447 = vadd.f32 %v446, 0.5
    %v448 = vmul.f32 %v447, %v407
    %450 = vrot.lane.b32.xlu0 %v445, 64
    %v451 = vpop.permute.xlu0 %450
    %v453 = vmul.f32 %v447, %v451
    %455 = vrot.lane.b32.xlu0 %v453, 32
    %v456 = vpop.permute.xlu0 %455
    %v458 = vadd.f32 %v448, %v456
    %v459 = vtanh.pop %v458
    %461 = vrot.lane.b32.xlu0 %v459, 64
    %v462 = vpop.permute.xlu0 %461
    %v464 = vmul.f32 %v447, %v462
    %466 = vrot.lane.b32.xlu0 %v464, 32
    %v467 = vpop.permute.xlu0 %466
    %s469 = scalar_lea.vmem [#allocation2], 40
    %470 = vst.msk [vmem:[%s469] sm:$0xff] %vm166, %v467
    %s471 = scalar_lea.vmem [#allocation3], 48
    %v472 = vld [vmem:[%s471] sm:$0xff]
    %v473 = vsel %vm166, %v467, 0
    %475 = vmatpush.msra.mxu0 0.0
    %476 = vmatpush.msra.mxu0 0.0
    %477 = vmatpush.msra.mxu0 0.0
    %478 = vmatpush.msra.mxu0 0.0
    %479 = vmatpush.msra.mxu0 0.0
    %480 = vmatpush.msra.mxu0 0.0
    %481 = vmatpush.msra.mxu0 0.0
    %482 = vmatpush.msra.mxu0 0.0
    %483 = vmatpush.msra.mxu0 0.0
    %484 = vmatpush.msra.mxu0 0.0
    %485 = vmatpush.msra.mxu0 0.0
    %486 = vmatpush.msra.mxu0 0.0
    %487 = vmatpush.msra.mxu0 %v78
    %488 = vmatpush.msra.mxu0 %v77
    %489 = vmatpush.msra.mxu0 %v76
    %490 = vmatpush.msra.mxu0 %v75
    %491 = vmatmul.f32.gmra.mxu0 %v473
    %v492 = vpop.f32.mrf.mxu0
    %v493 = vadd.f32 0.0, %v492
    %494 = vdwg.mxu0
    %v495 = vadd.f32 %v472, %v493
    %v496 = vtanh.pop %v495
    %v497 = vmul.f32 %v496, 0.5
    %v498 = vadd.f32 %v497, 0.5
    %v499 = vmul.f32 %v498, %v458
    %501 = vrot.lane.b32.xlu0 %v496, 64
    %v502 = vpop.permute.xlu0 %501
    %v504 = vmul.f32 %v498, %v502
    %506 = vrot.lane.b32.xlu0 %v504, 32
    %v507 = vpop.permute.xlu0 %506
    %v509 = vadd.f32 %v499, %v507
    %v510 = vtanh.pop %v509
    %512 = vrot.lane.b32.xlu0 %v510, 64
    %v513 = vpop.permute.xlu0 %512
    %v515 = vmul.f32 %v498, %v513
    %517 = vrot.lane.b32.xlu0 %v515, 32
    %v518 = vpop.permute.xlu0 %517
    %s520 = scalar_lea.vmem [#allocation2], 48
    %521 = vst.msk [vmem:[%s520] sm:$0xff] %vm166, %v518
    %s522 = scalar_lea.vmem [#allocation3], 56
    %v523 = vld [vmem:[%s522] sm:$0xff]
    %v524 = vsel %vm166, %v518, 0
    %526 = vmatpush.msra.mxu0 0.0
    %527 = vmatpush.msra.mxu0 0.0
    %528 = vmatpush.msra.mxu0 0.0
    %529 = vmatpush.msra.mxu0 0.0
    %530 = vmatpush.msra.mxu0 0.0
    %531 = vmatpush.msra.mxu0 0.0
    %532 = vmatpush.msra.mxu0 0.0
    %533 = vmatpush.msra.mxu0 0.0
    %534 = vmatpush.msra.mxu0 0.0
    %535 = vmatpush.msra.mxu0 0.0
    %536 = vmatpush.msra.mxu0 0.0
    %537 = vmatpush.msra.mxu0 0.0
    %538 = vmatpush.msra.mxu0 %v78
    %539 = vmatpush.msra.mxu0 %v77
    %540 = vmatpush.msra.mxu0 %v76
    %541 = vmatpush.msra.mxu0 %v75
    %542 = vmatmul.f32.gmra.mxu0 %v524
    %v543 = vpop.f32.mrf.mxu0
    %v544 = vadd.f32 0.0, %v543
    %545 = vdwg.mxu0
    %v546 = vadd.f32 %v523, %v544
    %v547 = vtanh.pop %v546
    %v548 = vmul.f32 %v547, 0.5
    %v549 = vadd.f32 %v548, 0.5
    %v550 = vmul.f32 %v549, %v509
    %552 = vrot.lane.b32.xlu0 %v547, 64
    %v553 = vpop.permute.xlu0 %552
    %v555 = vmul.f32 %v549, %v553
    %557 = vrot.lane.b32.xlu0 %v555, 32
    %v558 = vpop.permute.xlu0 %557
    %v560 = vadd.f32 %v550, %v558
    %v561 = vtanh.pop %v560
    %563 = vrot.lane.b32.xlu0 %v561, 64
    %v564 = vpop.permute.xlu0 %563
    %v566 = vmul.f32 %v549, %v564
    %568 = vrot.lane.b32.xlu0 %v566, 32
    %v569 = vpop.permute.xlu0 %568
    %s571 = scalar_lea.vmem [#allocation2], 56
    %572 = vst.msk [vmem:[%s571] sm:$0xff] %vm166, %v569
    %v573 = vld [vmem:[#allocation7] sm:$0xff]
    %v574 = vld [vmem:[#allocation7 + $0x8] sm:$0xff]
    %v575 = vld [vmem:[#allocation7 + $0x10] sm:$0xff]
    %v576 = vld [vmem:[#allocation7 + $0x18] sm:$0xff]
    %s577 = scalar_lea.vmem %s3, 32
    %v578 = vld [vmem:[%s577] sm:$0xff]
    %v579 = vld [vmem:[%s577 + $0x8] sm:$0xff]
    %v580 = vld [vmem:[%s577 + $0x10] sm:$0xff]
    %v581 = vld [vmem:[%s577 + $0x18] sm:$0xff]
    %s582 = scalar_lea.vmem %s4, 1
    %v583 = vld [vmem:[%s582] sm:$0x1]
    %v584 = vld [vmem:[#allocation2] sm:$0xff]
    %v585 = vld [vmem:[#allocation2 + $0x8] sm:$0xff]
    %v586 = vld [vmem:[#allocation2 + $0x10] sm:$0xff]
    %v587 = vld [vmem:[#allocation2 + $0x18] sm:$0xff]
    %v588 = vld [vmem:[#allocation2 + $0x20] sm:$0xff]
    %v589 = vld [vmem:[#allocation2 + $0x28] sm:$0xff]
    %v590 = vld [vmem:[#allocation2 + $0x30] sm:$0xff]
    %v591 = vld [vmem:[#allocation2 + $0x38] sm:$0xff]
    %v593 = vperm.slane %v583, 0
    %v596 = vsel %vm166, %v584, 0
    %v599 = vsel %vm166, %v585, 0
    %v602 = vsel %vm166, %v586, 0
    %v605 = vsel %vm166, %v587, 0
    %v608 = vsel %vm166, %v588, 0
    %v611 = vsel %vm166, %v589, 0
    %v614 = vsel %vm166, %v590, 0
    %v617 = vsel %vm166, %v591, 0
    %619 = vmatpush.msra.mxu0 0.0
    %620 = vmatpush.msra.mxu0 0.0
    %621 = vmatpush.msra.mxu0 0.0
    %622 = vmatpush.msra.mxu0 0.0
    %623 = vmatpush.msra.mxu0 0.0
    %624 = vmatpush.msra.mxu0 0.0
    %625 = vmatpush.msra.mxu0 0.0
    %626 = vmatpush.msra.mxu0 0.0
    %627 = vmatpush.msra.mxu0 0.0
    %628 = vmatpush.msra.mxu0 0.0
    %629 = vmatpush.msra.mxu0 0.0
    %630 = vmatpush.msra.mxu0 0.0
    %631 = vmatpush.msra.mxu0 %v576
    %632 = vmatpush.msra.mxu0 %v575
    %633 = vmatpush.msra.mxu0 %v574
    %634 = vmatpush.msra.mxu0 %v573
    %635 = vmatmul.f32.gmra.mxu0 %v596
    %v636 = vpop.f32.mrf.mxu0
    %v637 = vadd.f32 %v593, %v636
    %638 = vmatmul.f32.gmra.mxu0 %v599
    %v639 = vpop.f32.mrf.mxu0
    %v640 = vadd.f32 %v593, %v639
    %641 = vmatmul.f32.gmra.mxu0 %v602
    %v642 = vpop.f32.mrf.mxu0
    %v643 = vadd.f32 %v593, %v642
    %644 = vmatmul.f32.gmra.mxu0 %v605
    %v645 = vpop.f32.mrf.mxu0
    %v646 = vadd.f32 %v593, %v645
    %647 = vmatmul.f32.gmra.mxu0 %v608
    %v648 = vpop.f32.mrf.mxu0
    %v649 = vadd.f32 %v593, %v648
    %650 = vmatmul.f32.gmra.mxu0 %v611
    %v651 = vpop.f32.mrf.mxu0
    %v652 = vadd.f32 %v593, %v651
    %653 = vmatmul.f32.gmra.mxu0 %v614
    %v654 = vpop.f32.mrf.mxu0
    %v655 = vadd.f32 %v593, %v654
    %656 = vmatmul.f32.gmra.mxu0 %v617
    %v657 = vpop.f32.mrf.mxu0
    %v658 = vadd.f32 %v593, %v657
    %659 = vdwg.mxu0
    %660 = vst [vmem:[#allocation3] sm:$0xff] %v637
    %661 = vst [vmem:[#allocation3 + $0x8] sm:$0xff] %v640
    %662 = vst [vmem:[#allocation3 + $0x10] sm:$0xff] %v643
    %663 = vst [vmem:[#allocation3 + $0x18] sm:$0xff] %v646
    %664 = vst [vmem:[#allocation3 + $0x20] sm:$0xff] %v649
    %665 = vst [vmem:[#allocation3 + $0x28] sm:$0xff] %v652
    %666 = vst [vmem:[#allocation3 + $0x30] sm:$0xff] %v655
    %667 = vst [vmem:[#allocation3 + $0x38] sm:$0xff] %v658
    %v668 = vld [vmem:[#allocation3] sm:$0xff]
    %669 = vmatpush.msra.mxu0 0.0
    %670 = vmatpush.msra.mxu0 0.0
    %671 = vmatpush.msra.mxu0 0.0
    %672 = vmatpush.msra.mxu0 0.0
    %673 = vmatpush.msra.mxu0 0.0
    %674 = vmatpush.msra.mxu0 0.0
    %675 = vmatpush.msra.mxu0 0.0
    %676 = vmatpush.msra.mxu0 0.0
    %677 = vmatpush.msra.mxu0 0.0
    %678 = vmatpush.msra.mxu0 0.0
    %679 = vmatpush.msra.mxu0 0.0
    %680 = vmatpush.msra.mxu0 0.0
    %681 = vmatpush.msra.mxu0 %v581
    %682 = vmatpush.msra.mxu0 %v580
    %683 = vmatpush.msra.mxu0 %v579
    %684 = vmatpush.msra.mxu0 %v578
    %685 = vmatmul.f32.gmra.mxu0 %v168
    %v686 = vpop.f32.mrf.mxu0
    %v687 = vadd.f32 0.0, %v686
    %688 = vdwg.mxu0
    %v689 = vadd.f32 %v668, %v687
    %v690 = vtanh.pop %v689
    %v691 = vmul.f32 %v690, 0.5
    %v692 = vadd.f32 %v691, 0.5
    %v693 = vmul.f32 %v692, 0.0
    %695 = vrot.lane.b32.xlu0 %v690, 64
    %v696 = vpop.permute.xlu0 %695
    %v698 = vmul.f32 %v692, %v696
    %700 = vrot.lane.b32.xlu0 %v698, 32
    %v701 = vpop.permute.xlu0 %700
    %v703 = vadd.f32 %v693, %v701
    %v704 = vtanh.pop %v703
    %706 = vrot.lane.b32.xlu0 %v704, 64
    %v707 = vpop.permute.xlu0 %706
    %v709 = vmul.f32 %v692, %v707
    %711 = vrot.lane.b32.xlu0 %v709, 32
    %v712 = vpop.permute.xlu0 %711
    %714 = vst.msk [vmem:[#allocation2] sm:$0xff] %vm166, %v712
    %v715 = vld [vmem:[%s216] sm:$0xff]
    %v716 = vsel %vm166, %v712, 0
    %718 = vmatpush.msra.mxu0 0.0
    %719 = vmatpush.msra.mxu0 0.0
    %720 = vmatpush.msra.mxu0 0.0
    %721 = vmatpush.msra.mxu0 0.0
    %722 = vmatpush.msra.mxu0 0.0
    %723 = vmatpush.msra.mxu0 0.0
    %724 = vmatpush.msra.mxu0 0.0
    %725 = vmatpush.msra.mxu0 0.0
    %726 = vmatpush.msra.mxu0 0.0
    %727 = vmatpush.msra.mxu0 0.0
    %728 = vmatpush.msra.mxu0 0.0
    %729 = vmatpush.msra.mxu0 0.0
    %730 = vmatpush.msra.mxu0 %v581
    %731 = vmatpush.msra.mxu0 %v580
    %732 = vmatpush.msra.mxu0 %v579
    %733 = vmatpush.msra.mxu0 %v578
    %734 = vmatmul.f32.gmra.mxu0 %v716
    %v735 = vpop.f32.mrf.mxu0
    %v736 = vadd.f32 0.0, %v735
    %737 = vdwg.mxu0
    %v738 = vadd.f32 %v715, %v736
    %v739 = vtanh.pop %v738
    %v740 = vmul.f32 %v739, 0.5
    %v741 = vadd.f32 %v740, 0.5
    %v742 = vmul.f32 %v741, %v703
    %744 = vrot.lane.b32.xlu0 %v739, 64
    %v745 = vpop.permute.xlu0 %744
    %v747 = vmul.f32 %v741, %v745
    %749 = vrot.lane.b32.xlu0 %v747, 32
    %v750 = vpop.permute.xlu0 %749
    %v752 = vadd.f32 %v742, %v750
    %v753 = vtanh.pop %v752
    %755 = vrot.lane.b32.xlu0 %v753, 64
    %v756 = vpop.permute.xlu0 %755
    %v758 = vmul.f32 %v741, %v756
    %760 = vrot.lane.b32.xlu0 %v758, 32
    %v761 = vpop.permute.xlu0 %760
    %763 = vst.msk [vmem:[%s265] sm:$0xff] %vm166, %v761
    %v764 = vld [vmem:[%s267] sm:$0xff]
    %v765 = vsel %vm166, %v761, 0
    %767 = vmatpush.msra.mxu0 0.0
    %768 = vmatpush.msra.mxu0 0.0
    %769 = vmatpush.msra.mxu0 0.0
    %770 = vmatpush.msra.mxu0 0.0
    %771 = vmatpush.msra.mxu0 0.0
    %772 = vmatpush.msra.mxu0 0.0
    %773 = vmatpush.msra.mxu0 0.0
    %774 = vmatpush.msra.mxu0 0.0
    %775 = vmatpush.msra.mxu0 0.0
    %776 = vmatpush.msra.mxu0 0.0
    %777 = vmatpush.msra.mxu0 0.0
    %778 = vmatpush.msra.mxu0 0.0
    %779 = vmatpush.msra.mxu0 %v581
    %780 = vmatpush.msra.mxu0 %v580
    %781 = vmatpush.msra.mxu0 %v579
    %782 = vmatpush.msra.mxu0 %v578
    %783 = vmatmul.f32.gmra.mxu0 %v765
    %v784 = vpop.f32.mrf.mxu0
    %v785 = vadd.f32 0.0, %v784
    %786 = vdwg.mxu0
    %v787 = vadd.f32 %v764, %v785
    %v788 = vtanh.pop %v787
    %v789 = vmul.f32 %v788, 0.5
    %v790 = vadd.f32 %v789, 0.5
    %v791 = vmul.f32 %v790, %v752
    %793 = vrot.lane.b32.xlu0 %v788, 64
    %v794 = vpop.permute.xlu0 %793
    %v796 = vmul.f32 %v790, %v794
    %798 = vrot.lane.b32.xlu0 %v796, 32
    %v799 = vpop.permute.xlu0 %798
    %v801 = vadd.f32 %v791, %v799
    %v802 = vtanh.pop %v801
    %804 = vrot.lane.b32.xlu0 %v802, 64
    %v805 = vpop.permute.xlu0 %804
    %v807 = vmul.f32 %v790, %v805
    %809 = vrot.lane.b32.xlu0 %v807, 32
    %v810 = vpop.permute.xlu0 %809
    %812 = vst.msk [vmem:[%s316] sm:$0xff] %vm166, %v810
    %v813 = vld [vmem:[%s318] sm:$0xff]
    %v814 = vsel %vm166, %v810, 0
    %816 = vmatpush.msra.mxu0 0.0
    %817 = vmatpush.msra.mxu0 0.0
    %818 = vmatpush.msra.mxu0 0.0
    %819 = vmatpush.msra.mxu0 0.0
    %820 = vmatpush.msra.mxu0 0.0
    %821 = vmatpush.msra.mxu0 0.0
    %822 = vmatpush.msra.mxu0 0.0
    %823 = vmatpush.msra.mxu0 0.0
    %824 = vmatpush.msra.mxu0 0.0
    %825 = vmatpush.msra.mxu0 0.0
    %826 = vmatpush.msra.mxu0 0.0
    %827 = vmatpush.msra.mxu0 0.0
    %828 = vmatpush.msra.mxu0 %v581
    %829 = vmatpush.msra.mxu0 %v580
    %830 = vmatpush.msra.mxu0 %v579
    %831 = vmatpush.msra.mxu0 %v578
    %832 = vmatmul.f32.gmra.mxu0 %v814
    %v833 = vpop.f32.mrf.mxu0
    %v834 = vadd.f32 0.0, %v833
    %835 = vdwg.mxu0
    %v836 = vadd.f32 %v813, %v834
    %v837 = vtanh.pop %v836
    %v838 = vmul.f32 %v837, 0.5
    %v839 = vadd.f32 %v838, 0.5
    %v840 = vmul.f32 %v839, %v801
    %842 = vrot.lane.b32.xlu0 %v837, 64
    %v843 = vpop.permute.xlu0 %842
    %v845 = vmul.f32 %v839, %v843
    %847 = vrot.lane.b32.xlu0 %v845, 32
    %v848 = vpop.permute.xlu0 %847
    %v850 = vadd.f32 %v840, %v848
    %v851 = vtanh.pop %v850
    %853 = vrot.lane.b32.xlu0 %v851, 64
    %v854 = vpop.permute.xlu0 %853
    %v856 = vmul.f32 %v839, %v854
    %858 = vrot.lane.b32.xlu0 %v856, 32
    %v859 = vpop.permute.xlu0 %858
    %861 = vst.msk [vmem:[%s367] sm:$0xff] %vm166, %v859
    %v862 = vld [vmem:[%s369] sm:$0xff]
    %v863 = vsel %vm166, %v859, 0
    %865 = vmatpush.msra.mxu0 0.0
    %866 = vmatpush.msra.mxu0 0.0
    %867 = vmatpush.msra.mxu0 0.0
    %868 = vmatpush.msra.mxu0 0.0
    %869 = vmatpush.msra.mxu0 0.0
    %870 = vmatpush.msra.mxu0 0.0
    %871 = vmatpush.msra.mxu0 0.0
    %872 = vmatpush.msra.mxu0 0.0
    %873 = vmatpush.msra.mxu0 0.0
    %874 = vmatpush.msra.mxu0 0.0
    %875 = vmatpush.msra.mxu0 0.0
    %876 = vmatpush.msra.mxu0 0.0
    %877 = vmatpush.msra.mxu0 %v581
    %878 = vmatpush.msra.mxu0 %v580
    %879 = vmatpush.msra.mxu0 %v579
    %880 = vmatpush.msra.mxu0 %v578
    %881 = vmatmul.f32.gmra.mxu0 %v863
    %v882 = vpop.f32.mrf.mxu0
    %v883 = vadd.f32 0.0, %v882
    %884 = vdwg.mxu0
    %v885 = vadd.f32 %v862, %v883
    %v886 = vtanh.pop %v885
    %v887 = vmul.f32 %v886, 0.5
    %v888 = vadd.f32 %v887, 0.5
    %v889 = vmul.f32 %v888, %v850
    %891 = vrot.lane.b32.xlu0 %v886, 64
    %v892 = vpop.permute.xlu0 %891
    %v894 = vmul.f32 %v888, %v892
    %896 = vrot.lane.b32.xlu0 %v894, 32
    %v897 = vpop.permute.xlu0 %896
    %v899 = vadd.f32 %v889, %v897
    %v900 = vtanh.pop %v899
    %902 = vrot.lane.b32.xlu0 %v900, 64
    %v903 = vpop.permute.xlu0 %902
    %v905 = vmul.f32 %v888, %v903
    %907 = vrot.lane.b32.xlu0 %v905, 32
    %v908 = vpop.permute.xlu0 %907
    %910 = vst.msk [vmem:[%s418] sm:$0xff] %vm166, %v908
    %v911 = vld [vmem:[%s420] sm:$0xff]
    %v912 = vsel %vm166, %v908, 0
    %914 = vmatpush.msra.mxu0 0.0
    %915 = vmatpush.msra.mxu0 0.0
    %916 = vmatpush.msra.mxu0 0.0
    %917 = vmatpush.msra.mxu0 0.0
    %918 = vmatpush.msra.mxu0 0.0
    %919 = vmatpush.msra.mxu0 0.0
    %920 = vmatpush.msra.mxu0 0.0
    %921 = vmatpush.msra.mxu0 0.0
    %922 = vmatpush.msra.mxu0 0.0
    %923 = vmatpush.msra.mxu0 0.0
    %924 = vmatpush.msra.mxu0 0.0
    %925 = vmatpush.msra.mxu0 0.0
    %926 = vmatpush.msra.mxu0 %v581
    %927 = vmatpush.msra.mxu0 %v580
    %928 = vmatpush.msra.mxu0 %v579
    %929 = vmatpush.msra.mxu0 %v578
    %930 = vmatmul.f32.gmra.mxu0 %v912
    %v931 = vpop.f32.mrf.mxu0
    %v932 = vadd.f32 0.0, %v931
    %933 = vdwg.mxu0
    %v934 = vadd.f32 %v911, %v932
    %v935 = vtanh.pop %v934
    %v936 = vmul.f32 %v935, 0.5
    %v937 = vadd.f32 %v936, 0.5
    %v938 = vmul.f32 %v937, %v899
    %940 = vrot.lane.b32.xlu0 %v935, 64
    %v941 = vpop.permute.xlu0 %940
    %v943 = vmul.f32 %v937, %v941
    %945 = vrot.lane.b32.xlu0 %v943, 32
    %v946 = vpop.permute.xlu0 %945
    %v948 = vadd.f32 %v938, %v946
    %v949 = vtanh.pop %v948
    %951 = vrot.lane.b32.xlu0 %v949, 64
    %v952 = vpop.permute.xlu0 %951
    %v954 = vmul.f32 %v937, %v952
    %956 = vrot.lane.b32.xlu0 %v954, 32
    %v957 = vpop.permute.xlu0 %956
    %959 = vst.msk [vmem:[%s469] sm:$0xff] %vm166, %v957
    %v960 = vld [vmem:[%s471] sm:$0xff]
    %v961 = vsel %vm166, %v957, 0
    %963 = vmatpush.msra.mxu0 0.0
    %964 = vmatpush.msra.mxu0 0.0
    %965 = vmatpush.msra.mxu0 0.0
    %966 = vmatpush.msra.mxu0 0.0
    %967 = vmatpush.msra.mxu0 0.0
    %968 = vmatpush.msra.mxu0 0.0
    %969 = vmatpush.msra.mxu0 0.0
    %970 = vmatpush.msra.mxu0 0.0
    %971 = vmatpush.msra.mxu0 0.0
    %972 = vmatpush.msra.mxu0 0.0
    %973 = vmatpush.msra.mxu0 0.0
    %974 = vmatpush.msra.mxu0 0.0
    %975 = vmatpush.msra.mxu0 %v581
    %976 = vmatpush.msra.mxu0 %v580
    %977 = vmatpush.msra.mxu0 %v579
    %978 = vmatpush.msra.mxu0 %v578
    %979 = vmatmul.f32.gmra.mxu0 %v961
    %v980 = vpop.f32.mrf.mxu0
    %v981 = vadd.f32 0.0, %v980
    %982 = vdwg.mxu0
    %v983 = vadd.f32 %v960, %v981
    %v984 = vtanh.pop %v983
    %v985 = vmul.f32 %v984, 0.5
    %v986 = vadd.f32 %v985, 0.5
    %v987 = vmul.f32 %v986, %v948
    %989 = vrot.lane.b32.xlu0 %v984, 64
    %v990 = vpop.permute.xlu0 %989
    %v992 = vmul.f32 %v986, %v990
    %994 = vrot.lane.b32.xlu0 %v992, 32
    %v995 = vpop.permute.xlu0 %994
    %v997 = vadd.f32 %v987, %v995
    %v998 = vtanh.pop %v997
    %1000 = vrot.lane.b32.xlu0 %v998, 64
    %v1001 = vpop.permute.xlu0 %1000
    %v1003 = vmul.f32 %v986, %v1001
    %1005 = vrot.lane.b32.xlu0 %v1003, 32
    %v1006 = vpop.permute.xlu0 %1005
    %1008 = vst.msk [vmem:[%s520] sm:$0xff] %vm166, %v1006
    %v1009 = vld [vmem:[%s522] sm:$0xff]
    %v1010 = vsel %vm166, %v1006, 0
    %1012 = vmatpush.msra.mxu0 0.0
    %1013 = vmatpush.msra.mxu0 0.0
    %1014 = vmatpush.msra.mxu0 0.0
    %1015 = vmatpush.msra.mxu0 0.0
    %1016 = vmatpush.msra.mxu0 0.0
    %1017 = vmatpush.msra.mxu0 0.0
    %1018 = vmatpush.msra.mxu0 0.0
    %1019 = vmatpush.msra.mxu0 0.0
    %1020 = vmatpush.msra.mxu0 0.0
    %1021 = vmatpush.msra.mxu0 0.0
    %1022 = vmatpush.msra.mxu0 0.0
    %1023 = vmatpush.msra.mxu0 0.0
    %1024 = vmatpush.msra.mxu0 %v581
    %1025 = vmatpush.msra.mxu0 %v580
    %1026 = vmatpush.msra.mxu0 %v579
    %1027 = vmatpush.msra.mxu0 %v578
    %1028 = vmatmul.f32.gmra.mxu0 %v1010
    %v1029 = vpop.f32.mrf.mxu0
    %v1030 = vadd.f32 0.0, %v1029
    %1031 = vdwg.mxu0
    %v1032 = vadd.f32 %v1009, %v1030
    %v1033 = vtanh.pop %v1032
    %v1034 = vmul.f32 %v1033, 0.5
    %v1035 = vadd.f32 %v1034, 0.5
    %v1036 = vmul.f32 %v1035, %v997
    %1038 = vrot.lane.b32.xlu0 %v1033, 64
    %v1039 = vpop.permute.xlu0 %1038
    %v1041 = vmul.f32 %v1035, %v1039
    %1043 = vrot.lane.b32.xlu0 %v1041, 32
    %v1044 = vpop.permute.xlu0 %1043
    %v1046 = vadd.f32 %v1036, %v1044
    %v1047 = vtanh.pop %v1046
    %1049 = vrot.lane.b32.xlu0 %v1047, 64
    %v1050 = vpop.permute.xlu0 %1049
    %v1052 = vmul.f32 %v1035, %v1050
    %1054 = vrot.lane.b32.xlu0 %v1052, 32
    %v1055 = vpop.permute.xlu0 %1054
    %1057 = vst.msk [vmem:[%s571] sm:$0xff] %vm166, %v1055
    %s1058 = scalar_lea.vmem [#allocation7], 32
    %v1059 = vld [vmem:[%s1058] sm:$0xff]
    %v1060 = vld [vmem:[%s1058 + $0x8] sm:$0xff]
    %v1061 = vld [vmem:[%s1058 + $0x10] sm:$0xff]
    %v1062 = vld [vmem:[%s1058 + $0x18] sm:$0xff]
    %s1063 = scalar_lea.vmem %s3, 64
    %v1064 = vld [vmem:[%s1063] sm:$0xff]
    %v1065 = vld [vmem:[%s1063 + $0x8] sm:$0xff]
    %v1066 = vld [vmem:[%s1063 + $0x10] sm:$0xff]
    %v1067 = vld [vmem:[%s1063 + $0x18] sm:$0xff]
    %s1068 = scalar_lea.vmem %s4, 2
    %v1069 = vld [vmem:[%s1068] sm:$0x1]
    %v1070 = vld [vmem:[#allocation2] sm:$0xff]
    %v1071 = vld [vmem:[#allocation2 + $0x8] sm:$0xff]
    %v1072 = vld [vmem:[#allocation2 + $0x10] sm:$0xff]
    %v1073 = vld [vmem:[#allocation2 + $0x18] sm:$0xff]
    %v1074 = vld [vmem:[#allocation2 + $0x20] sm:$0xff]
    %v1075 = vld [vmem:[#allocation2 + $0x28] sm:$0xff]
    %v1076 = vld [vmem:[#allocation2 + $0x30] sm:$0xff]
    %v1077 = vld [vmem:[#allocation2 + $0x38] sm:$0xff]
    %v1079 = vperm.slane %v1069, 0
    %v1082 = vsel %vm166, %v1070, 0
    %v1085 = vsel %vm166, %v1071, 0
    %v1088 = vsel %vm166, %v1072, 0
    %v1091 = vsel %vm166, %v1073, 0
    %v1094 = vsel %vm166, %v1074, 0
    %v1097 = vsel %vm166, %v1075, 0
    %v1100 = vsel %vm166, %v1076, 0
    %v1103 = vsel %vm166, %v1077, 0
    %1105 = vmatpush.msra.mxu0 0.0
    %1106 = vmatpush.msra.mxu0 0.0
    %1107 = vmatpush.msra.mxu0 0.0
    %1108 = vmatpush.msra.mxu0 0.0
    %1109 = vmatpush.msra.mxu0 0.0
    %1110 = vmatpush.msra.mxu0 0.0
    %1111 = vmatpush.msra.mxu0 0.0
    %1112 = vmatpush.msra.mxu0 0.0
    %1113 = vmatpush.msra.mxu0 0.0
    %1114 = vmatpush.msra.mxu0 0.0
    %1115 = vmatpush.msra.mxu0 0.0
    %1116 = vmatpush.msra.mxu0 0.0
    %1117 = vmatpush.msra.mxu0 %v1062
    %1118 = vmatpush.msra.mxu0 %v1061
    %1119 = vmatpush.msra.mxu0 %v1060
    %1120 = vmatpush.msra.mxu0 %v1059
    %1121 = vmatmul.f32.gmra.mxu0 %v1082
    %v1122 = vpop.f32.mrf.mxu0
    %v1123 = vadd.f32 %v1079, %v1122
    %1124 = vmatmul.f32.gmra.mxu0 %v1085
    %v1125 = vpop.f32.mrf.mxu0
    %v1126 = vadd.f32 %v1079, %v1125
    %1127 = vmatmul.f32.gmra.mxu0 %v1088
    %v1128 = vpop.f32.mrf.mxu0
    %v1129 = vadd.f32 %v1079, %v1128
    %1130 = vmatmul.f32.gmra.mxu0 %v1091
    %v1131 = vpop.f32.mrf.mxu0
    %v1132 = vadd.f32 %v1079, %v1131
    %1133 = vmatmul.f32.gmra.mxu0 %v1094
    %v1134 = vpop.f32.mrf.mxu0
    %v1135 = vadd.f32 %v1079, %v1134
    %1136 = vmatmul.f32.gmra.mxu0 %v1097
    %v1137 = vpop.f32.mrf.mxu0
    %v1138 = vadd.f32 %v1079, %v1137
    %1139 = vmatmul.f32.gmra.mxu0 %v1100
    %v1140 = vpop.f32.mrf.mxu0
    %v1141 = vadd.f32 %v1079, %v1140
    %1142 = vmatmul.f32.gmra.mxu0 %v1103
    %v1143 = vpop.f32.mrf.mxu0
    %v1144 = vadd.f32 %v1079, %v1143
    %1145 = vdwg.mxu0
    %1146 = vst [vmem:[#allocation3] sm:$0xff] %v1123
    %1147 = vst [vmem:[#allocation3 + $0x8] sm:$0xff] %v1126
    %1148 = vst [vmem:[#allocation3 + $0x10] sm:$0xff] %v1129
    %1149 = vst [vmem:[#allocation3 + $0x18] sm:$0xff] %v1132
    %1150 = vst [vmem:[#allocation3 + $0x20] sm:$0xff] %v1135
    %1151 = vst [vmem:[#allocation3 + $0x28] sm:$0xff] %v1138
    %1152 = vst [vmem:[#allocation3 + $0x30] sm:$0xff] %v1141
    %1153 = vst [vmem:[#allocation3 + $0x38] sm:$0xff] %v1144
    %v1154 = vld [vmem:[#allocation3] sm:$0xff]
    %1155 = vmatpush.msra.mxu0 0.0
    %1156 = vmatpush.msra.mxu0 0.0
    %1157 = vmatpush.msra.mxu0 0.0
    %1158 = vmatpush.msra.mxu0 0.0
    %1159 = vmatpush.msra.mxu0 0.0
    %1160 = vmatpush.msra.mxu0 0.0
    %1161 = vmatpush.msra.mxu0 0.0
    %1162 = vmatpush.msra.mxu0 0.0
    %1163 = vmatpush.msra.mxu0 0.0
    %1164 = vmatpush.msra.mxu0 0.0
    %1165 = vmatpush.msra.mxu0 0.0
    %1166 = vmatpush.msra.mxu0 0.0
    %1167 = vmatpush.msra.mxu0 %v1067
    %1168 = vmatpush.msra.mxu0 %v1066
    %1169 = vmatpush.msra.mxu0 %v1065
    %1170 = vmatpush.msra.mxu0 %v1064
    %1171 = vmatmul.f32.gmra.mxu0 %v168
    %v1172 = vpop.f32.mrf.mxu0
    %v1173 = vadd.f32 0.0, %v1172
    %1174 = vdwg.mxu0
    %v1175 = vadd.f32 %v1154, %v1173
    %v1176 = vtanh.pop %v1175
    %v1177 = vmul.f32 %v1176, 0.5
    %v1178 = vadd.f32 %v1177, 0.5
    %v1179 = vmul.f32 %v1178, 0.0
    %1181 = vrot.lane.b32.xlu0 %v1176, 64
    %v1182 = vpop.permute.xlu0 %1181
    %v1184 = vmul.f32 %v1178, %v1182
    %1186 = vrot.lane.b32.xlu0 %v1184, 32
    %v1187 = vpop.permute.xlu0 %1186
    %v1189 = vadd.f32 %v1179, %v1187
    %v1190 = vtanh.pop %v1189
    %1192 = vrot.lane.b32.xlu0 %v1190, 64
    %v1193 = vpop.permute.xlu0 %1192
    %v1195 = vmul.f32 %v1178, %v1193
    %1197 = vrot.lane.b32.xlu0 %v1195, 32
    %v1198 = vpop.permute.xlu0 %1197
    %1200 = vst.msk [vmem:[#allocation2] sm:$0xff] %vm166, %v1198
    %v1201 = vld [vmem:[%s216] sm:$0xff]
    %v1202 = vsel %vm166, %v1198, 0
    %1204 = vmatpush.msra.mxu0 0.0
    %1205 = vmatpush.msra.mxu0 0.0
    %1206 = vmatpush.msra.mxu0 0.0
    %1207 = vmatpush.msra.mxu0 0.0
    %1208 = vmatpush.msra.mxu0 0.0
    %1209 = vmatpush.msra.mxu0 0.0
    %1210 = vmatpush.msra.mxu0 0.0
    %1211 = vmatpush.msra.mxu0 0.0
    %1212 = vmatpush.msra.mxu0 0.0
    %1213 = vmatpush.msra.mxu0 0.0
    %1214 = vmatpush.msra.mxu0 0.0
    %1215 = vmatpush.msra.mxu0 0.0
    %1216 = vmatpush.msra.mxu0 %v1067
    %1217 = vmatpush.msra.mxu0 %v1066
    %1218 = vmatpush.msra.mxu0 %v1065
    %1219 = vmatpush.msra.mxu0 %v1064
    %1220 = vmatmul.f32.gmra.mxu0 %v1202
    %v1221 = vpop.f32.mrf.mxu0
    %v1222 = vadd.f32 0.0, %v1221
    %1223 = vdwg.mxu0
    %v1224 = vadd.f32 %v1201, %v1222
    %v1225 = vtanh.pop %v1224
    %v1226 = vmul.f32 %v1225, 0.5
    %v1227 = vadd.f32 %v1226, 0.5
    %v1228 = vmul.f32 %v1227, %v1189
    %1230 = vrot.lane.b32.xlu0 %v1225, 64
    %v1231 = vpop.permute.xlu0 %1230
    %v1233 = vmul.f32 %v1227, %v1231
    %1235 = vrot.lane.b32.xlu0 %v1233, 32
    %v1236 = vpop.permute.xlu0 %1235
    %v1238 = vadd.f32 %v1228, %v1236
    %v1239 = vtanh.pop %v1238
    %1241 = vrot.lane.b32.xlu0 %v1239, 64
    %v1242 = vpop.permute.xlu0 %1241
    %v1244 = vmul.f32 %v1227, %v1242
    %1246 = vrot.lane.b32.xlu0 %v1244, 32
    %v1247 = vpop.permute.xlu0 %1246
    %1249 = vst.msk [vmem:[%s265] sm:$0xff] %vm166, %v1247
    %v1250 = vld [vmem:[%s267] sm:$0xff]
    %v1251 = vsel %vm166, %v1247, 0
    %1253 = vmatpush.msra.mxu0 0.0
    %1254 = vmatpush.msra.mxu0 0.0
    %1255 = vmatpush.msra.mxu0 0.0
    %1256 = vmatpush.msra.mxu0 0.0
    %1257 = vmatpush.msra.mxu0 0.0
    %1258 = vmatpush.msra.mxu0 0.0
    %1259 = vmatpush.msra.mxu0 0.0
    %1260 = vmatpush.msra.mxu0 0.0
    %1261 = vmatpush.msra.mxu0 0.0
    %1262 = vmatpush.msra.mxu0 0.0
    %1263 = vmatpush.msra.mxu0 0.0
    %1264 = vmatpush.msra.mxu0 0.0
    %1265 = vmatpush.msra.mxu0 %v1067
    %1266 = vmatpush.msra.mxu0 %v1066
    %1267 = vmatpush.msra.mxu0 %v1065
    %1268 = vmatpush.msra.mxu0 %v1064
    %1269 = vmatmul.f32.gmra.mxu0 %v1251
    %v1270 = vpop.f32.mrf.mxu0
    %v1271 = vadd.f32 0.0, %v1270
    %1272 = vdwg.mxu0
    %v1273 = vadd.f32 %v1250, %v1271
    %v1274 = vtanh.pop %v1273
    %v1275 = vmul.f32 %v1274, 0.5
    %v1276 = vadd.f32 %v1275, 0.5
    %v1277 = vmul.f32 %v1276, %v1238
    %1279 = vrot.lane.b32.xlu0 %v1274, 64
    %v1280 = vpop.permute.xlu0 %1279
    %v1282 = vmul.f32 %v1276, %v1280
    %1284 = vrot.lane.b32.xlu0 %v1282, 32
    %v1285 = vpop.permute.xlu0 %1284
    %v1287 = vadd.f32 %v1277, %v1285
    %v1288 = vtanh.pop %v1287
    %1290 = vrot.lane.b32.xlu0 %v1288, 64
    %v1291 = vpop.permute.xlu0 %1290
    %v1293 = vmul.f32 %v1276, %v1291
    %1295 = vrot.lane.b32.xlu0 %v1293, 32
    %v1296 = vpop.permute.xlu0 %1295
    %1298 = vst.msk [vmem:[%s316] sm:$0xff] %vm166, %v1296
    %v1299 = vld [vmem:[%s318] sm:$0xff]
    %v1300 = vsel %vm166, %v1296, 0
    %1302 = vmatpush.msra.mxu0 0.0
    %1303 = vmatpush.msra.mxu0 0.0
    %1304 = vmatpush.msra.mxu0 0.0
    %1305 = vmatpush.msra.mxu0 0.0
    %1306 = vmatpush.msra.mxu0 0.0
    %1307 = vmatpush.msra.mxu0 0.0
    %1308 = vmatpush.msra.mxu0 0.0
    %1309 = vmatpush.msra.mxu0 0.0
    %1310 = vmatpush.msra.mxu0 0.0
    %1311 = vmatpush.msra.mxu0 0.0
    %1312 = vmatpush.msra.mxu0 0.0
    %1313 = vmatpush.msra.mxu0 0.0
    %1314 = vmatpush.msra.mxu0 %v1067
    %1315 = vmatpush.msra.mxu0 %v1066
    %1316 = vmatpush.msra.mxu0 %v1065
    %1317 = vmatpush.msra.mxu0 %v1064
    %1318 = vmatmul.f32.gmra.mxu0 %v1300
    %v1319 = vpop.f32.mrf.mxu0
    %v1320 = vadd.f32 0.0, %v1319
    %1321 = vdwg.mxu0
    %v1322 = vadd.f32 %v1299, %v1320
    %v1323 = vtanh.pop %v1322
    %v1324 = vmul.f32 %v1323, 0.5
    %v1325 = vadd.f32 %v1324, 0.5
    %v1326 = vmul.f32 %v1325, %v1287
    %1328 = vrot.lane.b32.xlu0 %v1323, 64
    %v1329 = vpop.permute.xlu0 %1328
    %v1331 = vmul.f32 %v1325, %v1329
    %1333 = vrot.lane.b32.xlu0 %v1331, 32
    %v1334 = vpop.permute.xlu0 %1333
    %v1336 = vadd.f32 %v1326, %v1334
    %v1337 = vtanh.pop %v1336
    %1339 = vrot.lane.b32.xlu0 %v1337, 64
    %v1340 = vpop.permute.xlu0 %1339
    %v1342 = vmul.f32 %v1325, %v1340
    %1344 = vrot.lane.b32.xlu0 %v1342, 32
    %v1345 = vpop.permute.xlu0 %1344
    %1347 = vst.msk [vmem:[%s367] sm:$0xff] %vm166, %v1345
    %v1348 = vld [vmem:[%s369] sm:$0xff]
    %v1349 = vsel %vm166, %v1345, 0
    %1351 = vmatpush.msra.mxu0 0.0
    %1352 = vmatpush.msra.mxu0 0.0
    %1353 = vmatpush.msra.mxu0 0.0
    %1354 = vmatpush.msra.mxu0 0.0
    %1355 = vmatpush.msra.mxu0 0.0
    %1356 = vmatpush.msra.mxu0 0.0
    %1357 = vmatpush.msra.mxu0 0.0
    %1358 = vmatpush.msra.mxu0 0.0
    %1359 = vmatpush.msra.mxu0 0.0
    %1360 = vmatpush.msra.mxu0 0.0
    %1361 = vmatpush.msra.mxu0 0.0
    %1362 = vmatpush.msra.mxu0 0.0
    %1363 = vmatpush.msra.mxu0 %v1067
    %1364 = vmatpush.msra.mxu0 %v1066
    %1365 = vmatpush.msra.mxu0 %v1065
    %1366 = vmatpush.msra.mxu0 %v1064
    %1367 = vmatmul.f32.gmra.mxu0 %v1349
    %v1368 = vpop.f32.mrf.mxu0
    %v1369 = vadd.f32 0.0, %v1368
    %1370 = vdwg.mxu0
    %v1371 = vadd.f32 %v1348, %v1369
    %v1372 = vtanh.pop %v1371
    %v1373 = vmul.f32 %v1372, 0.5
    %v1374 = vadd.f32 %v1373, 0.5
    %v1375 = vmul.f32 %v1374, %v1336
    %1377 = vrot.lane.b32.xlu0 %v1372, 64
    %v1378 = vpop.permute.xlu0 %1377
    %v1380 = vmul.f32 %v1374, %v1378
    %1382 = vrot.lane.b32.xlu0 %v1380, 32
    %v1383 = vpop.permute.xlu0 %1382
    %v1385 = vadd.f32 %v1375, %v1383
    %v1386 = vtanh.pop %v1385
    %1388 = vrot.lane.b32.xlu0 %v1386, 64
    %v1389 = vpop.permute.xlu0 %1388
    %v1391 = vmul.f32 %v1374, %v1389
    %1393 = vrot.lane.b32.xlu0 %v1391, 32
    %v1394 = vpop.permute.xlu0 %1393
    %1396 = vst.msk [vmem:[%s418] sm:$0xff] %vm166, %v1394
    %v1397 = vld [vmem:[%s420] sm:$0xff]
    %v1398 = vsel %vm166, %v1394, 0
    %1400 = vmatpush.msra.mxu0 0.0
    %1401 = vmatpush.msra.mxu0 0.0
    %1402 = vmatpush.msra.mxu0 0.0
    %1403 = vmatpush.msra.mxu0 0.0
    %1404 = vmatpush.msra.mxu0 0.0
    %1405 = vmatpush.msra.mxu0 0.0
    %1406 = vmatpush.msra.mxu0 0.0
    %1407 = vmatpush.msra.mxu0 0.0
    %1408 = vmatpush.msra.mxu0 0.0
    %1409 = vmatpush.msra.mxu0 0.0
    %1410 = vmatpush.msra.mxu0 0.0
    %1411 = vmatpush.msra.mxu0 0.0
    %1412 = vmatpush.msra.mxu0 %v1067
    %1413 = vmatpush.msra.mxu0 %v1066
    %1414 = vmatpush.msra.mxu0 %v1065
    %1415 = vmatpush.msra.mxu0 %v1064
    %1416 = vmatmul.f32.gmra.mxu0 %v1398
    %v1417 = vpop.f32.mrf.mxu0
    %v1418 = vadd.f32 0.0, %v1417
    %1419 = vdwg.mxu0
    %v1420 = vadd.f32 %v1397, %v1418
    %v1421 = vtanh.pop %v1420
    %v1422 = vmul.f32 %v1421, 0.5
    %v1423 = vadd.f32 %v1422, 0.5
    %v1424 = vmul.f32 %v1423, %v1385
    %1426 = vrot.lane.b32.xlu0 %v1421, 64
    %v1427 = vpop.permute.xlu0 %1426
    %v1429 = vmul.f32 %v1423, %v1427
    %1431 = vrot.lane.b32.xlu0 %v1429, 32
    %v1432 = vpop.permute.xlu0 %1431
    %v1434 = vadd.f32 %v1424, %v1432
    %v1435 = vtanh.pop %v1434
    %1437 = vrot.lane.b32.xlu0 %v1435, 64
    %v1438 = vpop.permute.xlu0 %1437
    %v1440 = vmul.f32 %v1423, %v1438
    %1442 = vrot.lane.b32.xlu0 %v1440, 32
    %v1443 = vpop.permute.xlu0 %1442
    %1445 = vst.msk [vmem:[%s469] sm:$0xff] %vm166, %v1443
    %v1446 = vld [vmem:[%s471] sm:$0xff]
    %v1447 = vsel %vm166, %v1443, 0
    %1449 = vmatpush.msra.mxu0 0.0
    %1450 = vmatpush.msra.mxu0 0.0
    %1451 = vmatpush.msra.mxu0 0.0
    %1452 = vmatpush.msra.mxu0 0.0
    %1453 = vmatpush.msra.mxu0 0.0
    %1454 = vmatpush.msra.mxu0 0.0
    %1455 = vmatpush.msra.mxu0 0.0
    %1456 = vmatpush.msra.mxu0 0.0
    %1457 = vmatpush.msra.mxu0 0.0
    %1458 = vmatpush.msra.mxu0 0.0
    %1459 = vmatpush.msra.mxu0 0.0
    %1460 = vmatpush.msra.mxu0 0.0
    %1461 = vmatpush.msra.mxu0 %v1067
    %1462 = vmatpush.msra.mxu0 %v1066
    %1463 = vmatpush.msra.mxu0 %v1065
    %1464 = vmatpush.msra.mxu0 %v1064
    %1465 = vmatmul.f32.gmra.mxu0 %v1447
    %v1466 = vpop.f32.mrf.mxu0
    %v1467 = vadd.f32 0.0, %v1466
    %1468 = vdwg.mxu0
    %v1469 = vadd.f32 %v1446, %v1467
    %v1470 = vtanh.pop %v1469
    %v1471 = vmul.f32 %v1470, 0.5
    %v1472 = vadd.f32 %v1471, 0.5
    %v1473 = vmul.f32 %v1472, %v1434
    %1475 = vrot.lane.b32.xlu0 %v1470, 64
    %v1476 = vpop.permute.xlu0 %1475
    %v1478 = vmul.f32 %v1472, %v1476
    %1480 = vrot.lane.b32.xlu0 %v1478, 32
    %v1481 = vpop.permute.xlu0 %1480
    %v1483 = vadd.f32 %v1473, %v1481
    %v1484 = vtanh.pop %v1483
    %1486 = vrot.lane.b32.xlu0 %v1484, 64
    %v1487 = vpop.permute.xlu0 %1486
    %v1489 = vmul.f32 %v1472, %v1487
    %1491 = vrot.lane.b32.xlu0 %v1489, 32
    %v1492 = vpop.permute.xlu0 %1491
    %1494 = vst.msk [vmem:[%s520] sm:$0xff] %vm166, %v1492
    %v1495 = vld [vmem:[%s522] sm:$0xff]
    %v1496 = vsel %vm166, %v1492, 0
    %1498 = vmatpush.msra.mxu0 0.0
    %1499 = vmatpush.msra.mxu0 0.0
    %1500 = vmatpush.msra.mxu0 0.0
    %1501 = vmatpush.msra.mxu0 0.0
    %1502 = vmatpush.msra.mxu0 0.0
    %1503 = vmatpush.msra.mxu0 0.0
    %1504 = vmatpush.msra.mxu0 0.0
    %1505 = vmatpush.msra.mxu0 0.0
    %1506 = vmatpush.msra.mxu0 0.0
    %1507 = vmatpush.msra.mxu0 0.0
    %1508 = vmatpush.msra.mxu0 0.0
    %1509 = vmatpush.msra.mxu0 0.0
    %1510 = vmatpush.msra.mxu0 %v1067
    %1511 = vmatpush.msra.mxu0 %v1066
    %1512 = vmatpush.msra.mxu0 %v1065
    %1513 = vmatpush.msra.mxu0 %v1064
    %1514 = vmatmul.f32.gmra.mxu0 %v1496
    %v1515 = vpop.f32.mrf.mxu0
    %v1516 = vadd.f32 0.0, %v1515
    %1517 = vdwg.mxu0
    %v1518 = vadd.f32 %v1495, %v1516
    %v1519 = vtanh.pop %v1518
    %v1520 = vmul.f32 %v1519, 0.5
    %v1521 = vadd.f32 %v1520, 0.5
    %v1522 = vmul.f32 %v1521, %v1483
    %1524 = vrot.lane.b32.xlu0 %v1519, 64
    %v1525 = vpop.permute.xlu0 %1524
    %v1527 = vmul.f32 %v1521, %v1525
    %1529 = vrot.lane.b32.xlu0 %v1527, 32
    %v1530 = vpop.permute.xlu0 %1529
    %v1532 = vadd.f32 %v1522, %v1530
    %v1533 = vtanh.pop %v1532
    %1535 = vrot.lane.b32.xlu0 %v1533, 64
    %v1536 = vpop.permute.xlu0 %1535
    %v1538 = vmul.f32 %v1521, %v1536
    %1540 = vrot.lane.b32.xlu0 %v1538, 32
    %v1541 = vpop.permute.xlu0 %1540
    %1543 = vst.msk [vmem:[%s571] sm:$0xff] %vm166, %v1541
    %s1544 = scalar_lea.vmem [#allocation7], 64
    %v1545 = vld [vmem:[%s1544] sm:$0xff]
    %v1546 = vld [vmem:[%s1544 + $0x8] sm:$0xff]
    %v1547 = vld [vmem:[%s1544 + $0x10] sm:$0xff]
    %v1548 = vld [vmem:[%s1544 + $0x18] sm:$0xff]
    %s1549 = scalar_lea.vmem %s3, 96
    %v1550 = vld [vmem:[%s1549] sm:$0xff]
    %v1551 = vld [vmem:[%s1549 + $0x8] sm:$0xff]
    %v1552 = vld [vmem:[%s1549 + $0x10] sm:$0xff]
    %v1553 = vld [vmem:[%s1549 + $0x18] sm:$0xff]
    %s1554 = scalar_lea.vmem %s4, 3
    %v1555 = vld [vmem:[%s1554] sm:$0x1]
    %v1556 = vld [vmem:[#allocation2] sm:$0xff]
    %v1557 = vld [vmem:[#allocation2 + $0x8] sm:$0xff]
    %v1558 = vld [vmem:[#allocation2 + $0x10] sm:$0xff]
    %v1559 = vld [vmem:[#allocation2 + $0x18] sm:$0xff]
    %v1560 = vld [vmem:[#allocation2 + $0x20] sm:$0xff]
    %v1561 = vld [vmem:[#allocation2 + $0x28] sm:$0xff]
    %v1562 = vld [vmem:[#allocation2 + $0x30] sm:$0xff]
    %v1563 = vld [vmem:[#allocation2 + $0x38] sm:$0xff]
    %v1565 = vperm.slane %v1555, 0
    %v1568 = vsel %vm166, %v1556, 0
    %v1571 = vsel %vm166, %v1557, 0
    %v1574 = vsel %vm166, %v1558, 0
    %v1577 = vsel %vm166, %v1559, 0
    %v1580 = vsel %vm166, %v1560, 0
    %v1583 = vsel %vm166, %v1561, 0
    %v1586 = vsel %vm166, %v1562, 0
    %v1589 = vsel %vm166, %v1563, 0
    %1591 = vmatpush.msra.mxu0 0.0
    %1592 = vmatpush.msra.mxu0 0.0
    %1593 = vmatpush.msra.mxu0 0.0
    %1594 = vmatpush.msra.mxu0 0.0
    %1595 = vmatpush.msra.mxu0 0.0
    %1596 = vmatpush.msra.mxu0 0.0
    %1597 = vmatpush.msra.mxu0 0.0
    %1598 = vmatpush.msra.mxu0 0.0
    %1599 = vmatpush.msra.mxu0 0.0
    %1600 = vmatpush.msra.mxu0 0.0
    %1601 = vmatpush.msra.mxu0 0.0
    %1602 = vmatpush.msra.mxu0 0.0
    %1603 = vmatpush.msra.mxu0 %v1548
    %1604 = vmatpush.msra.mxu0 %v1547
    %1605 = vmatpush.msra.mxu0 %v1546
    %1606 = vmatpush.msra.mxu0 %v1545
    %1607 = vmatmul.f32.gmra.mxu0 %v1568
    %v1608 = vpop.f32.mrf.mxu0
    %v1609 = vadd.f32 %v1565, %v1608
    %1610 = vmatmul.f32.gmra.mxu0 %v1571
    %v1611 = vpop.f32.mrf.mxu0
    %v1612 = vadd.f32 %v1565, %v1611
    %1613 = vmatmul.f32.gmra.mxu0 %v1574
    %v1614 = vpop.f32.mrf.mxu0
    %v1615 = vadd.f32 %v1565, %v1614
    %1616 = vmatmul.f32.gmra.mxu0 %v1577
    %v1617 = vpop.f32.mrf.mxu0
    %v1618 = vadd.f32 %v1565, %v1617
    %1619 = vmatmul.f32.gmra.mxu0 %v1580
    %v1620 = vpop.f32.mrf.mxu0
    %v1621 = vadd.f32 %v1565, %v1620
    %1622 = vmatmul.f32.gmra.mxu0 %v1583
    %v1623 = vpop.f32.mrf.mxu0
    %v1624 = vadd.f32 %v1565, %v1623
    %1625 = vmatmul.f32.gmra.mxu0 %v1586
    %v1626 = vpop.f32.mrf.mxu0
    %v1627 = vadd.f32 %v1565, %v1626
    %1628 = vmatmul.f32.gmra.mxu0 %v1589
    %v1629 = vpop.f32.mrf.mxu0
    %v1630 = vadd.f32 %v1565, %v1629
    %1631 = vdwg.mxu0
    %1632 = vst [vmem:[#allocation3] sm:$0xff] %v1609
    %1633 = vst [vmem:[#allocation3 + $0x8] sm:$0xff] %v1612
    %1634 = vst [vmem:[#allocation3 + $0x10] sm:$0xff] %v1615
    %1635 = vst [vmem:[#allocation3 + $0x18] sm:$0xff] %v1618
    %1636 = vst [vmem:[#allocation3 + $0x20] sm:$0xff] %v1621
    %1637 = vst [vmem:[#allocation3 + $0x28] sm:$0xff] %v1624
    %1638 = vst [vmem:[#allocation3 + $0x30] sm:$0xff] %v1627
    %1639 = vst [vmem:[#allocation3 + $0x38] sm:$0xff] %v1630
    %v1640 = vld [vmem:[#allocation3] sm:$0xff]
    %1641 = vmatpush.msra.mxu0 0.0
    %1642 = vmatpush.msra.mxu0 0.0
    %1643 = vmatpush.msra.mxu0 0.0
    %1644 = vmatpush.msra.mxu0 0.0
    %1645 = vmatpush.msra.mxu0 0.0
    %1646 = vmatpush.msra.mxu0 0.0
    %1647 = vmatpush.msra.mxu0 0.0
    %1648 = vmatpush.msra.mxu0 0.0
    %1649 = vmatpush.msra.mxu0 0.0
    %1650 = vmatpush.msra.mxu0 0.0
    %1651 = vmatpush.msra.mxu0 0.0
    %1652 = vmatpush.msra.mxu0 0.0
    %1653 = vmatpush.msra.mxu0 %v1553
    %1654 = vmatpush.msra.mxu0 %v1552
    %1655 = vmatpush.msra.mxu0 %v1551
    %1656 = vmatpush.msra.mxu0 %v1550
    %1657 = vmatmul.f32.gmra.mxu0 %v168
    %v1658 = vpop.f32.mrf.mxu0
    %v1659 = vadd.f32 0.0, %v1658
    %1660 = vdwg.mxu0
    %v1661 = vadd.f32 %v1640, %v1659
    %v1662 = vtanh.pop %v1661
    %v1663 = vmul.f32 %v1662, 0.5
    %v1664 = vadd.f32 %v1663, 0.5
    %v1665 = vmul.f32 %v1664, 0.0
    %1667 = vrot.lane.b32.xlu0 %v1662, 64
    %v1668 = vpop.permute.xlu0 %1667
    %v1670 = vmul.f32 %v1664, %v1668
    %1672 = vrot.lane.b32.xlu0 %v1670, 32
    %v1673 = vpop.permute.xlu0 %1672
    %v1675 = vadd.f32 %v1665, %v1673
    %v1676 = vtanh.pop %v1675
    %1678 = vrot.lane.b32.xlu0 %v1676, 64
    %v1679 = vpop.permute.xlu0 %1678
    %v1681 = vmul.f32 %v1664, %v1679
    %v1682 = vld [vmem:[%s216] sm:$0xff]
    %1684 = vrot.lane.b32.xlu0 %v1681, 32
    %v1685 = vpop.permute.xlu0 %1684
    %v1686 = vsel %vm166, %v1685, 0
    %1688 = vmatpush.msra.mxu0 0.0
    %1689 = vmatpush.msra.mxu0 0.0
    %1690 = vmatpush.msra.mxu0 0.0
    %1691 = vmatpush.msra.mxu0 0.0
    %1692 = vmatpush.msra.mxu0 0.0
    %1693 = vmatpush.msra.mxu0 0.0
    %1694 = vmatpush.msra.mxu0 0.0
    %1695 = vmatpush.msra.mxu0 0.0
    %1696 = vmatpush.msra.mxu0 0.0
    %1697 = vmatpush.msra.mxu0 0.0
    %1698 = vmatpush.msra.mxu0 0.0
    %1699 = vmatpush.msra.mxu0 0.0
    %1700 = vmatpush.msra.mxu0 %v1553
    %1701 = vmatpush.msra.mxu0 %v1552
    %1702 = vmatpush.msra.mxu0 %v1551
    %1703 = vmatpush.msra.mxu0 %v1550
    %1704 = vmatmul.f32.gmra.mxu0 %v1686
    %v1705 = vpop.f32.mrf.mxu0
    %v1706 = vadd.f32 0.0, %v1705
    %1707 = vdwg.mxu0
    %v1708 = vadd.f32 %v1682, %v1706
    %v1709 = vtanh.pop %v1708
    %v1710 = vmul.f32 %v1709, 0.5
    %v1711 = vadd.f32 %v1710, 0.5
    %v1712 = vmul.f32 %v1711, %v1675
    %1714 = vrot.lane.b32.xlu0 %v1709, 64
    %v1715 = vpop.permute.xlu0 %1714
    %v1717 = vmul.f32 %v1711, %v1715
    %1719 = vrot.lane.b32.xlu0 %v1717, 32
    %v1720 = vpop.permute.xlu0 %1719
    %v1722 = vadd.f32 %v1712, %v1720
    %v1723 = vtanh.pop %v1722
    %1725 = vrot.lane.b32.xlu0 %v1723, 64
    %v1726 = vpop.permute.xlu0 %1725
    %v1728 = vmul.f32 %v1711, %v1726
    %v1729 = vld [vmem:[%s267] sm:$0xff]
    %1731 = vrot.lane.b32.xlu0 %v1728, 32
    %v1732 = vpop.permute.xlu0 %1731
    %v1733 = vsel %vm166, %v1732, 0
    %1735 = vmatpush.msra.mxu0 0.0
    %1736 = vmatpush.msra.mxu0 0.0
    %1737 = vmatpush.msra.mxu0 0.0
    %1738 = vmatpush.msra.mxu0 0.0
    %1739 = vmatpush.msra.mxu0 0.0
    %1740 = vmatpush.msra.mxu0 0.0
    %1741 = vmatpush.msra.mxu0 0.0
    %1742 = vmatpush.msra.mxu0 0.0
    %1743 = vmatpush.msra.mxu0 0.0
    %1744 = vmatpush.msra.mxu0 0.0
    %1745 = vmatpush.msra.mxu0 0.0
    %1746 = vmatpush.msra.mxu0 0.0
    %1747 = vmatpush.msra.mxu0 %v1553
    %1748 = vmatpush.msra.mxu0 %v1552
    %1749 = vmatpush.msra.mxu0 %v1551
    %1750 = vmatpush.msra.mxu0 %v1550
    %1751 = vmatmul.f32.gmra.mxu0 %v1733
    %v1752 = vpop.f32.mrf.mxu0
    %v1753 = vadd.f32 0.0, %v1752
    %1754 = vdwg.mxu0
    %v1755 = vadd.f32 %v1729, %v1753
    %v1756 = vtanh.pop %v1755
    %v1757 = vmul.f32 %v1756, 0.5
    %v1758 = vadd.f32 %v1757, 0.5
    %v1759 = vmul.f32 %v1758, %v1722
    %1761 = vrot.lane.b32.xlu0 %v1756, 64
    %v1762 = vpop.permute.xlu0 %1761
    %v1764 = vmul.f32 %v1758, %v1762
    %1766 = vrot.lane.b32.xlu0 %v1764, 32
    %v1767 = vpop.permute.xlu0 %1766
    %v1769 = vadd.f32 %v1759, %v1767
    %v1770 = vtanh.pop %v1769
    %1772 = vrot.lane.b32.xlu0 %v1770, 64
    %v1773 = vpop.permute.xlu0 %1772
    %v1775 = vmul.f32 %v1758, %v1773
    %v1776 = vld [vmem:[%s318] sm:$0xff]
    %1778 = vrot.lane.b32.xlu0 %v1775, 32
    %v1779 = vpop.permute.xlu0 %1778
    %v1780 = vsel %vm166, %v1779, 0
    %1782 = vmatpush.msra.mxu0 0.0
    %1783 = vmatpush.msra.mxu0 0.0
    %1784 = vmatpush.msra.mxu0 0.0
    %1785 = vmatpush.msra.mxu0 0.0
    %1786 = vmatpush.msra.mxu0 0.0
    %1787 = vmatpush.msra.mxu0 0.0
    %1788 = vmatpush.msra.mxu0 0.0
    %1789 = vmatpush.msra.mxu0 0.0
    %1790 = vmatpush.msra.mxu0 0.0
    %1791 = vmatpush.msra.mxu0 0.0
    %1792 = vmatpush.msra.mxu0 0.0
    %1793 = vmatpush.msra.mxu0 0.0
    %1794 = vmatpush.msra.mxu0 %v1553
    %1795 = vmatpush.msra.mxu0 %v1552
    %1796 = vmatpush.msra.mxu0 %v1551
    %1797 = vmatpush.msra.mxu0 %v1550
    %1798 = vmatmul.f32.gmra.mxu0 %v1780
    %v1799 = vpop.f32.mrf.mxu0
    %v1800 = vadd.f32 0.0, %v1799
    %1801 = vdwg.mxu0
    %v1802 = vadd.f32 %v1776, %v1800
    %v1803 = vtanh.pop %v1802
    %v1804 = vmul.f32 %v1803, 0.5
    %v1805 = vadd.f32 %v1804, 0.5
    %v1806 = vmul.f32 %v1805, %v1769
    %1808 = vrot.lane.b32.xlu0 %v1803, 64
    %v1809 = vpop.permute.xlu0 %1808
    %v1811 = vmul.f32 %v1805, %v1809
    %1813 = vrot.lane.b32.xlu0 %v1811, 32
    %v1814 = vpop.permute.xlu0 %1813
    %v1816 = vadd.f32 %v1806, %v1814
    %v1817 = vtanh.pop %v1816
    %1819 = vrot.lane.b32.xlu0 %v1817, 64
    %v1820 = vpop.permute.xlu0 %1819
    %v1822 = vmul.f32 %v1805, %v1820
    %v1823 = vld [vmem:[%s369] sm:$0xff]
    %1825 = vrot.lane.b32.xlu0 %v1822, 32
    %v1826 = vpop.permute.xlu0 %1825
    %v1827 = vsel %vm166, %v1826, 0
    %1829 = vmatpush.msra.mxu0 0.0
    %1830 = vmatpush.msra.mxu0 0.0
    %1831 = vmatpush.msra.mxu0 0.0
    %1832 = vmatpush.msra.mxu0 0.0
    %1833 = vmatpush.msra.mxu0 0.0
    %1834 = vmatpush.msra.mxu0 0.0
    %1835 = vmatpush.msra.mxu0 0.0
    %1836 = vmatpush.msra.mxu0 0.0
    %1837 = vmatpush.msra.mxu0 0.0
    %1838 = vmatpush.msra.mxu0 0.0
    %1839 = vmatpush.msra.mxu0 0.0
    %1840 = vmatpush.msra.mxu0 0.0
    %1841 = vmatpush.msra.mxu0 %v1553
    %1842 = vmatpush.msra.mxu0 %v1552
    %1843 = vmatpush.msra.mxu0 %v1551
    %1844 = vmatpush.msra.mxu0 %v1550
    %1845 = vmatmul.f32.gmra.mxu0 %v1827
    %v1846 = vpop.f32.mrf.mxu0
    %v1847 = vadd.f32 0.0, %v1846
    %1848 = vdwg.mxu0
    %v1849 = vadd.f32 %v1823, %v1847
    %v1850 = vtanh.pop %v1849
    %v1851 = vmul.f32 %v1850, 0.5
    %v1852 = vadd.f32 %v1851, 0.5
    %v1853 = vmul.f32 %v1852, %v1816
    %1855 = vrot.lane.b32.xlu0 %v1850, 64
    %v1856 = vpop.permute.xlu0 %1855
    %v1858 = vmul.f32 %v1852, %v1856
    %1860 = vrot.lane.b32.xlu0 %v1858, 32
    %v1861 = vpop.permute.xlu0 %1860
    %v1863 = vadd.f32 %v1853, %v1861
    %v1864 = vtanh.pop %v1863
    %1866 = vrot.lane.b32.xlu0 %v1864, 64
    %v1867 = vpop.permute.xlu0 %1866
    %v1869 = vmul.f32 %v1852, %v1867
    %v1870 = vld [vmem:[%s420] sm:$0xff]
    %1872 = vrot.lane.b32.xlu0 %v1869, 32
    %v1873 = vpop.permute.xlu0 %1872
    %v1874 = vsel %vm166, %v1873, 0
    %1876 = vmatpush.msra.mxu0 0.0
    %1877 = vmatpush.msra.mxu0 0.0
    %1878 = vmatpush.msra.mxu0 0.0
    %1879 = vmatpush.msra.mxu0 0.0
    %1880 = vmatpush.msra.mxu0 0.0
    %1881 = vmatpush.msra.mxu0 0.0
    %1882 = vmatpush.msra.mxu0 0.0
    %1883 = vmatpush.msra.mxu0 0.0
    %1884 = vmatpush.msra.mxu0 0.0
    %1885 = vmatpush.msra.mxu0 0.0
    %1886 = vmatpush.msra.mxu0 0.0
    %1887 = vmatpush.msra.mxu0 0.0
    %1888 = vmatpush.msra.mxu0 %v1553
    %1889 = vmatpush.msra.mxu0 %v1552
    %1890 = vmatpush.msra.mxu0 %v1551
    %1891 = vmatpush.msra.mxu0 %v1550
    %1892 = vmatmul.f32.gmra.mxu0 %v1874
    %v1893 = vpop.f32.mrf.mxu0
    %v1894 = vadd.f32 0.0, %v1893
    %1895 = vdwg.mxu0
    %v1896 = vadd.f32 %v1870, %v1894
    %v1897 = vtanh.pop %v1896
    %v1898 = vmul.f32 %v1897, 0.5
    %v1899 = vadd.f32 %v1898, 0.5
    %v1900 = vmul.f32 %v1899, %v1863
    %1902 = vrot.lane.b32.xlu0 %v1897, 64
    %v1903 = vpop.permute.xlu0 %1902
    %v1905 = vmul.f32 %v1899, %v1903
    %1907 = vrot.lane.b32.xlu0 %v1905, 32
    %v1908 = vpop.permute.xlu0 %1907
    %v1910 = vadd.f32 %v1900, %v1908
    %v1911 = vtanh.pop %v1910
    %1913 = vrot.lane.b32.xlu0 %v1911, 64
    %v1914 = vpop.permute.xlu0 %1913
    %v1916 = vmul.f32 %v1899, %v1914
    %v1917 = vld [vmem:[%s471] sm:$0xff]
    %1919 = vrot.lane.b32.xlu0 %v1916, 32
    %v1920 = vpop.permute.xlu0 %1919
    %v1921 = vsel %vm166, %v1920, 0
    %1923 = vmatpush.msra.mxu0 0.0
    %1924 = vmatpush.msra.mxu0 0.0
    %1925 = vmatpush.msra.mxu0 0.0
    %1926 = vmatpush.msra.mxu0 0.0
    %1927 = vmatpush.msra.mxu0 0.0
    %1928 = vmatpush.msra.mxu0 0.0
    %1929 = vmatpush.msra.mxu0 0.0
    %1930 = vmatpush.msra.mxu0 0.0
    %1931 = vmatpush.msra.mxu0 0.0
    %1932 = vmatpush.msra.mxu0 0.0
    %1933 = vmatpush.msra.mxu0 0.0
    %1934 = vmatpush.msra.mxu0 0.0
    %1935 = vmatpush.msra.mxu0 %v1553
    %1936 = vmatpush.msra.mxu0 %v1552
    %1937 = vmatpush.msra.mxu0 %v1551
    %1938 = vmatpush.msra.mxu0 %v1550
    %1939 = vmatmul.f32.gmra.mxu0 %v1921
    %v1940 = vpop.f32.mrf.mxu0
    %v1941 = vadd.f32 0.0, %v1940
    %1942 = vdwg.mxu0
    %v1943 = vadd.f32 %v1917, %v1941
    %v1944 = vtanh.pop %v1943
    %v1945 = vmul.f32 %v1944, 0.5
    %v1946 = vadd.f32 %v1945, 0.5
    %v1947 = vmul.f32 %v1946, %v1910
    %1949 = vrot.lane.b32.xlu0 %v1944, 64
    %v1950 = vpop.permute.xlu0 %1949
    %v1952 = vmul.f32 %v1946, %v1950
    %1954 = vrot.lane.b32.xlu0 %v1952, 32
    %v1955 = vpop.permute.xlu0 %1954
    %v1957 = vadd.f32 %v1947, %v1955
    %v1958 = vtanh.pop %v1957
    %1960 = vrot.lane.b32.xlu0 %v1958, 64
    %v1961 = vpop.permute.xlu0 %1960
    %v1963 = vmul.f32 %v1946, %v1961
    %v1964 = vld [vmem:[%s522] sm:$0xff]
    %1966 = vrot.lane.b32.xlu0 %v1963, 32
    %v1967 = vpop.permute.xlu0 %1966
    %v1968 = vsel %vm166, %v1967, 0
    %1970 = vmatpush.msra.mxu0 0.0
    %1971 = vmatpush.msra.mxu0 0.0
    %1972 = vmatpush.msra.mxu0 0.0
    %1973 = vmatpush.msra.mxu0 0.0
    %1974 = vmatpush.msra.mxu0 0.0
    %1975 = vmatpush.msra.mxu0 0.0
    %1976 = vmatpush.msra.mxu0 0.0
    %1977 = vmatpush.msra.mxu0 0.0
    %1978 = vmatpush.msra.mxu0 0.0
    %1979 = vmatpush.msra.mxu0 0.0
    %1980 = vmatpush.msra.mxu0 0.0
    %1981 = vmatpush.msra.mxu0 0.0
    %1982 = vmatpush.msra.mxu0 %v1553
    %1983 = vmatpush.msra.mxu0 %v1552
    %1984 = vmatpush.msra.mxu0 %v1551
    %1985 = vmatpush.msra.mxu0 %v1550
    %1986 = vmatmul.f32.gmra.mxu0 %v1968
    %v1987 = vpop.f32.mrf.mxu0
    %v1988 = vadd.f32 0.0, %v1987
    %1989 = vdwg.mxu0
    %v1990 = vadd.f32 %v1964, %v1988
    %v1991 = vtanh.pop %v1990
    %v1992 = vmul.f32 %v1991, 0.5
    %v1993 = vadd.f32 %v1992, 0.5
    %v1994 = vmul.f32 %v1993, %v1957
    %1996 = vrot.lane.b32.xlu0 %v1991, 64
    %v1997 = vpop.permute.xlu0 %1996
    %v1999 = vmul.f32 %v1993, %v1997
    %2001 = vrot.lane.b32.xlu0 %v1999, 32
    %v2002 = vpop.permute.xlu0 %2001
    %v2004 = vadd.f32 %v1994, %v2002
    %v2005 = vtanh.pop %v2004
    %2007 = vrot.lane.b32.xlu0 %v2005, 64
    %v2008 = vpop.permute.xlu0 %2007
    %v2010 = vmul.f32 %v1993, %v2008
    %v2011 = vld [vmem:[#allocation9] sm:$0x1]
    %v2013 = vperm.slane %v2011, 0
    %2014 = vrot.lane.b32.xlu0 %v2013, 96
    %v2015 = vpop.permute.xlu0 %2014
    %v2017 = vmul.f32 %v2010, %v2015
    %2019 = vrot.lane.b32.xlu0 %v2017, 32
    %v2020 = vpop.permute.xlu0 %2019
    %v2022 = vsel %vm166, %v2020, 0.0
    %2023 = vadd.xlane.f32.xlu0 %v2022
    %v2024 = vpop.xlane.xlu0 %2023
    %v2025 = vld [vmem:[#allocation4] sm:$0x1]
    %v2027 = vperm.slane %v2025, 0
    %v2029 = vadd.f32 %v2024, %v2027
    %vm2030 = vcmask 7168
    %2031 = vst.msk [vmem:[%s7] sm:$0xff] %vm2030, %v2029
    // Predicated region
    $region42: #{sequence_model_forward.1} parent=1 // pred_check
      _
    $region43: #{sequence_model_forward.1} parent=1 // pred_check_branch
      %2033 = sbr.rel (0) target = $region45
    $region44: #{sequence_model_forward.1} parent=1 // pred_region
      _
    $region45: #{sequence_model_forward.1} parent=1 // pred_fallthru
      _
    // Predicated region
    $region46: #{sequence_model_forward.1} parent=1 // pred_check
      _
    $region47: #{sequence_model_forward.1} parent=1 // pred_check_branch
      %2035 = sbr.rel (0) target = $region49
    $region48: #{sequence_model_forward.1} parent=1 // pred_region
      _
    $region49: #{sequence_model_forward.1} parent=1 // pred_fallthru
      _
    %2036 = vsyncpa [#allocation6], 1
    %2037 = vsyncpa [#allocation8], 1

</llo_original>
